<compile_context>
chip_gen: v6e
topology: v6e:2x2x1
jax: 0.10.0
libtpu: 0.0.40
codegen_flags: <defaults>
</compile_context>

<pallas_src>
import functools
import math

import jax
import jax.numpy as jnp
from jax.experimental import pallas as pl
from jax.experimental.pallas import tpu as pltpu

# ---------------- small synthetic GTE/BERT config ----------------
VOCAB = 100
PAD_ID = 0
HIDDEN = 32
HEADS = 4
HEAD_DIM = HIDDEN // HEADS
INTERMEDIATE = 64
LAYERS = 2
MAX_POS = 16
EPS = 1e-12


def _full_spec(shape):
    """Whole-array VMEM block (block_shape == array shape is always legal)."""
    return pl.BlockSpec(shape, lambda *_: (0,) * len(shape))


# ---------------- fused encoder kernel ----------------
def _gte_encoder_kernel(h0_ref, mask_ref, eg_ref, eb_ref,
                        wqkv_ref, bqkv_ref, wo_ref, bo_ref,
                        ln1g_ref, ln1b_ref, w1_ref, b1_ref,
                        w2_ref, b2_ref, ln2g_ref, ln2b_ref,
                        o_ref, *, batch, seq):
    rows = batch * seq

    def layernorm(x, g, b):
        # reduction over HIDDEN (lane) axis, f32 throughout
        mean = jnp.mean(x, axis=-1, keepdims=True)
        var = jnp.mean(jnp.square(x - mean), axis=-1, keepdims=True)
        return (x - mean) * jax.lax.rsqrt(var + EPS) * g + b

    def mm(a, w):
        # bf16 MXU operands, f32 accumulation
        return jnp.dot(a.astype(jnp.bfloat16), w.astype(jnp.bfloat16),
                       preferred_element_type=jnp.float32)

    # embedding LayerNorm (no residual -> no zero tensor DMA'd)
    h = layernorm(h0_ref[...], eg_ref[...], eb_ref[...])          # (rows, HIDDEN) f32

    mask = mask_ref[...]                                          # (batch, seq) f32
    bias = (1.0 - mask) * -1e9                                    # additive key mask (f32)
    scale = 1.0 / math.sqrt(HEAD_DIM)

    for l in range(LAYERS):                                       # static unroll
        # ---- self-attention: fused QKV projection ----
        qkv = mm(h, wqkv_ref[l]) + bqkv_ref[l]                    # (rows, 3*HIDDEN)

        ctx_heads = []
        for hd in range(HEADS):                                   # static unroll
            q_h = qkv[:, hd * HEAD_DIM:(hd + 1) * HEAD_DIM] * scale
            k_h = qkv[:, HIDDEN + hd * HEAD_DIM: HIDDEN + (hd + 1) * HEAD_DIM]
            v_h = qkv[:, 2 * HIDDEN + hd * HEAD_DIM: 2 * HIDDEN + (hd + 1) * HEAD_DIM]
            q_h = q_h.reshape(batch, seq, HEAD_DIM)
            k_h = k_h.reshape(batch, seq, HEAD_DIM)
            v_h = v_h.reshape(batch, seq, HEAD_DIM)

            s = jnp.einsum("bqd,bkd->bqk",
                           q_h.astype(jnp.bfloat16), k_h.astype(jnp.bfloat16),
                           preferred_element_type=jnp.float32)    # (batch, seq, seq)
            s = s + bias[:, None, :]                              # mask padded keys
            m = jnp.max(s, axis=-1, keepdims=True)
            p = jnp.exp(s - m)
            p = p * pl.reciprocal(jnp.sum(p, axis=-1, keepdims=True), approx=True)
            c = jnp.einsum("bqk,bkd->bqd",
                           p.astype(jnp.bfloat16), v_h.astype(jnp.bfloat16),
                           preferred_element_type=jnp.float32)    # (batch, seq, HEAD_DIM)
            ctx_heads.append(c.reshape(rows, HEAD_DIM))

        ctx = jnp.concatenate(ctx_heads, axis=-1)                 # (rows, HIDDEN)
        attn_out = mm(ctx, wo_ref[l]) + bo_ref[l]
        h = layernorm(attn_out + h, ln1g_ref[l], ln1b_ref[l])

        # ---- feed-forward ----
        ff = mm(h, w1_ref[l]) + b1_ref[l]
        # TODO(synk): HF GTE/BERT uses exact (erf) GELU; tanh approximation used here.
        ff = jax.nn.gelu(ff, approximate=True)
        ff = mm(ff, w2_ref[l]) + b2_ref[l]
        h = layernorm(ff + h, ln2g_ref[l], ln2b_ref[l])

    # ---- masked mean pooling: (emb * mask).sum(1) / mask.sum(1) ----
    last = h.reshape(batch, seq, HIDDEN)
    num = jnp.sum(last * mask[:, :, None], axis=1)                # (batch, HIDDEN)
    den = jnp.sum(mask, axis=1, keepdims=True)                    # (batch, 1)
    # NOTE: an all-PAD sequence gives 0/0 -> NaN, matching the torch reference.
    o_ref[...] = num / den


# ---------------- parameter init (deterministic, synthetic) ----------------
def init_params(key):
    def nrm(k, shape):
        return 0.02 * jax.random.normal(k, shape, dtype=jnp.float32)

    keys = jax.random.split(key, 7)
    params = {
        "word_emb": nrm(keys[0], (VOCAB, HIDDEN)),
        "pos_emb": nrm(keys[1], (MAX_POS, HIDDEN)),
        "type_emb": nrm(keys[2], (2, HIDDEN)),
        "emb_ln_g": jnp.ones((1, HIDDEN), jnp.float32),
        "emb_ln_b": jnp.zeros((1, HIDDEN), jnp.float32),
        # per-layer weights stacked along a leading layer axis (sliced in-kernel)
        "wqkv": nrm(keys[3], (LAYERS, HIDDEN, 3 * HIDDEN)),
        "bqkv": jnp.zeros((LAYERS, 1, 3 * HIDDEN), jnp.float32),
        "wo": nrm(keys[4], (LAYERS, HIDDEN, HIDDEN)),
        "bo": jnp.zeros((LAYERS, 1, HIDDEN), jnp.float32),
        "ln1_g": jnp.ones((LAYERS, 1, HIDDEN), jnp.float32),
        "ln1_b": jnp.zeros((LAYERS, 1, HIDDEN), jnp.float32),
        "w1": nrm(keys[5], (LAYERS, HIDDEN, INTERMEDIATE)),
        "b1": jnp.zeros((LAYERS, 1, INTERMEDIATE), jnp.float32),
        "w2": nrm(keys[6], (LAYERS, INTERMEDIATE, HIDDEN)),
        "b2": jnp.zeros((LAYERS, 1, HIDDEN), jnp.float32),
        "ln2_g": jnp.ones((LAYERS, 1, HIDDEN), jnp.float32),
        "ln2_b": jnp.zeros((LAYERS, 1, HIDDEN), jnp.float32),
    }
    return params


# ---------------- forward pass (matches GTETextEncoder.forward semantics) ----------------
def gte_encode(params, input_ids):
    b, s = input_ids.shape
    mask_f = (input_ids != PAD_ID).astype(jnp.float32)            # (B, S)

    # embeddings: token + position + type (gather is plain-JAX glue)
    pos = jnp.arange(s, dtype=jnp.int32)
    h0 = (params["word_emb"][input_ids]
          + params["pos_emb"][pos][None, :, :]
          + params["type_emb"][0][None, None, :]).reshape(b * s, HIDDEN)

    args = (h0, mask_f,
            params["emb_ln_g"], params["emb_ln_b"],
            params["wqkv"], params["bqkv"], params["wo"], params["bo"],
            params["ln1_g"], params["ln1_b"], params["w1"], params["b1"],
            params["w2"], params["b2"], params["ln2_g"], params["ln2_b"])

    kernel = functools.partial(_gte_encoder_kernel, batch=b, seq=s)
    # Single fused pallas_call: all weights + activations (< 0.2 MiB) live in VMEM.
    # TODO(synk): at real GTE size (HIDDEN=768, S>=512) replace whole-array blocks
    #             with row/K tiling and set vmem_limit_bytes (v7x has 64 MiB VMEM).
    return pl.pallas_call(
        kernel,
        grid=(1,),
        in_specs=[_full_spec(a.shape) for a in args],
        out_specs=_full_spec((b, HIDDEN)),
        out_shape=jax.ShapeDtypeStruct((b, HIDDEN), jnp.float32),
        compiler_params=pltpu.CompilerParams(
            dimension_semantics=("arbitrary",)),
    )(*args)


# ---------------- main ----------------
if __name__ == "__main__":
    root = jax.random.PRNGKey(0)
    pkey, ikey = jax.random.split(root)
    params = init_params(pkey)

    B, S = 2, 8
    # deterministic "tokenized" input ids; second sequence padded with PAD_ID
    ids = jax.random.randint(ikey, (B, S), minval=1, maxval=VOCAB, dtype=jnp.int32)
    ids = ids.at[1, 5:].set(PAD_ID)

    emb = jax.jit(gte_encode)(params, ids)
    jax.block_until_ready(emb)
    assert emb.shape == (B, HIDDEN) and emb.dtype == jnp.float32
    print("KERNEL_OK")
</pallas_src>

<mosaic_0001>
module attributes {stable_mosaic.version = 11 : i64} {
  func.func @_gte_encoder_kernel(%arg0: i32, %arg1: memref<16x32xf32, #tpu.memory_space<vmem>>, %arg2: memref<2x8xf32, #tpu.memory_space<vmem>>, %arg3: memref<1x32xf32, #tpu.memory_space<vmem>>, %arg4: memref<1x32xf32, #tpu.memory_space<vmem>>, %arg5: memref<2x32x96xf32, #tpu.memory_space<vmem>>, %arg6: memref<2x1x96xf32, #tpu.memory_space<vmem>>, %arg7: memref<2x32x32xf32, #tpu.memory_space<vmem>>, %arg8: memref<2x1x32xf32, #tpu.memory_space<vmem>>, %arg9: memref<2x1x32xf32, #tpu.memory_space<vmem>>, %arg10: memref<2x1x32xf32, #tpu.memory_space<vmem>>, %arg11: memref<2x32x64xf32, #tpu.memory_space<vmem>>, %arg12: memref<2x1x64xf32, #tpu.memory_space<vmem>>, %arg13: memref<2x64x32xf32, #tpu.memory_space<vmem>>, %arg14: memref<2x1x32xf32, #tpu.memory_space<vmem>>, %arg15: memref<2x1x32xf32, #tpu.memory_space<vmem>>, %arg16: memref<2x1x32xf32, #tpu.memory_space<vmem>>, %arg17: memref<2x32xf32, #tpu.memory_space<vmem>>) attributes {dimension_semantics = [#tpu.dimension_semantics<arbitrary>], iteration_bounds = array<i64: 1>, scalar_prefetch = 0 : i64, scratch_operands = 0 : i64, tpu.core_type = #tpu.core_type<tc>, window_params = [{pipeline_mode = #tpu.pipeline_mode<synchronous>, transform_indices = @transform_0, window_bounds = array<i64: 16, 32>}, {pipeline_mode = #tpu.pipeline_mode<synchronous>, transform_indices = @transform_1, window_bounds = array<i64: 2, 8>}, {pipeline_mode = #tpu.pipeline_mode<synchronous>, transform_indices = @transform_2, window_bounds = array<i64: 1, 32>}, {pipeline_mode = #tpu.pipeline_mode<synchronous>, transform_indices = @transform_3, window_bounds = array<i64: 1, 32>}, {pipeline_mode = #tpu.pipeline_mode<synchronous>, transform_indices = @transform_4, window_bounds = array<i64: 2, 32, 96>}, {pipeline_mode = #tpu.pipeline_mode<synchronous>, transform_indices = @transform_5, window_bounds = array<i64: 2, 1, 96>}, {pipeline_mode = #tpu.pipeline_mode<synchronous>, transform_indices = @transform_6, window_bounds = array<i64: 2, 32, 32>}, {pipeline_mode = #tpu.pipeline_mode<synchronous>, transform_indices = @transform_7, window_bounds = array<i64: 2, 1, 32>}, {pipeline_mode = #tpu.pipeline_mode<synchronous>, transform_indices = @transform_8, window_bounds = array<i64: 2, 1, 32>}, {pipeline_mode = #tpu.pipeline_mode<synchronous>, transform_indices = @transform_9, window_bounds = array<i64: 2, 1, 32>}, {pipeline_mode = #tpu.pipeline_mode<synchronous>, transform_indices = @transform_10, window_bounds = array<i64: 2, 32, 64>}, {pipeline_mode = #tpu.pipeline_mode<synchronous>, transform_indices = @transform_11, window_bounds = array<i64: 2, 1, 64>}, {pipeline_mode = #tpu.pipeline_mode<synchronous>, transform_indices = @transform_12, window_bounds = array<i64: 2, 64, 32>}, {pipeline_mode = #tpu.pipeline_mode<synchronous>, transform_indices = @transform_13, window_bounds = array<i64: 2, 1, 32>}, {pipeline_mode = #tpu.pipeline_mode<synchronous>, transform_indices = @transform_14, window_bounds = array<i64: 2, 1, 32>}, {pipeline_mode = #tpu.pipeline_mode<synchronous>, transform_indices = @transform_15, window_bounds = array<i64: 2, 1, 32>}, {pipeline_mode = #tpu.pipeline_mode<synchronous>, transform_indices = @transform_16, window_bounds = array<i64: 2, 32>}]} {
    %c0 = arith.constant 0 : index
    %c0_0 = arith.constant 0 : index
    %0 = vector.load %arg1[%c0, %c0_0] : memref<16x32xf32, #tpu.memory_space<vmem>>, vector<16x32xf32>
    %c0_1 = arith.constant 0 : index
    %c0_2 = arith.constant 0 : index
    %1 = vector.load %arg3[%c0_1, %c0_2] : memref<1x32xf32, #tpu.memory_space<vmem>>, vector<1x32xf32>
    %c0_3 = arith.constant 0 : index
    %c0_4 = arith.constant 0 : index
    %2 = vector.load %arg4[%c0_3, %c0_4] : memref<1x32xf32, #tpu.memory_space<vmem>>, vector<1x32xf32>
    %cst = arith.constant dense<0.000000e+00> : vector<16xf32>
    %3 = vector.multi_reduction <add>, %0, %cst [1] : vector<16x32xf32> to vector<16xf32>
    %4 = vector.shape_cast %3 : vector<16xf32> to vector<16x1xf32>
    %cst_5 = arith.constant 3.200000e+01 : f32
    %5 = vector.broadcast %cst_5 : f32 to vector<16x1xf32>
    %6 = arith.divf %4, %5 : vector<16x1xf32>
    %7 = vector.broadcast %6 : vector<16x1xf32> to vector<16x32xf32>
    %8 = arith.subf %0, %7 : vector<16x32xf32>
    %9 = arith.mulf %8, %8 : vector<16x32xf32>
    %cst_6 = arith.constant dense<0.000000e+00> : vector<16xf32>
    %10 = vector.multi_reduction <add>, %9, %cst_6 [1] : vector<16x32xf32> to vector<16xf32>
    %11 = vector.shape_cast %10 : vector<16xf32> to vector<16x1xf32>
    %cst_7 = arith.constant 3.200000e+01 : f32
    %12 = vector.broadcast %cst_7 : f32 to vector<16x1xf32>
    %13 = arith.divf %11, %12 : vector<16x1xf32>
    %14 = vector.broadcast %6 : vector<16x1xf32> to vector<16x32xf32>
    %15 = arith.subf %0, %14 : vector<16x32xf32>
    %cst_8 = arith.constant 9.99999996E-13 : f32
    %16 = vector.broadcast %cst_8 : f32 to vector<16x1xf32>
    %17 = arith.addf %13, %16 : vector<16x1xf32>
    %18 = math.rsqrt %17 : vector<16x1xf32>
    %19 = vector.broadcast %18 : vector<16x1xf32> to vector<16x32xf32>
    %20 = arith.mulf %15, %19 : vector<16x32xf32>
    %21 = vector.broadcast %1 : vector<1x32xf32> to vector<16x32xf32>
    %22 = arith.mulf %20, %21 : vector<16x32xf32>
    %23 = vector.broadcast %2 : vector<1x32xf32> to vector<16x32xf32>
    %24 = arith.addf %22, %23 : vector<16x32xf32>
    %c0_9 = arith.constant 0 : index
    %c0_10 = arith.constant 0 : index
    %25 = vector.load %arg2[%c0_9, %c0_10] : memref<2x8xf32, #tpu.memory_space<vmem>>, vector<2x8xf32>
    %cst_11 = arith.constant 1.000000e+00 : f32
    %26 = vector.broadcast %cst_11 : f32 to vector<2x8xf32>
    %27 = arith.subf %26, %25 : vector<2x8xf32>
    %cst_12 = arith.constant -1.000000e+09 : f32
    %28 = vector.broadcast %cst_12 : f32 to vector<2x8xf32>
    %29 = arith.mulf %27, %28 : vector<2x8xf32>
    %c0_13 = arith.constant 0 : index
    %c0_14 = arith.constant 0 : index
    %c0_15 = arith.constant 0 : index
    %30 = vector.load %arg5[%c0_13, %c0_14, %c0_15] : memref<2x32x96xf32, #tpu.memory_space<vmem>>, vector<1x32x96xf32>
    %31 = vector.shape_cast %30 : vector<1x32x96xf32> to vector<32x96xf32>
    %32 = arith.truncf %24 : vector<16x32xf32> to vector<16x32xbf16>
    %33 = arith.truncf %31 : vector<32x96xf32> to vector<32x96xbf16>
    %cst_16 = arith.constant dense<0.000000e+00> : vector<16x96xf32>
    %34 = tpu.matmul %32, %33, %cst_16 {dimension_numbers = #tpu.dot_dimension_numbers<[1], [0], [0], [1], [0, 0, 1, 1], [], []>} : vector<16x32xbf16>, vector<32x96xbf16>, vector<16x96xf32> -> vector<16x96xf32>
    %c0_17 = arith.constant 0 : index
    %c0_18 = arith.constant 0 : index
    %c0_19 = arith.constant 0 : index
    %35 = vector.load %arg6[%c0_17, %c0_18, %c0_19] : memref<2x1x96xf32, #tpu.memory_space<vmem>>, vector<1x1x96xf32>
    %36 = vector.shape_cast %35 : vector<1x1x96xf32> to vector<1x96xf32>
    %37 = vector.broadcast %36 : vector<1x96xf32> to vector<16x96xf32>
    %38 = arith.addf %34, %37 : vector<16x96xf32>
    %39 = vector.extract_strided_slice %38 {offsets = [0, 0], sizes = [16, 8], strides = [1, 1]} : vector<16x96xf32> to vector<16x8xf32>
    %cst_20 = arith.constant 0.353553385 : f32
    %40 = vector.broadcast %cst_20 : f32 to vector<16x8xf32>
    %41 = arith.mulf %39, %40 : vector<16x8xf32>
    %42 = vector.extract_strided_slice %38 {offsets = [0, 32], sizes = [16, 8], strides = [1, 1]} : vector<16x96xf32> to vector<16x8xf32>
    %43 = vector.extract_strided_slice %38 {offsets = [0, 64], sizes = [16, 8], strides = [1, 1]} : vector<16x96xf32> to vector<16x8xf32>
    %44 = vector.shape_cast %41 : vector<16x8xf32> to vector<2x8x8xf32>
    %45 = vector.shape_cast %42 : vector<16x8xf32> to vector<2x8x8xf32>
    %46 = vector.shape_cast %43 : vector<16x8xf32> to vector<2x8x8xf32>
    %47 = arith.truncf %44 : vector<2x8x8xf32> to vector<2x8x8xbf16>
    %48 = arith.truncf %45 : vector<2x8x8xf32> to vector<2x8x8xbf16>
    "tpu.trace_start"() <{level = 10 : i32, message = "bqd,bkd->bqk"}> : () -> ()
    %cst_21 = arith.constant dense<0.000000e+00> : vector<2x8x8xf32>
    %49 = tpu.matmul %47, %48, %cst_21 {dimension_numbers = #tpu.dot_dimension_numbers<[2], [2], [1], [1], [0, 0, 0, 1, 1, 1], [0], [0]>} : vector<2x8x8xbf16>, vector<2x8x8xbf16>, vector<2x8x8xf32> -> vector<2x8x8xf32>
    "tpu.trace_stop"() : () -> ()
    %50 = vector.shape_cast %29 : vector<2x8xf32> to vector<2x1x8xf32>
    %51 = vector.broadcast %50 : vector<2x1x8xf32> to vector<2x8x8xf32>
    %52 = arith.addf %49, %51 : vector<2x8x8xf32>
    %cst_22 = arith.constant dense<0xFF800000> : vector<2x8xf32>
    %53 = vector.multi_reduction <maximumf>, %52, %cst_22 [2] : vector<2x8x8xf32> to vector<2x8xf32>
    %54 = vector.shape_cast %53 : vector<2x8xf32> to vector<2x8x1xf32>
    %55 = vector.broadcast %54 : vector<2x8x1xf32> to vector<2x8x8xf32>
    %56 = arith.subf %52, %55 : vector<2x8x8xf32>
    %57 = math.exp %56 : vector<2x8x8xf32>
    %cst_23 = arith.constant dense<0.000000e+00> : vector<2x8xf32>
    %58 = vector.multi_reduction <add>, %57, %cst_23 [2] : vector<2x8x8xf32> to vector<2x8xf32>
    %59 = vector.shape_cast %58 : vector<2x8xf32> to vector<2x8x1xf32>
    %60 = tpu.reciprocal %59 {approx = true} : vector<2x8x1xf32> -> vector<2x8x1xf32>
    %61 = vector.broadcast %60 : vector<2x8x1xf32> to vector<2x8x8xf32>
    %62 = arith.mulf %57, %61 : vector<2x8x8xf32>
    %63 = arith.truncf %62 : vector<2x8x8xf32> to vector<2x8x8xbf16>
    %64 = arith.truncf %46 : vector<2x8x8xf32> to vector<2x8x8xbf16>
    "tpu.trace_start"() <{level = 10 : i32, message = "bqk,bkd->bqd"}> : () -> ()
    %cst_24 = arith.constant dense<0.000000e+00> : vector<2x8x8xf32>
    %65 = tpu.matmul %63, %64, %cst_24 {dimension_numbers = #tpu.dot_dimension_numbers<[2], [1], [1], [2], [0, 0, 0, 1, 1, 2], [0], [0]>} : vector<2x8x8xbf16>, vector<2x8x8xbf16>, vector<2x8x8xf32> -> vector<2x8x8xf32>
    "tpu.trace_stop"() : () -> ()
    %66 = vector.shape_cast %65 : vector<2x8x8xf32> to vector<16x8xf32>
    %67 = vector.extract_strided_slice %38 {offsets = [0, 8], sizes = [16, 8], strides = [1, 1]} : vector<16x96xf32> to vector<16x8xf32>
    %cst_25 = arith.constant 0.353553385 : f32
    %68 = vector.broadcast %cst_25 : f32 to vector<16x8xf32>
    %69 = arith.mulf %67, %68 : vector<16x8xf32>
    %70 = vector.extract_strided_slice %38 {offsets = [0, 40], sizes = [16, 8], strides = [1, 1]} : vector<16x96xf32> to vector<16x8xf32>
    %71 = vector.extract_strided_slice %38 {offsets = [0, 72], sizes = [16, 8], strides = [1, 1]} : vector<16x96xf32> to vector<16x8xf32>
    %72 = vector.shape_cast %69 : vector<16x8xf32> to vector<2x8x8xf32>
    %73 = vector.shape_cast %70 : vector<16x8xf32> to vector<2x8x8xf32>
    %74 = vector.shape_cast %71 : vector<16x8xf32> to vector<2x8x8xf32>
    %75 = arith.truncf %72 : vector<2x8x8xf32> to vector<2x8x8xbf16>
    %76 = arith.truncf %73 : vector<2x8x8xf32> to vector<2x8x8xbf16>
    "tpu.trace_start"() <{level = 10 : i32, message = "bqd,bkd->bqk"}> : () -> ()
    %cst_26 = arith.constant dense<0.000000e+00> : vector<2x8x8xf32>
    %77 = tpu.matmul %75, %76, %cst_26 {dimension_numbers = #tpu.dot_dimension_numbers<[2], [2], [1], [1], [0, 0, 0, 1, 1, 1], [0], [0]>} : vector<2x8x8xbf16>, vector<2x8x8xbf16>, vector<2x8x8xf32> -> vector<2x8x8xf32>
    "tpu.trace_stop"() : () -> ()
    %78 = vector.shape_cast %29 : vector<2x8xf32> to vector<2x1x8xf32>
    %79 = vector.broadcast %78 : vector<2x1x8xf32> to vector<2x8x8xf32>
    %80 = arith.addf %77, %79 : vector<2x8x8xf32>
    %cst_27 = arith.constant dense<0xFF800000> : vector<2x8xf32>
    %81 = vector.multi_reduction <maximumf>, %80, %cst_27 [2] : vector<2x8x8xf32> to vector<2x8xf32>
    %82 = vector.shape_cast %81 : vector<2x8xf32> to vector<2x8x1xf32>
    %83 = vector.broadcast %82 : vector<2x8x1xf32> to vector<2x8x8xf32>
    %84 = arith.subf %80, %83 : vector<2x8x8xf32>
    %85 = math.exp %84 : vector<2x8x8xf32>
    %cst_28 = arith.constant dense<0.000000e+00> : vector<2x8xf32>
    %86 = vector.multi_reduction <add>, %85, %cst_28 [2] : vector<2x8x8xf32> to vector<2x8xf32>
    %87 = vector.shape_cast %86 : vector<2x8xf32> to vector<2x8x1xf32>
    %88 = tpu.reciprocal %87 {approx = true} : vector<2x8x1xf32> -> vector<2x8x1xf32>
    %89 = vector.broadcast %88 : vector<2x8x1xf32> to vector<2x8x8xf32>
    %90 = arith.mulf %85, %89 : vector<2x8x8xf32>
    %91 = arith.truncf %90 : vector<2x8x8xf32> to vector<2x8x8xbf16>
    %92 = arith.truncf %74 : vector<2x8x8xf32> to vector<2x8x8xbf16>
    "tpu.trace_start"() <{level = 10 : i32, message = "bqk,bkd->bqd"}> : () -> ()
    %cst_29 = arith.constant dense<0.000000e+00> : vector<2x8x8xf32>
    %93 = tpu.matmul %91, %92, %cst_29 {dimension_numbers = #tpu.dot_dimension_numbers<[2], [1], [1], [2], [0, 0, 0, 1, 1, 2], [0], [0]>} : vector<2x8x8xbf16>, vector<2x8x8xbf16>, vector<2x8x8xf32> -> vector<2x8x8xf32>
    "tpu.trace_stop"() : () -> ()
    %94 = vector.shape_cast %93 : vector<2x8x8xf32> to vector<16x8xf32>
    %95 = vector.extract_strided_slice %38 {offsets = [0, 16], sizes = [16, 8], strides = [1, 1]} : vector<16x96xf32> to vector<16x8xf32>
    %cst_30 = arith.constant 0.353553385 : f32
    %96 = vector.broadcast %cst_30 : f32 to vector<16x8xf32>
    %97 = arith.mulf %95, %96 : vector<16x8xf32>
    %98 = vector.extract_strided_slice %38 {offsets = [0, 48], sizes = [16, 8], strides = [1, 1]} : vector<16x96xf32> to vector<16x8xf32>
    %99 = vector.extract_strided_slice %38 {offsets = [0, 80], sizes = [16, 8], strides = [1, 1]} : vector<16x96xf32> to vector<16x8xf32>
    %100 = vector.shape_cast %97 : vector<16x8xf32> to vector<2x8x8xf32>
    %101 = vector.shape_cast %98 : vector<16x8xf32> to vector<2x8x8xf32>
    %102 = vector.shape_cast %99 : vector<16x8xf32> to vector<2x8x8xf32>
    %103 = arith.truncf %100 : vector<2x8x8xf32> to vector<2x8x8xbf16>
    %104 = arith.truncf %101 : vector<2x8x8xf32> to vector<2x8x8xbf16>
    "tpu.trace_start"() <{level = 10 : i32, message = "bqd,bkd->bqk"}> : () -> ()
    %cst_31 = arith.constant dense<0.000000e+00> : vector<2x8x8xf32>
    %105 = tpu.matmul %103, %104, %cst_31 {dimension_numbers = #tpu.dot_dimension_numbers<[2], [2], [1], [1], [0, 0, 0, 1, 1, 1], [0], [0]>} : vector<2x8x8xbf16>, vector<2x8x8xbf16>, vector<2x8x8xf32> -> vector<2x8x8xf32>
    "tpu.trace_stop"() : () -> ()
    %106 = vector.shape_cast %29 : vector<2x8xf32> to vector<2x1x8xf32>
    %107 = vector.broadcast %106 : vector<2x1x8xf32> to vector<2x8x8xf32>
    %108 = arith.addf %105, %107 : vector<2x8x8xf32>
    %cst_32 = arith.constant dense<0xFF800000> : vector<2x8xf32>
    %109 = vector.multi_reduction <maximumf>, %108, %cst_32 [2] : vector<2x8x8xf32> to vector<2x8xf32>
    %110 = vector.shape_cast %109 : vector<2x8xf32> to vector<2x8x1xf32>
    %111 = vector.broadcast %110 : vector<2x8x1xf32> to vector<2x8x8xf32>
    %112 = arith.subf %108, %111 : vector<2x8x8xf32>
    %113 = math.exp %112 : vector<2x8x8xf32>
    %cst_33 = arith.constant dense<0.000000e+00> : vector<2x8xf32>
    %114 = vector.multi_reduction <add>, %113, %cst_33 [2] : vector<2x8x8xf32> to vector<2x8xf32>
    %115 = vector.shape_cast %114 : vector<2x8xf32> to vector<2x8x1xf32>
    %116 = tpu.reciprocal %115 {approx = true} : vector<2x8x1xf32> -> vector<2x8x1xf32>
    %117 = vector.broadcast %116 : vector<2x8x1xf32> to vector<2x8x8xf32>
    %118 = arith.mulf %113, %117 : vector<2x8x8xf32>
    %119 = arith.truncf %118 : vector<2x8x8xf32> to vector<2x8x8xbf16>
    %120 = arith.truncf %102 : vector<2x8x8xf32> to vector<2x8x8xbf16>
    "tpu.trace_start"() <{level = 10 : i32, message = "bqk,bkd->bqd"}> : () -> ()
    %cst_34 = arith.constant dense<0.000000e+00> : vector<2x8x8xf32>
    %121 = tpu.matmul %119, %120, %cst_34 {dimension_numbers = #tpu.dot_dimension_numbers<[2], [1], [1], [2], [0, 0, 0, 1, 1, 2], [0], [0]>} : vector<2x8x8xbf16>, vector<2x8x8xbf16>, vector<2x8x8xf32> -> vector<2x8x8xf32>
    "tpu.trace_stop"() : () -> ()
    %122 = vector.shape_cast %121 : vector<2x8x8xf32> to vector<16x8xf32>
    %123 = vector.extract_strided_slice %38 {offsets = [0, 24], sizes = [16, 8], strides = [1, 1]} : vector<16x96xf32> to vector<16x8xf32>
    %cst_35 = arith.constant 0.353553385 : f32
    %124 = vector.broadcast %cst_35 : f32 to vector<16x8xf32>
    %125 = arith.mulf %123, %124 : vector<16x8xf32>
    %126 = vector.extract_strided_slice %38 {offsets = [0, 56], sizes = [16, 8], strides = [1, 1]} : vector<16x96xf32> to vector<16x8xf32>
    %127 = vector.extract_strided_slice %38 {offsets = [0, 88], sizes = [16, 8], strides = [1, 1]} : vector<16x96xf32> to vector<16x8xf32>
    %128 = vector.shape_cast %125 : vector<16x8xf32> to vector<2x8x8xf32>
    %129 = vector.shape_cast %126 : vector<16x8xf32> to vector<2x8x8xf32>
    %130 = vector.shape_cast %127 : vector<16x8xf32> to vector<2x8x8xf32>
    %131 = arith.truncf %128 : vector<2x8x8xf32> to vector<2x8x8xbf16>
    %132 = arith.truncf %129 : vector<2x8x8xf32> to vector<2x8x8xbf16>
    "tpu.trace_start"() <{level = 10 : i32, message = "bqd,bkd->bqk"}> : () -> ()
    %cst_36 = arith.constant dense<0.000000e+00> : vector<2x8x8xf32>
    %133 = tpu.matmul %131, %132, %cst_36 {dimension_numbers = #tpu.dot_dimension_numbers<[2], [2], [1], [1], [0, 0, 0, 1, 1, 1], [0], [0]>} : vector<2x8x8xbf16>, vector<2x8x8xbf16>, vector<2x8x8xf32> -> vector<2x8x8xf32>
    "tpu.trace_stop"() : () -> ()
    %134 = vector.shape_cast %29 : vector<2x8xf32> to vector<2x1x8xf32>
    %135 = vector.broadcast %134 : vector<2x1x8xf32> to vector<2x8x8xf32>
    %136 = arith.addf %133, %135 : vector<2x8x8xf32>
    %cst_37 = arith.constant dense<0xFF800000> : vector<2x8xf32>
    %137 = vector.multi_reduction <maximumf>, %136, %cst_37 [2] : vector<2x8x8xf32> to vector<2x8xf32>
    %138 = vector.shape_cast %137 : vector<2x8xf32> to vector<2x8x1xf32>
    %139 = vector.broadcast %138 : vector<2x8x1xf32> to vector<2x8x8xf32>
    %140 = arith.subf %136, %139 : vector<2x8x8xf32>
    %141 = math.exp %140 : vector<2x8x8xf32>
    %cst_38 = arith.constant dense<0.000000e+00> : vector<2x8xf32>
    %142 = vector.multi_reduction <add>, %141, %cst_38 [2] : vector<2x8x8xf32> to vector<2x8xf32>
    %143 = vector.shape_cast %142 : vector<2x8xf32> to vector<2x8x1xf32>
    %144 = tpu.reciprocal %143 {approx = true} : vector<2x8x1xf32> -> vector<2x8x1xf32>
    %145 = vector.broadcast %144 : vector<2x8x1xf32> to vector<2x8x8xf32>
    %146 = arith.mulf %141, %145 : vector<2x8x8xf32>
    %147 = arith.truncf %146 : vector<2x8x8xf32> to vector<2x8x8xbf16>
    %148 = arith.truncf %130 : vector<2x8x8xf32> to vector<2x8x8xbf16>
    "tpu.trace_start"() <{level = 10 : i32, message = "bqk,bkd->bqd"}> : () -> ()
    %cst_39 = arith.constant dense<0.000000e+00> : vector<2x8x8xf32>
    %149 = tpu.matmul %147, %148, %cst_39 {dimension_numbers = #tpu.dot_dimension_numbers<[2], [1], [1], [2], [0, 0, 0, 1, 1, 2], [0], [0]>} : vector<2x8x8xbf16>, vector<2x8x8xbf16>, vector<2x8x8xf32> -> vector<2x8x8xf32>
    "tpu.trace_stop"() : () -> ()
    %150 = vector.shape_cast %149 : vector<2x8x8xf32> to vector<16x8xf32>
    %151 = tpu.concatenate %66, %94, %122, %150 in 1 : vector<16x8xf32>, vector<16x8xf32>, vector<16x8xf32>, vector<16x8xf32> -> vector<16x32xf32>
    %c0_40 = arith.constant 0 : index
    %c0_41 = arith.constant 0 : index
    %c0_42 = arith.constant 0 : index
    %152 = vector.load %arg7[%c0_40, %c0_41, %c0_42] : memref<2x32x32xf32, #tpu.memory_space<vmem>>, vector<1x32x32xf32>
    %153 = vector.shape_cast %152 : vector<1x32x32xf32> to vector<32x32xf32>
    %154 = arith.truncf %151 : vector<16x32xf32> to vector<16x32xbf16>
    %155 = arith.truncf %153 : vector<32x32xf32> to vector<32x32xbf16>
    %cst_43 = arith.constant dense<0.000000e+00> : vector<16x32xf32>
    %156 = tpu.matmul %154, %155, %cst_43 {dimension_numbers = #tpu.dot_dimension_numbers<[1], [0], [0], [1], [0, 0, 1, 1], [], []>} : vector<16x32xbf16>, vector<32x32xbf16>, vector<16x32xf32> -> vector<16x32xf32>
    %c0_44 = arith.constant 0 : index
    %c0_45 = arith.constant 0 : index
    %c0_46 = arith.constant 0 : index
    %157 = vector.load %arg8[%c0_44, %c0_45, %c0_46] : memref<2x1x32xf32, #tpu.memory_space<vmem>>, vector<1x1x32xf32>
    %158 = vector.shape_cast %157 : vector<1x1x32xf32> to vector<1x32xf32>
    %159 = vector.broadcast %158 : vector<1x32xf32> to vector<16x32xf32>
    %160 = arith.addf %156, %159 : vector<16x32xf32>
    %161 = arith.addf %160, %24 : vector<16x32xf32>
    %c0_47 = arith.constant 0 : index
    %c0_48 = arith.constant 0 : index
    %c0_49 = arith.constant 0 : index
    %162 = vector.load %arg9[%c0_47, %c0_48, %c0_49] : memref<2x1x32xf32, #tpu.memory_space<vmem>>, vector<1x1x32xf32>
    %163 = vector.shape_cast %162 : vector<1x1x32xf32> to vector<1x32xf32>
    %c0_50 = arith.constant 0 : index
    %c0_51 = arith.constant 0 : index
    %c0_52 = arith.constant 0 : index
    %164 = vector.load %arg10[%c0_50, %c0_51, %c0_52] : memref<2x1x32xf32, #tpu.memory_space<vmem>>, vector<1x1x32xf32>
    %165 = vector.shape_cast %164 : vector<1x1x32xf32> to vector<1x32xf32>
    %cst_53 = arith.constant dense<0.000000e+00> : vector<16xf32>
    %166 = vector.multi_reduction <add>, %161, %cst_53 [1] : vector<16x32xf32> to vector<16xf32>
    %167 = vector.shape_cast %166 : vector<16xf32> to vector<16x1xf32>
    %cst_54 = arith.constant 3.200000e+01 : f32
    %168 = vector.broadcast %cst_54 : f32 to vector<16x1xf32>
    %169 = arith.divf %167, %168 : vector<16x1xf32>
    %170 = vector.broadcast %169 : vector<16x1xf32> to vector<16x32xf32>
    %171 = arith.subf %161, %170 : vector<16x32xf32>
    %172 = arith.mulf %171, %171 : vector<16x32xf32>
    %cst_55 = arith.constant dense<0.000000e+00> : vector<16xf32>
    %173 = vector.multi_reduction <add>, %172, %cst_55 [1] : vector<16x32xf32> to vector<16xf32>
    %174 = vector.shape_cast %173 : vector<16xf32> to vector<16x1xf32>
    %cst_56 = arith.constant 3.200000e+01 : f32
    %175 = vector.broadcast %cst_56 : f32 to vector<16x1xf32>
    %176 = arith.divf %174, %175 : vector<16x1xf32>
    %177 = vector.broadcast %169 : vector<16x1xf32> to vector<16x32xf32>
    %178 = arith.subf %161, %177 : vector<16x32xf32>
    %cst_57 = arith.constant 9.99999996E-13 : f32
    %179 = vector.broadcast %cst_57 : f32 to vector<16x1xf32>
    %180 = arith.addf %176, %179 : vector<16x1xf32>
    %181 = math.rsqrt %180 : vector<16x1xf32>
    %182 = vector.broadcast %181 : vector<16x1xf32> to vector<16x32xf32>
    %183 = arith.mulf %178, %182 : vector<16x32xf32>
    %184 = vector.broadcast %163 : vector<1x32xf32> to vector<16x32xf32>
    %185 = arith.mulf %183, %184 : vector<16x32xf32>
    %186 = vector.broadcast %165 : vector<1x32xf32> to vector<16x32xf32>
    %187 = arith.addf %185, %186 : vector<16x32xf32>
    %c0_58 = arith.constant 0 : index
    %c0_59 = arith.constant 0 : index
    %c0_60 = arith.constant 0 : index
    %188 = vector.load %arg11[%c0_58, %c0_59, %c0_60] : memref<2x32x64xf32, #tpu.memory_space<vmem>>, vector<1x32x64xf32>
    %189 = vector.shape_cast %188 : vector<1x32x64xf32> to vector<32x64xf32>
    %190 = arith.truncf %187 : vector<16x32xf32> to vector<16x32xbf16>
    %191 = arith.truncf %189 : vector<32x64xf32> to vector<32x64xbf16>
    %cst_61 = arith.constant dense<0.000000e+00> : vector<16x64xf32>
    %192 = tpu.matmul %190, %191, %cst_61 {dimension_numbers = #tpu.dot_dimension_numbers<[1], [0], [0], [1], [0, 0, 1, 1], [], []>} : vector<16x32xbf16>, vector<32x64xbf16>, vector<16x64xf32> -> vector<16x64xf32>
    %c0_62 = arith.constant 0 : index
    %c0_63 = arith.constant 0 : index
    %c0_64 = arith.constant 0 : index
    %193 = vector.load %arg12[%c0_62, %c0_63, %c0_64] : memref<2x1x64xf32, #tpu.memory_space<vmem>>, vector<1x1x64xf32>
    %194 = vector.shape_cast %193 : vector<1x1x64xf32> to vector<1x64xf32>
    %195 = vector.broadcast %194 : vector<1x64xf32> to vector<16x64xf32>
    %196 = arith.addf %192, %195 : vector<16x64xf32>
    %197 = arith.mulf %196, %196 : vector<16x64xf32>
    %198 = arith.mulf %196, %197 : vector<16x64xf32>
    %cst_65 = arith.constant 4.471500e-02 : f32
    %199 = vector.broadcast %cst_65 : f32 to vector<16x64xf32>
    %200 = arith.mulf %199, %198 : vector<16x64xf32>
    %201 = arith.addf %196, %200 : vector<16x64xf32>
    %cst_66 = arith.constant 0.797884583 : f32
    %202 = vector.broadcast %cst_66 : f32 to vector<16x64xf32>
    %203 = arith.mulf %202, %201 : vector<16x64xf32>
    %204 = math.tanh %203 : vector<16x64xf32>
    %cst_67 = arith.constant 1.000000e+00 : f32
    %205 = vector.broadcast %cst_67 : f32 to vector<16x64xf32>
    %206 = arith.addf %205, %204 : vector<16x64xf32>
    %cst_68 = arith.constant 5.000000e-01 : f32
    %207 = vector.broadcast %cst_68 : f32 to vector<16x64xf32>
    %208 = arith.mulf %207, %206 : vector<16x64xf32>
    %209 = arith.mulf %196, %208 : vector<16x64xf32>
    %c0_69 = arith.constant 0 : index
    %c0_70 = arith.constant 0 : index
    %c0_71 = arith.constant 0 : index
    %210 = vector.load %arg13[%c0_69, %c0_70, %c0_71] : memref<2x64x32xf32, #tpu.memory_space<vmem>>, vector<1x64x32xf32>
    %211 = vector.shape_cast %210 : vector<1x64x32xf32> to vector<64x32xf32>
    %212 = arith.truncf %209 : vector<16x64xf32> to vector<16x64xbf16>
    %213 = arith.truncf %211 : vector<64x32xf32> to vector<64x32xbf16>
    %cst_72 = arith.constant dense<0.000000e+00> : vector<16x32xf32>
    %214 = tpu.matmul %212, %213, %cst_72 {dimension_numbers = #tpu.dot_dimension_numbers<[1], [0], [0], [1], [0, 0, 1, 1], [], []>} : vector<16x64xbf16>, vector<64x32xbf16>, vector<16x32xf32> -> vector<16x32xf32>
    %c0_73 = arith.constant 0 : index
    %c0_74 = arith.constant 0 : index
    %c0_75 = arith.constant 0 : index
    %215 = vector.load %arg14[%c0_73, %c0_74, %c0_75] : memref<2x1x32xf32, #tpu.memory_space<vmem>>, vector<1x1x32xf32>
    %216 = vector.shape_cast %215 : vector<1x1x32xf32> to vector<1x32xf32>
    %217 = vector.broadcast %216 : vector<1x32xf32> to vector<16x32xf32>
    %218 = arith.addf %214, %217 : vector<16x32xf32>
    %219 = arith.addf %218, %187 : vector<16x32xf32>
    %c0_76 = arith.constant 0 : index
    %c0_77 = arith.constant 0 : index
    %c0_78 = arith.constant 0 : index
    %220 = vector.load %arg15[%c0_76, %c0_77, %c0_78] : memref<2x1x32xf32, #tpu.memory_space<vmem>>, vector<1x1x32xf32>
    %221 = vector.shape_cast %220 : vector<1x1x32xf32> to vector<1x32xf32>
    %c0_79 = arith.constant 0 : index
    %c0_80 = arith.constant 0 : index
    %c0_81 = arith.constant 0 : index
    %222 = vector.load %arg16[%c0_79, %c0_80, %c0_81] : memref<2x1x32xf32, #tpu.memory_space<vmem>>, vector<1x1x32xf32>
    %223 = vector.shape_cast %222 : vector<1x1x32xf32> to vector<1x32xf32>
    %cst_82 = arith.constant dense<0.000000e+00> : vector<16xf32>
    %224 = vector.multi_reduction <add>, %219, %cst_82 [1] : vector<16x32xf32> to vector<16xf32>
    %225 = vector.shape_cast %224 : vector<16xf32> to vector<16x1xf32>
    %cst_83 = arith.constant 3.200000e+01 : f32
    %226 = vector.broadcast %cst_83 : f32 to vector<16x1xf32>
    %227 = arith.divf %225, %226 : vector<16x1xf32>
    %228 = vector.broadcast %227 : vector<16x1xf32> to vector<16x32xf32>
    %229 = arith.subf %219, %228 : vector<16x32xf32>
    %230 = arith.mulf %229, %229 : vector<16x32xf32>
    %cst_84 = arith.constant dense<0.000000e+00> : vector<16xf32>
    %231 = vector.multi_reduction <add>, %230, %cst_84 [1] : vector<16x32xf32> to vector<16xf32>
    %232 = vector.shape_cast %231 : vector<16xf32> to vector<16x1xf32>
    %cst_85 = arith.constant 3.200000e+01 : f32
    %233 = vector.broadcast %cst_85 : f32 to vector<16x1xf32>
    %234 = arith.divf %232, %233 : vector<16x1xf32>
    %235 = vector.broadcast %227 : vector<16x1xf32> to vector<16x32xf32>
    %236 = arith.subf %219, %235 : vector<16x32xf32>
    %cst_86 = arith.constant 9.99999996E-13 : f32
    %237 = vector.broadcast %cst_86 : f32 to vector<16x1xf32>
    %238 = arith.addf %234, %237 : vector<16x1xf32>
    %239 = math.rsqrt %238 : vector<16x1xf32>
    %240 = vector.broadcast %239 : vector<16x1xf32> to vector<16x32xf32>
    %241 = arith.mulf %236, %240 : vector<16x32xf32>
    %242 = vector.broadcast %221 : vector<1x32xf32> to vector<16x32xf32>
    %243 = arith.mulf %241, %242 : vector<16x32xf32>
    %244 = vector.broadcast %223 : vector<1x32xf32> to vector<16x32xf32>
    %245 = arith.addf %243, %244 : vector<16x32xf32>
    %c1 = arith.constant 1 : index
    %c0_87 = arith.constant 0 : index
    %c0_88 = arith.constant 0 : index
    %246 = vector.load %arg5[%c1, %c0_87, %c0_88] : memref<2x32x96xf32, #tpu.memory_space<vmem>>, vector<1x32x96xf32>
    %247 = vector.shape_cast %246 : vector<1x32x96xf32> to vector<32x96xf32>
    %248 = arith.truncf %245 : vector<16x32xf32> to vector<16x32xbf16>
    %249 = arith.truncf %247 : vector<32x96xf32> to vector<32x96xbf16>
    %cst_89 = arith.constant dense<0.000000e+00> : vector<16x96xf32>
    %250 = tpu.matmul %248, %249, %cst_89 {dimension_numbers = #tpu.dot_dimension_numbers<[1], [0], [0], [1], [0, 0, 1, 1], [], []>} : vector<16x32xbf16>, vector<32x96xbf16>, vector<16x96xf32> -> vector<16x96xf32>
    %c1_90 = arith.constant 1 : index
    %c0_91 = arith.constant 0 : index
    %c0_92 = arith.constant 0 : index
    %251 = vector.load %arg6[%c1_90, %c0_91, %c0_92] : memref<2x1x96xf32, #tpu.memory_space<vmem>>, vector<1x1x96xf32>
    %252 = vector.shape_cast %251 : vector<1x1x96xf32> to vector<1x96xf32>
    %253 = vector.broadcast %252 : vector<1x96xf32> to vector<16x96xf32>
    %254 = arith.addf %250, %253 : vector<16x96xf32>
    %255 = vector.extract_strided_slice %254 {offsets = [0, 0], sizes = [16, 8], strides = [1, 1]} : vector<16x96xf32> to vector<16x8xf32>
    %cst_93 = arith.constant 0.353553385 : f32
    %256 = vector.broadcast %cst_93 : f32 to vector<16x8xf32>
    %257 = arith.mulf %255, %256 : vector<16x8xf32>
    %258 = vector.extract_strided_slice %254 {offsets = [0, 32], sizes = [16, 8], strides = [1, 1]} : vector<16x96xf32> to vector<16x8xf32>
    %259 = vector.extract_strided_slice %254 {offsets = [0, 64], sizes = [16, 8], strides = [1, 1]} : vector<16x96xf32> to vector<16x8xf32>
    %260 = vector.shape_cast %257 : vector<16x8xf32> to vector<2x8x8xf32>
    %261 = vector.shape_cast %258 : vector<16x8xf32> to vector<2x8x8xf32>
    %262 = vector.shape_cast %259 : vector<16x8xf32> to vector<2x8x8xf32>
    %263 = arith.truncf %260 : vector<2x8x8xf32> to vector<2x8x8xbf16>
    %264 = arith.truncf %261 : vector<2x8x8xf32> to vector<2x8x8xbf16>
    "tpu.trace_start"() <{level = 10 : i32, message = "bqd,bkd->bqk"}> : () -> ()
    %cst_94 = arith.constant dense<0.000000e+00> : vector<2x8x8xf32>
    %265 = tpu.matmul %263, %264, %cst_94 {dimension_numbers = #tpu.dot_dimension_numbers<[2], [2], [1], [1], [0, 0, 0, 1, 1, 1], [0], [0]>} : vector<2x8x8xbf16>, vector<2x8x8xbf16>, vector<2x8x8xf32> -> vector<2x8x8xf32>
    "tpu.trace_stop"() : () -> ()
    %266 = vector.shape_cast %29 : vector<2x8xf32> to vector<2x1x8xf32>
    %267 = vector.broadcast %266 : vector<2x1x8xf32> to vector<2x8x8xf32>
    %268 = arith.addf %265, %267 : vector<2x8x8xf32>
    %cst_95 = arith.constant dense<0xFF800000> : vector<2x8xf32>
    %269 = vector.multi_reduction <maximumf>, %268, %cst_95 [2] : vector<2x8x8xf32> to vector<2x8xf32>
    %270 = vector.shape_cast %269 : vector<2x8xf32> to vector<2x8x1xf32>
    %271 = vector.broadcast %270 : vector<2x8x1xf32> to vector<2x8x8xf32>
    %272 = arith.subf %268, %271 : vector<2x8x8xf32>
    %273 = math.exp %272 : vector<2x8x8xf32>
    %cst_96 = arith.constant dense<0.000000e+00> : vector<2x8xf32>
    %274 = vector.multi_reduction <add>, %273, %cst_96 [2] : vector<2x8x8xf32> to vector<2x8xf32>
    %275 = vector.shape_cast %274 : vector<2x8xf32> to vector<2x8x1xf32>
    %276 = tpu.reciprocal %275 {approx = true} : vector<2x8x1xf32> -> vector<2x8x1xf32>
    %277 = vector.broadcast %276 : vector<2x8x1xf32> to vector<2x8x8xf32>
    %278 = arith.mulf %273, %277 : vector<2x8x8xf32>
    %279 = arith.truncf %278 : vector<2x8x8xf32> to vector<2x8x8xbf16>
    %280 = arith.truncf %262 : vector<2x8x8xf32> to vector<2x8x8xbf16>
    "tpu.trace_start"() <{level = 10 : i32, message = "bqk,bkd->bqd"}> : () -> ()
    %cst_97 = arith.constant dense<0.000000e+00> : vector<2x8x8xf32>
    %281 = tpu.matmul %279, %280, %cst_97 {dimension_numbers = #tpu.dot_dimension_numbers<[2], [1], [1], [2], [0, 0, 0, 1, 1, 2], [0], [0]>} : vector<2x8x8xbf16>, vector<2x8x8xbf16>, vector<2x8x8xf32> -> vector<2x8x8xf32>
    "tpu.trace_stop"() : () -> ()
    %282 = vector.shape_cast %281 : vector<2x8x8xf32> to vector<16x8xf32>
    %283 = vector.extract_strided_slice %254 {offsets = [0, 8], sizes = [16, 8], strides = [1, 1]} : vector<16x96xf32> to vector<16x8xf32>
    %cst_98 = arith.constant 0.353553385 : f32
    %284 = vector.broadcast %cst_98 : f32 to vector<16x8xf32>
    %285 = arith.mulf %283, %284 : vector<16x8xf32>
    %286 = vector.extract_strided_slice %254 {offsets = [0, 40], sizes = [16, 8], strides = [1, 1]} : vector<16x96xf32> to vector<16x8xf32>
    %287 = vector.extract_strided_slice %254 {offsets = [0, 72], sizes = [16, 8], strides = [1, 1]} : vector<16x96xf32> to vector<16x8xf32>
    %288 = vector.shape_cast %285 : vector<16x8xf32> to vector<2x8x8xf32>
    %289 = vector.shape_cast %286 : vector<16x8xf32> to vector<2x8x8xf32>
    %290 = vector.shape_cast %287 : vector<16x8xf32> to vector<2x8x8xf32>
    %291 = arith.truncf %288 : vector<2x8x8xf32> to vector<2x8x8xbf16>
    %292 = arith.truncf %289 : vector<2x8x8xf32> to vector<2x8x8xbf16>
    "tpu.trace_start"() <{level = 10 : i32, message = "bqd,bkd->bqk"}> : () -> ()
    %cst_99 = arith.constant dense<0.000000e+00> : vector<2x8x8xf32>
    %293 = tpu.matmul %291, %292, %cst_99 {dimension_numbers = #tpu.dot_dimension_numbers<[2], [2], [1], [1], [0, 0, 0, 1, 1, 1], [0], [0]>} : vector<2x8x8xbf16>, vector<2x8x8xbf16>, vector<2x8x8xf32> -> vector<2x8x8xf32>
    "tpu.trace_stop"() : () -> ()
    %294 = vector.shape_cast %29 : vector<2x8xf32> to vector<2x1x8xf32>
    %295 = vector.broadcast %294 : vector<2x1x8xf32> to vector<2x8x8xf32>
    %296 = arith.addf %293, %295 : vector<2x8x8xf32>
    %cst_100 = arith.constant dense<0xFF800000> : vector<2x8xf32>
    %297 = vector.multi_reduction <maximumf>, %296, %cst_100 [2] : vector<2x8x8xf32> to vector<2x8xf32>
    %298 = vector.shape_cast %297 : vector<2x8xf32> to vector<2x8x1xf32>
    %299 = vector.broadcast %298 : vector<2x8x1xf32> to vector<2x8x8xf32>
    %300 = arith.subf %296, %299 : vector<2x8x8xf32>
    %301 = math.exp %300 : vector<2x8x8xf32>
    %cst_101 = arith.constant dense<0.000000e+00> : vector<2x8xf32>
    %302 = vector.multi_reduction <add>, %301, %cst_101 [2] : vector<2x8x8xf32> to vector<2x8xf32>
    %303 = vector.shape_cast %302 : vector<2x8xf32> to vector<2x8x1xf32>
    %304 = tpu.reciprocal %303 {approx = true} : vector<2x8x1xf32> -> vector<2x8x1xf32>
    %305 = vector.broadcast %304 : vector<2x8x1xf32> to vector<2x8x8xf32>
    %306 = arith.mulf %301, %305 : vector<2x8x8xf32>
    %307 = arith.truncf %306 : vector<2x8x8xf32> to vector<2x8x8xbf16>
    %308 = arith.truncf %290 : vector<2x8x8xf32> to vector<2x8x8xbf16>
    "tpu.trace_start"() <{level = 10 : i32, message = "bqk,bkd->bqd"}> : () -> ()
    %cst_102 = arith.constant dense<0.000000e+00> : vector<2x8x8xf32>
    %309 = tpu.matmul %307, %308, %cst_102 {dimension_numbers = #tpu.dot_dimension_numbers<[2], [1], [1], [2], [0, 0, 0, 1, 1, 2], [0], [0]>} : vector<2x8x8xbf16>, vector<2x8x8xbf16>, vector<2x8x8xf32> -> vector<2x8x8xf32>
    "tpu.trace_stop"() : () -> ()
    %310 = vector.shape_cast %309 : vector<2x8x8xf32> to vector<16x8xf32>
    %311 = vector.extract_strided_slice %254 {offsets = [0, 16], sizes = [16, 8], strides = [1, 1]} : vector<16x96xf32> to vector<16x8xf32>
    %cst_103 = arith.constant 0.353553385 : f32
    %312 = vector.broadcast %cst_103 : f32 to vector<16x8xf32>
    %313 = arith.mulf %311, %312 : vector<16x8xf32>
    %314 = vector.extract_strided_slice %254 {offsets = [0, 48], sizes = [16, 8], strides = [1, 1]} : vector<16x96xf32> to vector<16x8xf32>
    %315 = vector.extract_strided_slice %254 {offsets = [0, 80], sizes = [16, 8], strides = [1, 1]} : vector<16x96xf32> to vector<16x8xf32>
    %316 = vector.shape_cast %313 : vector<16x8xf32> to vector<2x8x8xf32>
    %317 = vector.shape_cast %314 : vector<16x8xf32> to vector<2x8x8xf32>
    %318 = vector.shape_cast %315 : vector<16x8xf32> to vector<2x8x8xf32>
    %319 = arith.truncf %316 : vector<2x8x8xf32> to vector<2x8x8xbf16>
    %320 = arith.truncf %317 : vector<2x8x8xf32> to vector<2x8x8xbf16>
    "tpu.trace_start"() <{level = 10 : i32, message = "bqd,bkd->bqk"}> : () -> ()
    %cst_104 = arith.constant dense<0.000000e+00> : vector<2x8x8xf32>
    %321 = tpu.matmul %319, %320, %cst_104 {dimension_numbers = #tpu.dot_dimension_numbers<[2], [2], [1], [1], [0, 0, 0, 1, 1, 1], [0], [0]>} : vector<2x8x8xbf16>, vector<2x8x8xbf16>, vector<2x8x8xf32> -> vector<2x8x8xf32>
    "tpu.trace_stop"() : () -> ()
    %322 = vector.shape_cast %29 : vector<2x8xf32> to vector<2x1x8xf32>
    %323 = vector.broadcast %322 : vector<2x1x8xf32> to vector<2x8x8xf32>
    %324 = arith.addf %321, %323 : vector<2x8x8xf32>
    %cst_105 = arith.constant dense<0xFF800000> : vector<2x8xf32>
    %325 = vector.multi_reduction <maximumf>, %324, %cst_105 [2] : vector<2x8x8xf32> to vector<2x8xf32>
    %326 = vector.shape_cast %325 : vector<2x8xf32> to vector<2x8x1xf32>
    %327 = vector.broadcast %326 : vector<2x8x1xf32> to vector<2x8x8xf32>
    %328 = arith.subf %324, %327 : vector<2x8x8xf32>
    %329 = math.exp %328 : vector<2x8x8xf32>
    %cst_106 = arith.constant dense<0.000000e+00> : vector<2x8xf32>
    %330 = vector.multi_reduction <add>, %329, %cst_106 [2] : vector<2x8x8xf32> to vector<2x8xf32>
    %331 = vector.shape_cast %330 : vector<2x8xf32> to vector<2x8x1xf32>
    %332 = tpu.reciprocal %331 {approx = true} : vector<2x8x1xf32> -> vector<2x8x1xf32>
    %333 = vector.broadcast %332 : vector<2x8x1xf32> to vector<2x8x8xf32>
    %334 = arith.mulf %329, %333 : vector<2x8x8xf32>
    %335 = arith.truncf %334 : vector<2x8x8xf32> to vector<2x8x8xbf16>
    %336 = arith.truncf %318 : vector<2x8x8xf32> to vector<2x8x8xbf16>
    "tpu.trace_start"() <{level = 10 : i32, message = "bqk,bkd->bqd"}> : () -> ()
    %cst_107 = arith.constant dense<0.000000e+00> : vector<2x8x8xf32>
    %337 = tpu.matmul %335, %336, %cst_107 {dimension_numbers = #tpu.dot_dimension_numbers<[2], [1], [1], [2], [0, 0, 0, 1, 1, 2], [0], [0]>} : vector<2x8x8xbf16>, vector<2x8x8xbf16>, vector<2x8x8xf32> -> vector<2x8x8xf32>
    "tpu.trace_stop"() : () -> ()
    %338 = vector.shape_cast %337 : vector<2x8x8xf32> to vector<16x8xf32>
    %339 = vector.extract_strided_slice %254 {offsets = [0, 24], sizes = [16, 8], strides = [1, 1]} : vector<16x96xf32> to vector<16x8xf32>
    %cst_108 = arith.constant 0.353553385 : f32
    %340 = vector.broadcast %cst_108 : f32 to vector<16x8xf32>
    %341 = arith.mulf %339, %340 : vector<16x8xf32>
    %342 = vector.extract_strided_slice %254 {offsets = [0, 56], sizes = [16, 8], strides = [1, 1]} : vector<16x96xf32> to vector<16x8xf32>
    %343 = vector.extract_strided_slice %254 {offsets = [0, 88], sizes = [16, 8], strides = [1, 1]} : vector<16x96xf32> to vector<16x8xf32>
    %344 = vector.shape_cast %341 : vector<16x8xf32> to vector<2x8x8xf32>
    %345 = vector.shape_cast %342 : vector<16x8xf32> to vector<2x8x8xf32>
    %346 = vector.shape_cast %343 : vector<16x8xf32> to vector<2x8x8xf32>
    %347 = arith.truncf %344 : vector<2x8x8xf32> to vector<2x8x8xbf16>
    %348 = arith.truncf %345 : vector<2x8x8xf32> to vector<2x8x8xbf16>
    "tpu.trace_start"() <{level = 10 : i32, message = "bqd,bkd->bqk"}> : () -> ()
    %cst_109 = arith.constant dense<0.000000e+00> : vector<2x8x8xf32>
    %349 = tpu.matmul %347, %348, %cst_109 {dimension_numbers = #tpu.dot_dimension_numbers<[2], [2], [1], [1], [0, 0, 0, 1, 1, 1], [0], [0]>} : vector<2x8x8xbf16>, vector<2x8x8xbf16>, vector<2x8x8xf32> -> vector<2x8x8xf32>
    "tpu.trace_stop"() : () -> ()
    %350 = vector.shape_cast %29 : vector<2x8xf32> to vector<2x1x8xf32>
    %351 = vector.broadcast %350 : vector<2x1x8xf32> to vector<2x8x8xf32>
    %352 = arith.addf %349, %351 : vector<2x8x8xf32>
    %cst_110 = arith.constant dense<0xFF800000> : vector<2x8xf32>
    %353 = vector.multi_reduction <maximumf>, %352, %cst_110 [2] : vector<2x8x8xf32> to vector<2x8xf32>
    %354 = vector.shape_cast %353 : vector<2x8xf32> to vector<2x8x1xf32>
    %355 = vector.broadcast %354 : vector<2x8x1xf32> to vector<2x8x8xf32>
    %356 = arith.subf %352, %355 : vector<2x8x8xf32>
    %357 = math.exp %356 : vector<2x8x8xf32>
    %cst_111 = arith.constant dense<0.000000e+00> : vector<2x8xf32>
    %358 = vector.multi_reduction <add>, %357, %cst_111 [2] : vector<2x8x8xf32> to vector<2x8xf32>
    %359 = vector.shape_cast %358 : vector<2x8xf32> to vector<2x8x1xf32>
    %360 = tpu.reciprocal %359 {approx = true} : vector<2x8x1xf32> -> vector<2x8x1xf32>
    %361 = vector.broadcast %360 : vector<2x8x1xf32> to vector<2x8x8xf32>
    %362 = arith.mulf %357, %361 : vector<2x8x8xf32>
    %363 = arith.truncf %362 : vector<2x8x8xf32> to vector<2x8x8xbf16>
    %364 = arith.truncf %346 : vector<2x8x8xf32> to vector<2x8x8xbf16>
    "tpu.trace_start"() <{level = 10 : i32, message = "bqk,bkd->bqd"}> : () -> ()
    %cst_112 = arith.constant dense<0.000000e+00> : vector<2x8x8xf32>
    %365 = tpu.matmul %363, %364, %cst_112 {dimension_numbers = #tpu.dot_dimension_numbers<[2], [1], [1], [2], [0, 0, 0, 1, 1, 2], [0], [0]>} : vector<2x8x8xbf16>, vector<2x8x8xbf16>, vector<2x8x8xf32> -> vector<2x8x8xf32>
    "tpu.trace_stop"() : () -> ()
    %366 = vector.shape_cast %365 : vector<2x8x8xf32> to vector<16x8xf32>
    %367 = tpu.concatenate %282, %310, %338, %366 in 1 : vector<16x8xf32>, vector<16x8xf32>, vector<16x8xf32>, vector<16x8xf32> -> vector<16x32xf32>
    %c1_113 = arith.constant 1 : index
    %c0_114 = arith.constant 0 : index
    %c0_115 = arith.constant 0 : index
    %368 = vector.load %arg7[%c1_113, %c0_114, %c0_115] : memref<2x32x32xf32, #tpu.memory_space<vmem>>, vector<1x32x32xf32>
    %369 = vector.shape_cast %368 : vector<1x32x32xf32> to vector<32x32xf32>
    %370 = arith.truncf %367 : vector<16x32xf32> to vector<16x32xbf16>
    %371 = arith.truncf %369 : vector<32x32xf32> to vector<32x32xbf16>
    %cst_116 = arith.constant dense<0.000000e+00> : vector<16x32xf32>
    %372 = tpu.matmul %370, %371, %cst_116 {dimension_numbers = #tpu.dot_dimension_numbers<[1], [0], [0], [1], [0, 0, 1, 1], [], []>} : vector<16x32xbf16>, vector<32x32xbf16>, vector<16x32xf32> -> vector<16x32xf32>
    %c1_117 = arith.constant 1 : index
    %c0_118 = arith.constant 0 : index
    %c0_119 = arith.constant 0 : index
    %373 = vector.load %arg8[%c1_117, %c0_118, %c0_119] : memref<2x1x32xf32, #tpu.memory_space<vmem>>, vector<1x1x32xf32>
    %374 = vector.shape_cast %373 : vector<1x1x32xf32> to vector<1x32xf32>
    %375 = vector.broadcast %374 : vector<1x32xf32> to vector<16x32xf32>
    %376 = arith.addf %372, %375 : vector<16x32xf32>
    %377 = arith.addf %376, %245 : vector<16x32xf32>
    %c1_120 = arith.constant 1 : index
    %c0_121 = arith.constant 0 : index
    %c0_122 = arith.constant 0 : index
    %378 = vector.load %arg9[%c1_120, %c0_121, %c0_122] : memref<2x1x32xf32, #tpu.memory_space<vmem>>, vector<1x1x32xf32>
    %379 = vector.shape_cast %378 : vector<1x1x32xf32> to vector<1x32xf32>
    %c1_123 = arith.constant 1 : index
    %c0_124 = arith.constant 0 : index
    %c0_125 = arith.constant 0 : index
    %380 = vector.load %arg10[%c1_123, %c0_124, %c0_125] : memref<2x1x32xf32, #tpu.memory_space<vmem>>, vector<1x1x32xf32>
    %381 = vector.shape_cast %380 : vector<1x1x32xf32> to vector<1x32xf32>
    %cst_126 = arith.constant dense<0.000000e+00> : vector<16xf32>
    %382 = vector.multi_reduction <add>, %377, %cst_126 [1] : vector<16x32xf32> to vector<16xf32>
    %383 = vector.shape_cast %382 : vector<16xf32> to vector<16x1xf32>
    %cst_127 = arith.constant 3.200000e+01 : f32
    %384 = vector.broadcast %cst_127 : f32 to vector<16x1xf32>
    %385 = arith.divf %383, %384 : vector<16x1xf32>
    %386 = vector.broadcast %385 : vector<16x1xf32> to vector<16x32xf32>
    %387 = arith.subf %377, %386 : vector<16x32xf32>
    %388 = arith.mulf %387, %387 : vector<16x32xf32>
    %cst_128 = arith.constant dense<0.000000e+00> : vector<16xf32>
    %389 = vector.multi_reduction <add>, %388, %cst_128 [1] : vector<16x32xf32> to vector<16xf32>
    %390 = vector.shape_cast %389 : vector<16xf32> to vector<16x1xf32>
    %cst_129 = arith.constant 3.200000e+01 : f32
    %391 = vector.broadcast %cst_129 : f32 to vector<16x1xf32>
    %392 = arith.divf %390, %391 : vector<16x1xf32>
    %393 = vector.broadcast %385 : vector<16x1xf32> to vector<16x32xf32>
    %394 = arith.subf %377, %393 : vector<16x32xf32>
    %cst_130 = arith.constant 9.99999996E-13 : f32
    %395 = vector.broadcast %cst_130 : f32 to vector<16x1xf32>
    %396 = arith.addf %392, %395 : vector<16x1xf32>
    %397 = math.rsqrt %396 : vector<16x1xf32>
    %398 = vector.broadcast %397 : vector<16x1xf32> to vector<16x32xf32>
    %399 = arith.mulf %394, %398 : vector<16x32xf32>
    %400 = vector.broadcast %379 : vector<1x32xf32> to vector<16x32xf32>
    %401 = arith.mulf %399, %400 : vector<16x32xf32>
    %402 = vector.broadcast %381 : vector<1x32xf32> to vector<16x32xf32>
    %403 = arith.addf %401, %402 : vector<16x32xf32>
    %c1_131 = arith.constant 1 : index
    %c0_132 = arith.constant 0 : index
    %c0_133 = arith.constant 0 : index
    %404 = vector.load %arg11[%c1_131, %c0_132, %c0_133] : memref<2x32x64xf32, #tpu.memory_space<vmem>>, vector<1x32x64xf32>
    %405 = vector.shape_cast %404 : vector<1x32x64xf32> to vector<32x64xf32>
    %406 = arith.truncf %403 : vector<16x32xf32> to vector<16x32xbf16>
    %407 = arith.truncf %405 : vector<32x64xf32> to vector<32x64xbf16>
    %cst_134 = arith.constant dense<0.000000e+00> : vector<16x64xf32>
    %408 = tpu.matmul %406, %407, %cst_134 {dimension_numbers = #tpu.dot_dimension_numbers<[1], [0], [0], [1], [0, 0, 1, 1], [], []>} : vector<16x32xbf16>, vector<32x64xbf16>, vector<16x64xf32> -> vector<16x64xf32>
    %c1_135 = arith.constant 1 : index
    %c0_136 = arith.constant 0 : index
    %c0_137 = arith.constant 0 : index
    %409 = vector.load %arg12[%c1_135, %c0_136, %c0_137] : memref<2x1x64xf32, #tpu.memory_space<vmem>>, vector<1x1x64xf32>
    %410 = vector.shape_cast %409 : vector<1x1x64xf32> to vector<1x64xf32>
    %411 = vector.broadcast %410 : vector<1x64xf32> to vector<16x64xf32>
    %412 = arith.addf %408, %411 : vector<16x64xf32>
    %413 = arith.mulf %412, %412 : vector<16x64xf32>
    %414 = arith.mulf %412, %413 : vector<16x64xf32>
    %cst_138 = arith.constant 4.471500e-02 : f32
    %415 = vector.broadcast %cst_138 : f32 to vector<16x64xf32>
    %416 = arith.mulf %415, %414 : vector<16x64xf32>
    %417 = arith.addf %412, %416 : vector<16x64xf32>
    %cst_139 = arith.constant 0.797884583 : f32
    %418 = vector.broadcast %cst_139 : f32 to vector<16x64xf32>
    %419 = arith.mulf %418, %417 : vector<16x64xf32>
    %420 = math.tanh %419 : vector<16x64xf32>
    %cst_140 = arith.constant 1.000000e+00 : f32
    %421 = vector.broadcast %cst_140 : f32 to vector<16x64xf32>
    %422 = arith.addf %421, %420 : vector<16x64xf32>
    %cst_141 = arith.constant 5.000000e-01 : f32
    %423 = vector.broadcast %cst_141 : f32 to vector<16x64xf32>
    %424 = arith.mulf %423, %422 : vector<16x64xf32>
    %425 = arith.mulf %412, %424 : vector<16x64xf32>
    %c1_142 = arith.constant 1 : index
    %c0_143 = arith.constant 0 : index
    %c0_144 = arith.constant 0 : index
    %426 = vector.load %arg13[%c1_142, %c0_143, %c0_144] : memref<2x64x32xf32, #tpu.memory_space<vmem>>, vector<1x64x32xf32>
    %427 = vector.shape_cast %426 : vector<1x64x32xf32> to vector<64x32xf32>
    %428 = arith.truncf %425 : vector<16x64xf32> to vector<16x64xbf16>
    %429 = arith.truncf %427 : vector<64x32xf32> to vector<64x32xbf16>
    %cst_145 = arith.constant dense<0.000000e+00> : vector<16x32xf32>
    %430 = tpu.matmul %428, %429, %cst_145 {dimension_numbers = #tpu.dot_dimension_numbers<[1], [0], [0], [1], [0, 0, 1, 1], [], []>} : vector<16x64xbf16>, vector<64x32xbf16>, vector<16x32xf32> -> vector<16x32xf32>
    %c1_146 = arith.constant 1 : index
    %c0_147 = arith.constant 0 : index
    %c0_148 = arith.constant 0 : index
    %431 = vector.load %arg14[%c1_146, %c0_147, %c0_148] : memref<2x1x32xf32, #tpu.memory_space<vmem>>, vector<1x1x32xf32>
    %432 = vector.shape_cast %431 : vector<1x1x32xf32> to vector<1x32xf32>
    %433 = vector.broadcast %432 : vector<1x32xf32> to vector<16x32xf32>
    %434 = arith.addf %430, %433 : vector<16x32xf32>
    %435 = arith.addf %434, %403 : vector<16x32xf32>
    %c1_149 = arith.constant 1 : index
    %c0_150 = arith.constant 0 : index
    %c0_151 = arith.constant 0 : index
    %436 = vector.load %arg15[%c1_149, %c0_150, %c0_151] : memref<2x1x32xf32, #tpu.memory_space<vmem>>, vector<1x1x32xf32>
    %437 = vector.shape_cast %436 : vector<1x1x32xf32> to vector<1x32xf32>
    %c1_152 = arith.constant 1 : index
    %c0_153 = arith.constant 0 : index
    %c0_154 = arith.constant 0 : index
    %438 = vector.load %arg16[%c1_152, %c0_153, %c0_154] : memref<2x1x32xf32, #tpu.memory_space<vmem>>, vector<1x1x32xf32>
    %439 = vector.shape_cast %438 : vector<1x1x32xf32> to vector<1x32xf32>
    %cst_155 = arith.constant dense<0.000000e+00> : vector<16xf32>
    %440 = vector.multi_reduction <add>, %435, %cst_155 [1] : vector<16x32xf32> to vector<16xf32>
    %441 = vector.shape_cast %440 : vector<16xf32> to vector<16x1xf32>
    %cst_156 = arith.constant 3.200000e+01 : f32
    %442 = vector.broadcast %cst_156 : f32 to vector<16x1xf32>
    %443 = arith.divf %441, %442 : vector<16x1xf32>
    %444 = vector.broadcast %443 : vector<16x1xf32> to vector<16x32xf32>
    %445 = arith.subf %435, %444 : vector<16x32xf32>
    %446 = arith.mulf %445, %445 : vector<16x32xf32>
    %cst_157 = arith.constant dense<0.000000e+00> : vector<16xf32>
    %447 = vector.multi_reduction <add>, %446, %cst_157 [1] : vector<16x32xf32> to vector<16xf32>
    %448 = vector.shape_cast %447 : vector<16xf32> to vector<16x1xf32>
    %cst_158 = arith.constant 3.200000e+01 : f32
    %449 = vector.broadcast %cst_158 : f32 to vector<16x1xf32>
    %450 = arith.divf %448, %449 : vector<16x1xf32>
    %451 = vector.broadcast %443 : vector<16x1xf32> to vector<16x32xf32>
    %452 = arith.subf %435, %451 : vector<16x32xf32>
    %cst_159 = arith.constant 9.99999996E-13 : f32
    %453 = vector.broadcast %cst_159 : f32 to vector<16x1xf32>
    %454 = arith.addf %450, %453 : vector<16x1xf32>
    %455 = math.rsqrt %454 : vector<16x1xf32>
    %456 = vector.broadcast %455 : vector<16x1xf32> to vector<16x32xf32>
    %457 = arith.mulf %452, %456 : vector<16x32xf32>
    %458 = vector.broadcast %437 : vector<1x32xf32> to vector<16x32xf32>
    %459 = arith.mulf %457, %458 : vector<16x32xf32>
    %460 = vector.broadcast %439 : vector<1x32xf32> to vector<16x32xf32>
    %461 = arith.addf %459, %460 : vector<16x32xf32>
    %462 = vector.shape_cast %461 : vector<16x32xf32> to vector<2x8x32xf32>
    %463 = vector.shape_cast %25 : vector<2x8xf32> to vector<2x8x1xf32>
    %464 = vector.broadcast %463 : vector<2x8x1xf32> to vector<2x8x32xf32>
    %465 = arith.mulf %462, %464 : vector<2x8x32xf32>
    %cst_160 = arith.constant dense<0.000000e+00> : vector<2x32xf32>
    %466 = vector.multi_reduction <add>, %465, %cst_160 [1] : vector<2x8x32xf32> to vector<2x32xf32>
    %cst_161 = arith.constant dense<0.000000e+00> : vector<2xf32>
    %467 = vector.multi_reduction <add>, %25, %cst_161 [1] : vector<2x8xf32> to vector<2xf32>
    %468 = vector.shape_cast %467 : vector<2xf32> to vector<2x1xf32>
    %469 = vector.broadcast %468 : vector<2x1xf32> to vector<2x32xf32>
    %470 = arith.divf %466, %469 : vector<2x32xf32>
    %c0_162 = arith.constant 0 : index
    %c0_163 = arith.constant 0 : index
    %471 = vector.load %arg17[%c0_162, %c0_163] : memref<2x32xf32, #tpu.memory_space<vmem>>, vector<2x32xf32>
    tpu.vector_store %arg17[%c0_162, %c0_163], %470 {strides = array<i32>} : memref<2x32xf32, #tpu.memory_space<vmem>>, vector<2x32xf32>,
    return
  }
  func.func @transform_0(%arg0: i32) -> (i32, i32) {
    %c0_i32 = arith.constant 0 : i32
    %c0_i32_0 = arith.constant 0 : i32
    %c0_i32_1 = arith.constant 0 : i32
    return %c0_i32, %c0_i32_0 : i32, i32
  }
  func.func @transform_1(%arg0: i32) -> (i32, i32) {
    %c0_i32 = arith.constant 0 : i32
    %c0_i32_0 = arith.constant 0 : i32
    %c0_i32_1 = arith.constant 0 : i32
    return %c0_i32, %c0_i32_0 : i32, i32
  }
  func.func @transform_2(%arg0: i32) -> (i32, i32) {
    %c0_i32 = arith.constant 0 : i32
    %c0_i32_0 = arith.constant 0 : i32
    %c0_i32_1 = arith.constant 0 : i32
    return %c0_i32, %c0_i32_0 : i32, i32
  }
  func.func @transform_3(%arg0: i32) -> (i32, i32) {
    %c0_i32 = arith.constant 0 : i32
    %c0_i32_0 = arith.constant 0 : i32
    %c0_i32_1 = arith.constant 0 : i32
    return %c0_i32, %c0_i32_0 : i32, i32
  }
  func.func @transform_4(%arg0: i32) -> (i32, i32, i32) {
    %c0_i32 = arith.constant 0 : i32
    %c0_i32_0 = arith.constant 0 : i32
    %c0_i32_1 = arith.constant 0 : i32
    %c0_i32_2 = arith.constant 0 : i32
    return %c0_i32, %c0_i32_0, %c0_i32_1 : i32, i32, i32
  }
  func.func @transform_5(%arg0: i32) -> (i32, i32, i32) {
    %c0_i32 = arith.constant 0 : i32
    %c0_i32_0 = arith.constant 0 : i32
    %c0_i32_1 = arith.constant 0 : i32
    %c0_i32_2 = arith.constant 0 : i32
    return %c0_i32, %c0_i32_0, %c0_i32_1 : i32, i32, i32
  }
  func.func @transform_6(%arg0: i32) -> (i32, i32, i32) {
    %c0_i32 = arith.constant 0 : i32
    %c0_i32_0 = arith.constant 0 : i32
    %c0_i32_1 = arith.constant 0 : i32
    %c0_i32_2 = arith.constant 0 : i32
    return %c0_i32, %c0_i32_0, %c0_i32_1 : i32, i32, i32
  }
  func.func @transform_7(%arg0: i32) -> (i32, i32, i32) {
    %c0_i32 = arith.constant 0 : i32
    %c0_i32_0 = arith.constant 0 : i32
    %c0_i32_1 = arith.constant 0 : i32
    %c0_i32_2 = arith.constant 0 : i32
    return %c0_i32, %c0_i32_0, %c0_i32_1 : i32, i32, i32
  }
  func.func @transform_8(%arg0: i32) -> (i32, i32, i32) {
    %c0_i32 = arith.constant 0 : i32
    %c0_i32_0 = arith.constant 0 : i32
    %c0_i32_1 = arith.constant 0 : i32
    %c0_i32_2 = arith.constant 0 : i32
    return %c0_i32, %c0_i32_0, %c0_i32_1 : i32, i32, i32
  }
  func.func @transform_9(%arg0: i32) -> (i32, i32, i32) {
    %c0_i32 = arith.constant 0 : i32
    %c0_i32_0 = arith.constant 0 : i32
    %c0_i32_1 = arith.constant 0 : i32
    %c0_i32_2 = arith.constant 0 : i32
    return %c0_i32, %c0_i32_0, %c0_i32_1 : i32, i32, i32
  }
  func.func @transform_10(%arg0: i32) -> (i32, i32, i32) {
    %c0_i32 = arith.constant 0 : i32
    %c0_i32_0 = arith.constant 0 : i32
    %c0_i32_1 = arith.constant 0 : i32
    %c0_i32_2 = arith.constant 0 : i32
    return %c0_i32, %c0_i32_0, %c0_i32_1 : i32, i32, i32
  }
  func.func @transform_11(%arg0: i32) -> (i32, i32, i32) {
    %c0_i32 = arith.constant 0 : i32
    %c0_i32_0 = arith.constant 0 : i32
    %c0_i32_1 = arith.constant 0 : i32
    %c0_i32_2 = arith.constant 0 : i32
    return %c0_i32, %c0_i32_0, %c0_i32_1 : i32, i32, i32
  }
  func.func @transform_12(%arg0: i32) -> (i32, i32, i32) {
    %c0_i32 = arith.constant 0 : i32
    %c0_i32_0 = arith.constant 0 : i32
    %c0_i32_1 = arith.constant 0 : i32
    %c0_i32_2 = arith.constant 0 : i32
    return %c0_i32, %c0_i32_0, %c0_i32_1 : i32, i32, i32
  }
  func.func @transform_13(%arg0: i32) -> (i32, i32, i32) {
    %c0_i32 = arith.constant 0 : i32
    %c0_i32_0 = arith.constant 0 : i32
    %c0_i32_1 = arith.constant 0 : i32
    %c0_i32_2 = arith.constant 0 : i32
    return %c0_i32, %c0_i32_0, %c0_i32_1 : i32, i32, i32
  }
  func.func @transform_14(%arg0: i32) -> (i32, i32, i32) {
    %c0_i32 = arith.constant 0 : i32
    %c0_i32_0 = arith.constant 0 : i32
    %c0_i32_1 = arith.constant 0 : i32
    %c0_i32_2 = arith.constant 0 : i32
    return %c0_i32, %c0_i32_0, %c0_i32_1 : i32, i32, i32
  }
  func.func @transform_15(%arg0: i32) -> (i32, i32, i32) {
    %c0_i32 = arith.constant 0 : i32
    %c0_i32_0 = arith.constant 0 : i32
    %c0_i32_1 = arith.constant 0 : i32
    %c0_i32_2 = arith.constant 0 : i32
    return %c0_i32, %c0_i32_0, %c0_i32_1 : i32, i32, i32
  }
  func.func @transform_16(%arg0: i32) -> (i32, i32) {
    %c0_i32 = arith.constant 0 : i32
    %c0_i32_0 = arith.constant 0 : i32
    %c0_i32_1 = arith.constant 0 : i32
    return %c0_i32, %c0_i32_0 : i32, i32
  }
}

</mosaic_0001>

<llo_original>
// kernel: gte_encode.1
$region0: #{gte_encode.1}
  #allocation0 [shape = 'u32[]', space=smem, size = 0x4, offset = 0x4, fixed_abs, tag = 'smem constant byte address 0x4 - core index']
  #allocation1 [shape = 'u32[144,128]{1,0:T(1,128)}', space=vmem, size = 0x12000, scoped, tag = 'internal scratch']
  %s0 = inlined_call_operand.vmem [shape: f32[16,32], index: 0, kind: input, shape index: {}]
  %s1 = inlined_call_operand.vmem [shape: f32[2,8], index: 1, kind: input, shape index: {}]
  %s2 = inlined_call_operand.vmem [shape: f32[1,32], index: 2, kind: input, shape index: {}]
  %s3 = inlined_call_operand.vmem [shape: f32[1,32], index: 3, kind: input, shape index: {}]
  %s4 = inlined_call_operand.vmem [shape: f32[2,32,96], index: 4, kind: input, shape index: {}]
  %s5 = inlined_call_operand.vmem [shape: f32[2,1,96], index: 5, kind: input, shape index: {}]
  %s6 = inlined_call_operand.vmem [shape: f32[2,32,32], index: 6, kind: input, shape index: {}]
  %s7 = inlined_call_operand.vmem [shape: f32[2,1,32], index: 7, kind: input, shape index: {}]
  %s8 = inlined_call_operand.vmem [shape: f32[2,1,32], index: 8, kind: input, shape index: {}]
  %s9 = inlined_call_operand.vmem [shape: f32[2,1,32], index: 9, kind: input, shape index: {}]
  %s10 = inlined_call_operand.vmem [shape: f32[2,32,64], index: 10, kind: input, shape index: {}]
  %s11 = inlined_call_operand.vmem [shape: f32[2,1,64], index: 11, kind: input, shape index: {}]
  %s12 = inlined_call_operand.vmem [shape: f32[2,64,32], index: 12, kind: input, shape index: {}]
  %s13 = inlined_call_operand.vmem [shape: f32[2,1,32], index: 13, kind: input, shape index: {}]
  %s14 = inlined_call_operand.vmem [shape: f32[2,1,32], index: 14, kind: input, shape index: {}]
  %s15 = inlined_call_operand.vmem [shape: f32[2,1,32], index: 15, kind: input, shape index: {}]
  %s16 = inlined_call_operand.hbm [shape: f32[2,32], index: 16, kind: output, shape index: {}]
  %s17 = sld [smem:[#allocation0]]
  $region74: #{gte_encode.1} parent=0
    _
  %s19 = ssub.s32 1, %s17
  %s20 = scalar_select 0, %s19, %s17
  $region1: #{gte_encode.1} parent=0
    #allocation2 [shape = 'u8[1024]{0}', space=vmem, size = 0x400, scoped, tag = 'output window, operand 0, single buffered']
    #allocation3 [shape = 's32[1]{0}', space=sflag, size = 0x4, scoped, tag = 'scoped memory for gte_encode.1']
    %21 = vsyncpa [#allocation3], 0
    // Predicated region
    $region2: #{gte_encode.1} parent=1 // pred_check
      _
    $region3: #{gte_encode.1} parent=1 // pred_check_branch
      %23 = sbr.rel (0) target = $region5
    $region4: #{gte_encode.1} parent=1 // pred_region
      _
    $region5: #{gte_encode.1} parent=1 // pred_fallthru
      _
    // Predicated region
    $region6: #{gte_encode.1} parent=1 // pred_check
      _
    $region7: #{gte_encode.1} parent=1 // pred_check_branch
      %25 = sbr.rel (0) target = $region9
    $region8: #{gte_encode.1} parent=1 // pred_region
      _
    $region9: #{gte_encode.1} parent=1 // pred_fallthru
      _
    // Predicated region
    $region10: #{gte_encode.1} parent=1 // pred_check
      _
    $region11: #{gte_encode.1} parent=1 // pred_check_branch
      %27 = sbr.rel (0) target = $region13
    $region12: #{gte_encode.1} parent=1 // pred_region
      _
    $region13: #{gte_encode.1} parent=1 // pred_fallthru
      _
    // Predicated region
    $region14: #{gte_encode.1} parent=1 // pred_check
      _
    $region15: #{gte_encode.1} parent=1 // pred_check_branch
      %29 = sbr.rel (0) target = $region17
    $region16: #{gte_encode.1} parent=1 // pred_region
      _
    $region17: #{gte_encode.1} parent=1 // pred_fallthru
      _
    // Predicated region
    $region18: #{gte_encode.1} parent=1 // pred_check
      _
    $region19: #{gte_encode.1} parent=1 // pred_check_branch
      %31 = sbr.rel (0) target = $region21
    $region20: #{gte_encode.1} parent=1 // pred_region
      _
    $region21: #{gte_encode.1} parent=1 // pred_fallthru
      _
    // Predicated region
    $region22: #{gte_encode.1} parent=1 // pred_check
      _
    $region23: #{gte_encode.1} parent=1 // pred_check_branch
      %33 = sbr.rel (0) target = $region25
    $region24: #{gte_encode.1} parent=1 // pred_region
      _
    $region25: #{gte_encode.1} parent=1 // pred_fallthru
      _
    // Predicated region
    $region26: #{gte_encode.1} parent=1 // pred_check
      _
    $region27: #{gte_encode.1} parent=1 // pred_check_branch
      %35 = sbr.rel (0) target = $region29
    $region28: #{gte_encode.1} parent=1 // pred_region
      _
    $region29: #{gte_encode.1} parent=1 // pred_fallthru
      _
    // Predicated region
    $region30: #{gte_encode.1} parent=1 // pred_check
      _
    $region31: #{gte_encode.1} parent=1 // pred_check_branch
      %37 = sbr.rel (0) target = $region33
    $region32: #{gte_encode.1} parent=1 // pred_region
      _
    $region33: #{gte_encode.1} parent=1 // pred_fallthru
      _
    // Predicated region
    $region34: #{gte_encode.1} parent=1 // pred_check
      _
    $region35: #{gte_encode.1} parent=1 // pred_check_branch
      %39 = sbr.rel (0) target = $region37
    $region36: #{gte_encode.1} parent=1 // pred_region
      _
    $region37: #{gte_encode.1} parent=1 // pred_fallthru
      _
    // Predicated region
    $region38: #{gte_encode.1} parent=1 // pred_check
      _
    $region39: #{gte_encode.1} parent=1 // pred_check_branch
      %41 = sbr.rel (0) target = $region41
    $region40: #{gte_encode.1} parent=1 // pred_region
      _
    $region41: #{gte_encode.1} parent=1 // pred_fallthru
      _
    // Predicated region
    $region42: #{gte_encode.1} parent=1 // pred_check
      _
    $region43: #{gte_encode.1} parent=1 // pred_check_branch
      %43 = sbr.rel (0) target = $region45
    $region44: #{gte_encode.1} parent=1 // pred_region
      _
    $region45: #{gte_encode.1} parent=1 // pred_fallthru
      _
    // Predicated region
    $region46: #{gte_encode.1} parent=1 // pred_check
      _
    $region47: #{gte_encode.1} parent=1 // pred_check_branch
      %45 = sbr.rel (0) target = $region49
    $region48: #{gte_encode.1} parent=1 // pred_region
      _
    $region49: #{gte_encode.1} parent=1 // pred_fallthru
      _
    // Predicated region
    $region50: #{gte_encode.1} parent=1 // pred_check
      _
    $region51: #{gte_encode.1} parent=1 // pred_check_branch
      %47 = sbr.rel (0) target = $region53
    $region52: #{gte_encode.1} parent=1 // pred_region
      _
    $region53: #{gte_encode.1} parent=1 // pred_fallthru
      _
    // Predicated region
    $region54: #{gte_encode.1} parent=1 // pred_check
      _
    $region55: #{gte_encode.1} parent=1 // pred_check_branch
      %49 = sbr.rel (0) target = $region57
    $region56: #{gte_encode.1} parent=1 // pred_region
      _
    $region57: #{gte_encode.1} parent=1 // pred_fallthru
      _
    // Predicated region
    $region58: #{gte_encode.1} parent=1 // pred_check
      _
    $region59: #{gte_encode.1} parent=1 // pred_check_branch
      %51 = sbr.rel (0) target = $region61
    $region60: #{gte_encode.1} parent=1 // pred_region
      _
    $region61: #{gte_encode.1} parent=1 // pred_fallthru
      _
    // Predicated region
    $region62: #{gte_encode.1} parent=1 // pred_check
      _
    $region63: #{gte_encode.1} parent=1 // pred_check_branch
      %53 = sbr.rel (0) target = $region65
    $region64: #{gte_encode.1} parent=1 // pred_region
      _
    $region65: #{gte_encode.1} parent=1 // pred_fallthru
      _
    %v55 = vld [vmem:[%s0] sm:$0xff]
    %v56 = vld [vmem:[%s0 + $0x8] sm:$0xff]
    %v57 = vld [vmem:[%s2] sm:$0x1]
    %v58 = vld [vmem:[%s3] sm:$0x1]
    %vm59 = vcmask 261120
    %v60 = vsel %vm59, %v55, 0.0
    %61 = vadd.xlane.f32.xlu0 %v60
    %v62 = vpop.xlane.xlu0 %61
    %v63 = vsel %vm59, %v56, 0.0
    %64 = vadd.xlane.f32.xlu0 %v63
    %v65 = vpop.xlane.xlu0 %64
    %v66 = vrcp.pop 32.0
    %v67 = vmul.f32 %v62, %v66
    %v68 = vmul.f32 %v65, %v66
    %v69 = vsub.f32 %v55, %v67
    %v70 = vsub.f32 %v56, %v68
    %v71 = vmul.f32 %v69, %v69
    %v72 = vmul.f32 %v70, %v70
    %v73 = vsel %vm59, %v71, 0.0
    %74 = vadd.xlane.f32.xlu0 %v73
    %v75 = vpop.xlane.xlu0 %74
    %v76 = vsel %vm59, %v72, 0.0
    %77 = vadd.xlane.f32.xlu0 %v76
    %v78 = vpop.xlane.xlu0 %77
    %v79 = vmul.f32 %v75, %v66
    %v80 = vmul.f32 %v78, %v66
    %v81 = vadd.f32 %v79, 1e-12
    %v82 = vadd.f32 %v80, 1e-12
    %v83 = vrsqrt.pop %v81
    %v84 = vrsqrt.pop %v82
    %v85 = vmul.f32 %v69, %v83
    %v86 = vmul.f32 %v70, %v84
    %v88 = vlaneseq
    %v89 = vshrl.u32 %v88, 7
    %v90 = vsub.s32 0, %v89
    %v91 = vrot.slane %v57, %v90
    %v93 = vmul.f32 %v85, %v91
    %v94 = vmul.f32 %v86, %v91
    %v96 = vlaneseq
    %v97 = vshrl.u32 %v96, 7
    %v98 = vsub.s32 0, %v97
    %v99 = vrot.slane %v58, %v98
    %v101 = vadd.f32 %v93, %v99
    %v102 = vadd.f32 %v94, %v99
    %v103 = vld [vmem:[%s1] sm:$0x3]
    %v104 = vsub.f32 1.0, %v103
    %v105 = vmul.f32 %v104, -1e+09
    %v106 = vld [vmem:[%s4] sm:$0xff]
    %v107 = vld [vmem:[%s4 + $0x8] sm:$0xff]
    %v108 = vld [vmem:[%s4 + $0x10] sm:$0xff]
    %v109 = vld [vmem:[%s4 + $0x18] sm:$0xff]
    %v110 = vpack.c.bf16 %v102, %v101
    %v111 = vpack.c.bf16 %v107, %v106
    %v112 = vpack.c.bf16 %v109, %v108
    %v113 = vld [vmem:[%s5] sm:$0x1]
    %v115 = vlaneseq
    %v116 = vshrl.u32 %v115, 7
    %v117 = vsub.s32 0, %v116
    %v118 = vrot.slane %v113, %v117
    %v121 = vsel %vm59, %v110, 0
    %123 = vmatprep.subr.bf16.mxu0 0
    %124 = vmatpush1.bf16.msra.mxu0 0
    %125 = vmatprep.subr.bf16.mxu0 0
    %126 = vmatpush1.bf16.msra.mxu0 0
    %127 = vmatprep.subr.bf16.mxu0 0
    %128 = vmatpush1.bf16.msra.mxu0 0
    %129 = vmatprep.subr.bf16.mxu0 0
    %130 = vmatpush1.bf16.msra.mxu0 0
    %131 = vmatprep.subr.bf16.mxu0 0
    %132 = vmatpush1.bf16.msra.mxu0 0
    %133 = vmatprep.subr.bf16.mxu0 0
    %134 = vmatpush1.bf16.msra.mxu0 0
    %135 = vmatprep.subr.bf16.mxu0 0
    %136 = vmatpush1.bf16.msra.mxu0 %v112
    %137 = vmatprep.subr.bf16.mxu0 0
    %138 = vmatpush1.bf16.msra.mxu0 %v111
    %139 = vmatprep.subr.bf16.mxu0 0
    %140 = vmatpush2.bf16.msra.mxu0 0
    %141 = vmatprep.subr.bf16.mxu0 0
    %142 = vmatpush2.bf16.msra.mxu0 0
    %143 = vmatprep.subr.bf16.mxu0 0
    %144 = vmatpush2.bf16.msra.mxu0 0
    %145 = vmatprep.subr.bf16.mxu0 0
    %146 = vmatpush2.bf16.msra.mxu0 0
    %147 = vmatprep.subr.bf16.mxu0 0
    %148 = vmatpush2.bf16.msra.mxu0 0
    %149 = vmatprep.subr.bf16.mxu0 0
    %150 = vmatpush2.bf16.msra.mxu0 0
    %151 = vmatprep.subr.bf16.mxu0 0
    %152 = vmatpush2.bf16.msra.mxu0 0
    %153 = vmatprep.subr.bf16.mxu0 0
    %154 = vmatpush2.bf16.msra.mxu0 0
    %155 = vmatprep.mubr.bf16.mxu0 0
    %156 = vmatmul.mubr.bf16.gmra.mxu0 %v121
    %v157 = vpop.f32.mrf.mxu0
    %v158 = vadd.f32 %v118, %v157
    %v159 = vpop.f32.mrf.mxu0
    %v160 = vpop.f32.mrf.mxu0
    %v161 = vadd.f32 %v118, %v160
    %v162 = vpop.f32.mrf.mxu0
    %163 = vdwg.mxu0
    %v164 = vmul.f32 %v158, 0.35355338
    %v165 = vmul.f32 %v161, 0.35355338
    %v166 = vpack.c.bf16 %v164, %v164
    %v167 = vpack.c.bf16 %v165, %v165
    %v168 = vpack.c.bf16 %v158, %v158
    %v169 = vpack.c.bf16 %v161, %v161
    %v172 = vunpack.c.l.s4 1966171168
    %v173 = vunpack.c.0.s8 %v172
    %v174 = vlaneseq
    %v175 = vshrl.u32 %v174, 7
    %v176 = vsub.s32 %v173, %v175
    %v177 = vrot.slane %v105, %v176
    %v178 = vcombine.high %v177, %v177
    %v180 = vunpack.c.l.s4 1966171168
    %v181 = vunpack.c.0.s8 %v180
    %v182 = vlaneseq
    %v183 = vshrl.u32 %v182, 7
    %v184 = vsub.s32 %v181, %v183
    %v185 = vrot.slane %v177, %v184
    %v187 = vunpack.c.l.s4 1966171168
    %v188 = vunpack.c.0.s8 %v187
    %v189 = vlaneseq
    %v190 = vshrl.u32 %v189, 7
    %v191 = vsub.s32 %v188, %v190
    %v192 = vrot.slane %v178, %v191
    %v193 = vlaneseq
    %v194 = vshrl.u32 %v193, 7
    %v195 = vsub.s32 0, %v194
    %v196 = vrot.slane %v185, %v195
    %v197 = vlaneseq
    %v198 = vshrl.u32 %v197, 7
    %v199 = vsub.s32 0, %v198
    %v200 = vrot.slane %v192, %v199
    %204 = vrot.lane.b32.xlu0 %v168, 96
    %v205 = vpop.permute.xlu0 %204
    %vm206 = vcmask 64512
    %v208 = vsel %vm206, %v166, 0
    %v211 = vsel %vm206, %v205, 0
    %213 = vmatprep.subr.bf16.mxu0 0
    %214 = vmatpush1.bf16.xpose.msra.mxu0 0
    %215 = vmatprep.subr.bf16.mxu0 0
    %216 = vmatpush1.bf16.xpose.msra.mxu0 0
    %217 = vmatprep.subr.bf16.mxu0 0
    %218 = vmatpush1.bf16.xpose.msra.mxu0 0
    %219 = vmatprep.subr.bf16.mxu0 0
    %220 = vmatpush1.bf16.xpose.msra.mxu0 0
    %221 = vmatprep.subr.bf16.mxu0 0
    %222 = vmatpush1.bf16.xpose.msra.mxu0 0
    %223 = vmatprep.subr.bf16.mxu0 0
    %224 = vmatpush1.bf16.xpose.msra.mxu0 0
    %225 = vmatprep.subr.bf16.mxu0 0
    %226 = vmatpush1.bf16.xpose.msra.mxu0 0
    %227 = vmatprep.subr.bf16.mxu0 0
    %228 = vmatpush1.bf16.xpose.msra.mxu0 %v211
    %229 = vmatprep.subr.bf16.mxu0 0
    %230 = vmatpush2.bf16.xpose.msra.mxu0 0
    %231 = vmatprep.subr.bf16.mxu0 0
    %232 = vmatpush2.bf16.xpose.msra.mxu0 0
    %233 = vmatprep.subr.bf16.mxu0 0
    %234 = vmatpush2.bf16.xpose.msra.mxu0 0
    %235 = vmatprep.subr.bf16.mxu0 0
    %236 = vmatpush2.bf16.xpose.msra.mxu0 0
    %237 = vmatprep.subr.bf16.mxu0 0
    %238 = vmatpush2.bf16.xpose.msra.mxu0 0
    %239 = vmatprep.subr.bf16.mxu0 0
    %240 = vmatpush2.bf16.xpose.msra.mxu0 0
    %241 = vmatprep.subr.bf16.mxu0 0
    %242 = vmatpush2.bf16.xpose.msra.mxu0 0
    %243 = vmatprep.subr.bf16.mxu0 0
    %244 = vmatpush2.bf16.xpose.msra.mxu0 0
    %245 = vmatprep.mubr.bf16.mxu0 0
    %246 = vmatmul.mubr.bf16.gmra.mxu0 %v208
    %v247 = vpop.f32.mrf.mxu0
    %v248 = vadd.f32 %v196, %v247
    %v249 = vpop.f32.mrf.mxu0
    %v250 = vpop.f32.mrf.mxu0
    %v251 = vpop.f32.mrf.mxu0
    %252 = vdwg.mxu0
    %254 = vrot.lane.b32.xlu0 %v169, 96
    %v255 = vpop.permute.xlu0 %254
    %v257 = vsel %vm206, %v167, 0
    %v260 = vsel %vm206, %v255, 0
    %262 = vmatprep.subr.bf16.mxu0 0
    %263 = vmatpush1.bf16.xpose.msra.mxu0 0
    %264 = vmatprep.subr.bf16.mxu0 0
    %265 = vmatpush1.bf16.xpose.msra.mxu0 0
    %266 = vmatprep.subr.bf16.mxu0 0
    %267 = vmatpush1.bf16.xpose.msra.mxu0 0
    %268 = vmatprep.subr.bf16.mxu0 0
    %269 = vmatpush1.bf16.xpose.msra.mxu0 0
    %270 = vmatprep.subr.bf16.mxu0 0
    %271 = vmatpush1.bf16.xpose.msra.mxu0 0
    %272 = vmatprep.subr.bf16.mxu0 0
    %273 = vmatpush1.bf16.xpose.msra.mxu0 0
    %274 = vmatprep.subr.bf16.mxu0 0
    %275 = vmatpush1.bf16.xpose.msra.mxu0 0
    %276 = vmatprep.subr.bf16.mxu0 0
    %277 = vmatpush1.bf16.xpose.msra.mxu0 %v260
    %278 = vmatprep.subr.bf16.mxu0 0
    %279 = vmatpush2.bf16.xpose.msra.mxu0 0
    %280 = vmatprep.subr.bf16.mxu0 0
    %281 = vmatpush2.bf16.xpose.msra.mxu0 0
    %282 = vmatprep.subr.bf16.mxu0 0
    %283 = vmatpush2.bf16.xpose.msra.mxu0 0
    %284 = vmatprep.subr.bf16.mxu0 0
    %285 = vmatpush2.bf16.xpose.msra.mxu0 0
    %286 = vmatprep.subr.bf16.mxu0 0
    %287 = vmatpush2.bf16.xpose.msra.mxu0 0
    %288 = vmatprep.subr.bf16.mxu0 0
    %289 = vmatpush2.bf16.xpose.msra.mxu0 0
    %290 = vmatprep.subr.bf16.mxu0 0
    %291 = vmatpush2.bf16.xpose.msra.mxu0 0
    %292 = vmatprep.subr.bf16.mxu0 0
    %293 = vmatpush2.bf16.xpose.msra.mxu0 0
    %294 = vmatprep.mubr.bf16.mxu0 0
    %295 = vmatmul.mubr.bf16.gmra.mxu0 %v257
    %v296 = vpop.f32.mrf.mxu0
    %v297 = vadd.f32 %v200, %v296
    %v298 = vpop.f32.mrf.mxu0
    %v299 = vpop.f32.mrf.mxu0
    %v300 = vpop.f32.mrf.mxu0
    %301 = vdwg.mxu0
    %v302 = vsel %vm206, %v248, -inf
    %303 = vmax.xlane.f32.xlu0 %v302
    %v304 = vpop.xlane.xlu0 %303
    %v305 = vsel %vm206, %v297, -inf
    %306 = vmax.xlane.f32.xlu0 %v305
    %v307 = vpop.xlane.xlu0 %306
    %v308 = vsub.f32 %v248, %v304
    %v309 = vsub.f32 %v297, %v307
    %v310 = vmul.f32 %v308, 1.442695
    %v311 = vpow.pop %v310
    %v312 = vmul.f32 %v309, 1.442695
    %v313 = vpow.pop %v312
    %v314 = vsel %vm206, %v311, 0.0
    %315 = vadd.xlane.f32.xlu0 %v314
    %v316 = vpop.xlane.xlu0 %315
    %v317 = vsel %vm206, %v313, 0.0
    %318 = vadd.xlane.f32.xlu0 %v317
    %v319 = vpop.xlane.xlu0 %318
    %v320 = vrcp.pop %v316
    %v321 = vrcp.pop %v319
    %v322 = vmul.f32 %v311, %v320
    %v323 = vmul.f32 %v313, %v321
    %v324 = vpack.c.bf16 %v322, %v322
    %v325 = vpack.c.bf16 %v323, %v323
    %326 = vrot.lane.b32.xlu0 %v168, 64
    %v327 = vpop.permute.xlu0 %326
    %v329 = vsel %vm206, %v324, 0
    %vm331 = vcmask 1043456
    %v333 = vsel %vm331, %v327, 0
    %335 = vmatprep.subr.bf16.mxu0 0
    %336 = vmatpush1.bf16.msra.mxu0 0
    %337 = vmatprep.subr.bf16.mxu0 0
    %338 = vmatpush1.bf16.msra.mxu0 0
    %339 = vmatprep.subr.bf16.mxu0 0
    %340 = vmatpush1.bf16.msra.mxu0 0
    %341 = vmatprep.subr.bf16.mxu0 0
    %342 = vmatpush1.bf16.msra.mxu0 0
    %343 = vmatprep.subr.bf16.mxu0 0
    %344 = vmatpush1.bf16.msra.mxu0 0
    %345 = vmatprep.subr.bf16.mxu0 0
    %346 = vmatpush1.bf16.msra.mxu0 0
    %347 = vmatprep.subr.bf16.mxu0 0
    %348 = vmatpush1.bf16.msra.mxu0 0
    %349 = vmatprep.subr.bf16.mxu0 0
    %350 = vmatpush1.bf16.msra.mxu0 %v333
    %351 = vmatprep.subr.bf16.mxu0 0
    %352 = vmatpush2.bf16.msra.mxu0 0
    %353 = vmatprep.subr.bf16.mxu0 0
    %354 = vmatpush2.bf16.msra.mxu0 0
    %355 = vmatprep.subr.bf16.mxu0 0
    %356 = vmatpush2.bf16.msra.mxu0 0
    %357 = vmatprep.subr.bf16.mxu0 0
    %358 = vmatpush2.bf16.msra.mxu0 0
    %359 = vmatprep.subr.bf16.mxu0 0
    %360 = vmatpush2.bf16.msra.mxu0 0
    %361 = vmatprep.subr.bf16.mxu0 0
    %362 = vmatpush2.bf16.msra.mxu0 0
    %363 = vmatprep.subr.bf16.mxu0 0
    %364 = vmatpush2.bf16.msra.mxu0 0
    %365 = vmatprep.subr.bf16.mxu0 0
    %366 = vmatpush2.bf16.msra.mxu0 0
    %367 = vmatprep.mubr.bf16.mxu0 0
    %368 = vmatmul.mubr.bf16.gmra.mxu0 %v329
    %v369 = vpop.f32.mrf.mxu0
    %v370 = vadd.f32 0.0, %v369
    %v371 = vpop.f32.mrf.mxu0
    %v372 = vpop.f32.mrf.mxu0
    %v373 = vpop.f32.mrf.mxu0
    %374 = vdwg.mxu0
    %375 = vrot.lane.b32.xlu0 %v169, 64
    %v376 = vpop.permute.xlu0 %375
    %v378 = vsel %vm206, %v325, 0
    %v381 = vsel %vm331, %v376, 0
    %383 = vmatprep.subr.bf16.mxu0 0
    %384 = vmatpush1.bf16.msra.mxu0 0
    %385 = vmatprep.subr.bf16.mxu0 0
    %386 = vmatpush1.bf16.msra.mxu0 0
    %387 = vmatprep.subr.bf16.mxu0 0
    %388 = vmatpush1.bf16.msra.mxu0 0
    %389 = vmatprep.subr.bf16.mxu0 0
    %390 = vmatpush1.bf16.msra.mxu0 0
    %391 = vmatprep.subr.bf16.mxu0 0
    %392 = vmatpush1.bf16.msra.mxu0 0
    %393 = vmatprep.subr.bf16.mxu0 0
    %394 = vmatpush1.bf16.msra.mxu0 0
    %395 = vmatprep.subr.bf16.mxu0 0
    %396 = vmatpush1.bf16.msra.mxu0 0
    %397 = vmatprep.subr.bf16.mxu0 0
    %398 = vmatpush1.bf16.msra.mxu0 %v381
    %399 = vmatprep.subr.bf16.mxu0 0
    %400 = vmatpush2.bf16.msra.mxu0 0
    %401 = vmatprep.subr.bf16.mxu0 0
    %402 = vmatpush2.bf16.msra.mxu0 0
    %403 = vmatprep.subr.bf16.mxu0 0
    %404 = vmatpush2.bf16.msra.mxu0 0
    %405 = vmatprep.subr.bf16.mxu0 0
    %406 = vmatpush2.bf16.msra.mxu0 0
    %407 = vmatprep.subr.bf16.mxu0 0
    %408 = vmatpush2.bf16.msra.mxu0 0
    %409 = vmatprep.subr.bf16.mxu0 0
    %410 = vmatpush2.bf16.msra.mxu0 0
    %411 = vmatprep.subr.bf16.mxu0 0
    %412 = vmatpush2.bf16.msra.mxu0 0
    %413 = vmatprep.subr.bf16.mxu0 0
    %414 = vmatpush2.bf16.msra.mxu0 0
    %415 = vmatprep.mubr.bf16.mxu0 0
    %416 = vmatmul.mubr.bf16.gmra.mxu0 %v378
    %v417 = vpop.f32.mrf.mxu0
    %v418 = vadd.f32 0.0, %v417
    %v419 = vpop.f32.mrf.mxu0
    %v420 = vpop.f32.mrf.mxu0
    %v421 = vpop.f32.mrf.mxu0
    %422 = vdwg.mxu0
    %424 = vrot.lane.b32.xlu0 %v166, 120
    %v425 = vpop.permute.xlu0 %424
    %426 = vrot.lane.b32.xlu0 %v168, 88
    %v427 = vpop.permute.xlu0 %426
    %v429 = vsel %vm206, %v425, 0
    %v432 = vsel %vm206, %v427, 0
    %434 = vmatprep.subr.bf16.mxu0 0
    %435 = vmatpush1.bf16.xpose.msra.mxu0 0
    %436 = vmatprep.subr.bf16.mxu0 0
    %437 = vmatpush1.bf16.xpose.msra.mxu0 0
    %438 = vmatprep.subr.bf16.mxu0 0
    %439 = vmatpush1.bf16.xpose.msra.mxu0 0
    %440 = vmatprep.subr.bf16.mxu0 0
    %441 = vmatpush1.bf16.xpose.msra.mxu0 0
    %442 = vmatprep.subr.bf16.mxu0 0
    %443 = vmatpush1.bf16.xpose.msra.mxu0 0
    %444 = vmatprep.subr.bf16.mxu0 0
    %445 = vmatpush1.bf16.xpose.msra.mxu0 0
    %446 = vmatprep.subr.bf16.mxu0 0
    %447 = vmatpush1.bf16.xpose.msra.mxu0 0
    %448 = vmatprep.subr.bf16.mxu0 0
    %449 = vmatpush1.bf16.xpose.msra.mxu0 %v432
    %450 = vmatprep.subr.bf16.mxu0 0
    %451 = vmatpush2.bf16.xpose.msra.mxu0 0
    %452 = vmatprep.subr.bf16.mxu0 0
    %453 = vmatpush2.bf16.xpose.msra.mxu0 0
    %454 = vmatprep.subr.bf16.mxu0 0
    %455 = vmatpush2.bf16.xpose.msra.mxu0 0
    %456 = vmatprep.subr.bf16.mxu0 0
    %457 = vmatpush2.bf16.xpose.msra.mxu0 0
    %458 = vmatprep.subr.bf16.mxu0 0
    %459 = vmatpush2.bf16.xpose.msra.mxu0 0
    %460 = vmatprep.subr.bf16.mxu0 0
    %461 = vmatpush2.bf16.xpose.msra.mxu0 0
    %462 = vmatprep.subr.bf16.mxu0 0
    %463 = vmatpush2.bf16.xpose.msra.mxu0 0
    %464 = vmatprep.subr.bf16.mxu0 0
    %465 = vmatpush2.bf16.xpose.msra.mxu0 0
    %466 = vmatprep.mubr.bf16.mxu0 0
    %467 = vmatmul.mubr.bf16.gmra.mxu0 %v429
    %v468 = vpop.f32.mrf.mxu0
    %v469 = vadd.f32 %v196, %v468
    %v470 = vpop.f32.mrf.mxu0
    %v471 = vpop.f32.mrf.mxu0
    %v472 = vpop.f32.mrf.mxu0
    %473 = vdwg.mxu0
    %475 = vrot.lane.b32.xlu0 %v167, 120
    %v476 = vpop.permute.xlu0 %475
    %477 = vrot.lane.b32.xlu0 %v169, 88
    %v478 = vpop.permute.xlu0 %477
    %v480 = vsel %vm206, %v476, 0
    %v483 = vsel %vm206, %v478, 0
    %485 = vmatprep.subr.bf16.mxu0 0
    %486 = vmatpush1.bf16.xpose.msra.mxu0 0
    %487 = vmatprep.subr.bf16.mxu0 0
    %488 = vmatpush1.bf16.xpose.msra.mxu0 0
    %489 = vmatprep.subr.bf16.mxu0 0
    %490 = vmatpush1.bf16.xpose.msra.mxu0 0
    %491 = vmatprep.subr.bf16.mxu0 0
    %492 = vmatpush1.bf16.xpose.msra.mxu0 0
    %493 = vmatprep.subr.bf16.mxu0 0
    %494 = vmatpush1.bf16.xpose.msra.mxu0 0
    %495 = vmatprep.subr.bf16.mxu0 0
    %496 = vmatpush1.bf16.xpose.msra.mxu0 0
    %497 = vmatprep.subr.bf16.mxu0 0
    %498 = vmatpush1.bf16.xpose.msra.mxu0 0
    %499 = vmatprep.subr.bf16.mxu0 0
    %500 = vmatpush1.bf16.xpose.msra.mxu0 %v483
    %501 = vmatprep.subr.bf16.mxu0 0
    %502 = vmatpush2.bf16.xpose.msra.mxu0 0
    %503 = vmatprep.subr.bf16.mxu0 0
    %504 = vmatpush2.bf16.xpose.msra.mxu0 0
    %505 = vmatprep.subr.bf16.mxu0 0
    %506 = vmatpush2.bf16.xpose.msra.mxu0 0
    %507 = vmatprep.subr.bf16.mxu0 0
    %508 = vmatpush2.bf16.xpose.msra.mxu0 0
    %509 = vmatprep.subr.bf16.mxu0 0
    %510 = vmatpush2.bf16.xpose.msra.mxu0 0
    %511 = vmatprep.subr.bf16.mxu0 0
    %512 = vmatpush2.bf16.xpose.msra.mxu0 0
    %513 = vmatprep.subr.bf16.mxu0 0
    %514 = vmatpush2.bf16.xpose.msra.mxu0 0
    %515 = vmatprep.subr.bf16.mxu0 0
    %516 = vmatpush2.bf16.xpose.msra.mxu0 0
    %517 = vmatprep.mubr.bf16.mxu0 0
    %518 = vmatmul.mubr.bf16.gmra.mxu0 %v480
    %v519 = vpop.f32.mrf.mxu0
    %v520 = vadd.f32 %v200, %v519
    %v521 = vpop.f32.mrf.mxu0
    %v522 = vpop.f32.mrf.mxu0
    %v523 = vpop.f32.mrf.mxu0
    %524 = vdwg.mxu0
    %v525 = vsel %vm206, %v469, -inf
    %526 = vmax.xlane.f32.xlu0 %v525
    %v527 = vpop.xlane.xlu0 %526
    %v528 = vsel %vm206, %v520, -inf
    %529 = vmax.xlane.f32.xlu0 %v528
    %v530 = vpop.xlane.xlu0 %529
    %v531 = vsub.f32 %v469, %v527
    %v532 = vsub.f32 %v520, %v530
    %v533 = vmul.f32 %v531, 1.442695
    %v534 = vpow.pop %v533
    %v535 = vmul.f32 %v532, 1.442695
    %v536 = vpow.pop %v535
    %v537 = vsel %vm206, %v534, 0.0
    %538 = vadd.xlane.f32.xlu0 %v537
    %v539 = vpop.xlane.xlu0 %538
    %v540 = vsel %vm206, %v536, 0.0
    %541 = vadd.xlane.f32.xlu0 %v540
    %v542 = vpop.xlane.xlu0 %541
    %v543 = vrcp.pop %v539
    %v544 = vrcp.pop %v542
    %v545 = vmul.f32 %v534, %v543
    %v546 = vmul.f32 %v536, %v544
    %v547 = vpack.c.bf16 %v545, %v545
    %v548 = vpack.c.bf16 %v546, %v546
    %549 = vrot.lane.b32.xlu0 %v168, 56
    %v550 = vpop.permute.xlu0 %549
    %v552 = vsel %vm206, %v547, 0
    %v555 = vsel %vm331, %v550, 0
    %557 = vmatprep.subr.bf16.mxu0 0
    %558 = vmatpush1.bf16.msra.mxu0 0
    %559 = vmatprep.subr.bf16.mxu0 0
    %560 = vmatpush1.bf16.msra.mxu0 0
    %561 = vmatprep.subr.bf16.mxu0 0
    %562 = vmatpush1.bf16.msra.mxu0 0
    %563 = vmatprep.subr.bf16.mxu0 0
    %564 = vmatpush1.bf16.msra.mxu0 0
    %565 = vmatprep.subr.bf16.mxu0 0
    %566 = vmatpush1.bf16.msra.mxu0 0
    %567 = vmatprep.subr.bf16.mxu0 0
    %568 = vmatpush1.bf16.msra.mxu0 0
    %569 = vmatprep.subr.bf16.mxu0 0
    %570 = vmatpush1.bf16.msra.mxu0 0
    %571 = vmatprep.subr.bf16.mxu0 0
    %572 = vmatpush1.bf16.msra.mxu0 %v555
    %573 = vmatprep.subr.bf16.mxu0 0
    %574 = vmatpush2.bf16.msra.mxu0 0
    %575 = vmatprep.subr.bf16.mxu0 0
    %576 = vmatpush2.bf16.msra.mxu0 0
    %577 = vmatprep.subr.bf16.mxu0 0
    %578 = vmatpush2.bf16.msra.mxu0 0
    %579 = vmatprep.subr.bf16.mxu0 0
    %580 = vmatpush2.bf16.msra.mxu0 0
    %581 = vmatprep.subr.bf16.mxu0 0
    %582 = vmatpush2.bf16.msra.mxu0 0
    %583 = vmatprep.subr.bf16.mxu0 0
    %584 = vmatpush2.bf16.msra.mxu0 0
    %585 = vmatprep.subr.bf16.mxu0 0
    %586 = vmatpush2.bf16.msra.mxu0 0
    %587 = vmatprep.subr.bf16.mxu0 0
    %588 = vmatpush2.bf16.msra.mxu0 0
    %589 = vmatprep.mubr.bf16.mxu0 0
    %590 = vmatmul.mubr.bf16.gmra.mxu0 %v552
    %v591 = vpop.f32.mrf.mxu0
    %v592 = vadd.f32 0.0, %v591
    %v593 = vpop.f32.mrf.mxu0
    %v594 = vpop.f32.mrf.mxu0
    %v595 = vpop.f32.mrf.mxu0
    %596 = vdwg.mxu0
    %597 = vrot.lane.b32.xlu0 %v169, 56
    %v598 = vpop.permute.xlu0 %597
    %v600 = vsel %vm206, %v548, 0
    %v603 = vsel %vm331, %v598, 0
    %605 = vmatprep.subr.bf16.mxu0 0
    %606 = vmatpush1.bf16.msra.mxu0 0
    %607 = vmatprep.subr.bf16.mxu0 0
    %608 = vmatpush1.bf16.msra.mxu0 0
    %609 = vmatprep.subr.bf16.mxu0 0
    %610 = vmatpush1.bf16.msra.mxu0 0
    %611 = vmatprep.subr.bf16.mxu0 0
    %612 = vmatpush1.bf16.msra.mxu0 0
    %613 = vmatprep.subr.bf16.mxu0 0
    %614 = vmatpush1.bf16.msra.mxu0 0
    %615 = vmatprep.subr.bf16.mxu0 0
    %616 = vmatpush1.bf16.msra.mxu0 0
    %617 = vmatprep.subr.bf16.mxu0 0
    %618 = vmatpush1.bf16.msra.mxu0 0
    %619 = vmatprep.subr.bf16.mxu0 0
    %620 = vmatpush1.bf16.msra.mxu0 %v603
    %621 = vmatprep.subr.bf16.mxu0 0
    %622 = vmatpush2.bf16.msra.mxu0 0
    %623 = vmatprep.subr.bf16.mxu0 0
    %624 = vmatpush2.bf16.msra.mxu0 0
    %625 = vmatprep.subr.bf16.mxu0 0
    %626 = vmatpush2.bf16.msra.mxu0 0
    %627 = vmatprep.subr.bf16.mxu0 0
    %628 = vmatpush2.bf16.msra.mxu0 0
    %629 = vmatprep.subr.bf16.mxu0 0
    %630 = vmatpush2.bf16.msra.mxu0 0
    %631 = vmatprep.subr.bf16.mxu0 0
    %632 = vmatpush2.bf16.msra.mxu0 0
    %633 = vmatprep.subr.bf16.mxu0 0
    %634 = vmatpush2.bf16.msra.mxu0 0
    %635 = vmatprep.subr.bf16.mxu0 0
    %636 = vmatpush2.bf16.msra.mxu0 0
    %637 = vmatprep.mubr.bf16.mxu0 0
    %638 = vmatmul.mubr.bf16.gmra.mxu0 %v600
    %v639 = vpop.f32.mrf.mxu0
    %v640 = vadd.f32 0.0, %v639
    %v641 = vpop.f32.mrf.mxu0
    %v642 = vpop.f32.mrf.mxu0
    %v643 = vpop.f32.mrf.mxu0
    %644 = vdwg.mxu0
    %645 = vrot.lane.b32.xlu0 %v166, 112
    %v646 = vpop.permute.xlu0 %645
    %647 = vrot.lane.b32.xlu0 %v168, 80
    %v648 = vpop.permute.xlu0 %647
    %v650 = vsel %vm206, %v646, 0
    %v653 = vsel %vm206, %v648, 0
    %655 = vmatprep.subr.bf16.mxu0 0
    %656 = vmatpush1.bf16.xpose.msra.mxu0 0
    %657 = vmatprep.subr.bf16.mxu0 0
    %658 = vmatpush1.bf16.xpose.msra.mxu0 0
    %659 = vmatprep.subr.bf16.mxu0 0
    %660 = vmatpush1.bf16.xpose.msra.mxu0 0
    %661 = vmatprep.subr.bf16.mxu0 0
    %662 = vmatpush1.bf16.xpose.msra.mxu0 0
    %663 = vmatprep.subr.bf16.mxu0 0
    %664 = vmatpush1.bf16.xpose.msra.mxu0 0
    %665 = vmatprep.subr.bf16.mxu0 0
    %666 = vmatpush1.bf16.xpose.msra.mxu0 0
    %667 = vmatprep.subr.bf16.mxu0 0
    %668 = vmatpush1.bf16.xpose.msra.mxu0 0
    %669 = vmatprep.subr.bf16.mxu0 0
    %670 = vmatpush1.bf16.xpose.msra.mxu0 %v653
    %671 = vmatprep.subr.bf16.mxu0 0
    %672 = vmatpush2.bf16.xpose.msra.mxu0 0
    %673 = vmatprep.subr.bf16.mxu0 0
    %674 = vmatpush2.bf16.xpose.msra.mxu0 0
    %675 = vmatprep.subr.bf16.mxu0 0
    %676 = vmatpush2.bf16.xpose.msra.mxu0 0
    %677 = vmatprep.subr.bf16.mxu0 0
    %678 = vmatpush2.bf16.xpose.msra.mxu0 0
    %679 = vmatprep.subr.bf16.mxu0 0
    %680 = vmatpush2.bf16.xpose.msra.mxu0 0
    %681 = vmatprep.subr.bf16.mxu0 0
    %682 = vmatpush2.bf16.xpose.msra.mxu0 0
    %683 = vmatprep.subr.bf16.mxu0 0
    %684 = vmatpush2.bf16.xpose.msra.mxu0 0
    %685 = vmatprep.subr.bf16.mxu0 0
    %686 = vmatpush2.bf16.xpose.msra.mxu0 0
    %687 = vmatprep.mubr.bf16.mxu0 0
    %688 = vmatmul.mubr.bf16.gmra.mxu0 %v650
    %v689 = vpop.f32.mrf.mxu0
    %v690 = vadd.f32 %v196, %v689
    %v691 = vpop.f32.mrf.mxu0
    %v692 = vpop.f32.mrf.mxu0
    %v693 = vpop.f32.mrf.mxu0
    %694 = vdwg.mxu0
    %695 = vrot.lane.b32.xlu0 %v167, 112
    %v696 = vpop.permute.xlu0 %695
    %697 = vrot.lane.b32.xlu0 %v169, 80
    %v698 = vpop.permute.xlu0 %697
    %v700 = vsel %vm206, %v696, 0
    %v703 = vsel %vm206, %v698, 0
    %705 = vmatprep.subr.bf16.mxu0 0
    %706 = vmatpush1.bf16.xpose.msra.mxu0 0
    %707 = vmatprep.subr.bf16.mxu0 0
    %708 = vmatpush1.bf16.xpose.msra.mxu0 0
    %709 = vmatprep.subr.bf16.mxu0 0
    %710 = vmatpush1.bf16.xpose.msra.mxu0 0
    %711 = vmatprep.subr.bf16.mxu0 0
    %712 = vmatpush1.bf16.xpose.msra.mxu0 0
    %713 = vmatprep.subr.bf16.mxu0 0
    %714 = vmatpush1.bf16.xpose.msra.mxu0 0
    %715 = vmatprep.subr.bf16.mxu0 0
    %716 = vmatpush1.bf16.xpose.msra.mxu0 0
    %717 = vmatprep.subr.bf16.mxu0 0
    %718 = vmatpush1.bf16.xpose.msra.mxu0 0
    %719 = vmatprep.subr.bf16.mxu0 0
    %720 = vmatpush1.bf16.xpose.msra.mxu0 %v703
    %721 = vmatprep.subr.bf16.mxu0 0
    %722 = vmatpush2.bf16.xpose.msra.mxu0 0
    %723 = vmatprep.subr.bf16.mxu0 0
    %724 = vmatpush2.bf16.xpose.msra.mxu0 0
    %725 = vmatprep.subr.bf16.mxu0 0
    %726 = vmatpush2.bf16.xpose.msra.mxu0 0
    %727 = vmatprep.subr.bf16.mxu0 0
    %728 = vmatpush2.bf16.xpose.msra.mxu0 0
    %729 = vmatprep.subr.bf16.mxu0 0
    %730 = vmatpush2.bf16.xpose.msra.mxu0 0
    %731 = vmatprep.subr.bf16.mxu0 0
    %732 = vmatpush2.bf16.xpose.msra.mxu0 0
    %733 = vmatprep.subr.bf16.mxu0 0
    %734 = vmatpush2.bf16.xpose.msra.mxu0 0
    %735 = vmatprep.subr.bf16.mxu0 0
    %736 = vmatpush2.bf16.xpose.msra.mxu0 0
    %737 = vmatprep.mubr.bf16.mxu0 0
    %738 = vmatmul.mubr.bf16.gmra.mxu0 %v700
    %v739 = vpop.f32.mrf.mxu0
    %v740 = vadd.f32 %v200, %v739
    %v741 = vpop.f32.mrf.mxu0
    %v742 = vpop.f32.mrf.mxu0
    %v743 = vpop.f32.mrf.mxu0
    %744 = vdwg.mxu0
    %v745 = vsel %vm206, %v690, -inf
    %746 = vmax.xlane.f32.xlu0 %v745
    %v747 = vpop.xlane.xlu0 %746
    %v748 = vsel %vm206, %v740, -inf
    %749 = vmax.xlane.f32.xlu0 %v748
    %v750 = vpop.xlane.xlu0 %749
    %v751 = vsub.f32 %v690, %v747
    %v752 = vsub.f32 %v740, %v750
    %v753 = vmul.f32 %v751, 1.442695
    %v754 = vpow.pop %v753
    %v755 = vmul.f32 %v752, 1.442695
    %v756 = vpow.pop %v755
    %v757 = vsel %vm206, %v754, 0.0
    %758 = vadd.xlane.f32.xlu0 %v757
    %v759 = vpop.xlane.xlu0 %758
    %v760 = vsel %vm206, %v756, 0.0
    %761 = vadd.xlane.f32.xlu0 %v760
    %v762 = vpop.xlane.xlu0 %761
    %v763 = vrcp.pop %v759
    %v764 = vrcp.pop %v762
    %v765 = vmul.f32 %v754, %v763
    %v766 = vmul.f32 %v756, %v764
    %v767 = vpack.c.bf16 %v765, %v765
    %v768 = vpack.c.bf16 %v766, %v766
    %769 = vrot.lane.b32.xlu0 %v168, 48
    %v770 = vpop.permute.xlu0 %769
    %v772 = vsel %vm206, %v767, 0
    %v775 = vsel %vm331, %v770, 0
    %777 = vmatprep.subr.bf16.mxu0 0
    %778 = vmatpush1.bf16.msra.mxu0 0
    %779 = vmatprep.subr.bf16.mxu0 0
    %780 = vmatpush1.bf16.msra.mxu0 0
    %781 = vmatprep.subr.bf16.mxu0 0
    %782 = vmatpush1.bf16.msra.mxu0 0
    %783 = vmatprep.subr.bf16.mxu0 0
    %784 = vmatpush1.bf16.msra.mxu0 0
    %785 = vmatprep.subr.bf16.mxu0 0
    %786 = vmatpush1.bf16.msra.mxu0 0
    %787 = vmatprep.subr.bf16.mxu0 0
    %788 = vmatpush1.bf16.msra.mxu0 0
    %789 = vmatprep.subr.bf16.mxu0 0
    %790 = vmatpush1.bf16.msra.mxu0 0
    %791 = vmatprep.subr.bf16.mxu0 0
    %792 = vmatpush1.bf16.msra.mxu0 %v775
    %793 = vmatprep.subr.bf16.mxu0 0
    %794 = vmatpush2.bf16.msra.mxu0 0
    %795 = vmatprep.subr.bf16.mxu0 0
    %796 = vmatpush2.bf16.msra.mxu0 0
    %797 = vmatprep.subr.bf16.mxu0 0
    %798 = vmatpush2.bf16.msra.mxu0 0
    %799 = vmatprep.subr.bf16.mxu0 0
    %800 = vmatpush2.bf16.msra.mxu0 0
    %801 = vmatprep.subr.bf16.mxu0 0
    %802 = vmatpush2.bf16.msra.mxu0 0
    %803 = vmatprep.subr.bf16.mxu0 0
    %804 = vmatpush2.bf16.msra.mxu0 0
    %805 = vmatprep.subr.bf16.mxu0 0
    %806 = vmatpush2.bf16.msra.mxu0 0
    %807 = vmatprep.subr.bf16.mxu0 0
    %808 = vmatpush2.bf16.msra.mxu0 0
    %809 = vmatprep.mubr.bf16.mxu0 0
    %810 = vmatmul.mubr.bf16.gmra.mxu0 %v772
    %v811 = vpop.f32.mrf.mxu0
    %v812 = vadd.f32 0.0, %v811
    %v813 = vpop.f32.mrf.mxu0
    %v814 = vpop.f32.mrf.mxu0
    %v815 = vpop.f32.mrf.mxu0
    %816 = vdwg.mxu0
    %817 = vrot.lane.b32.xlu0 %v169, 48
    %v818 = vpop.permute.xlu0 %817
    %v820 = vsel %vm206, %v768, 0
    %v823 = vsel %vm331, %v818, 0
    %825 = vmatprep.subr.bf16.mxu0 0
    %826 = vmatpush1.bf16.msra.mxu0 0
    %827 = vmatprep.subr.bf16.mxu0 0
    %828 = vmatpush1.bf16.msra.mxu0 0
    %829 = vmatprep.subr.bf16.mxu0 0
    %830 = vmatpush1.bf16.msra.mxu0 0
    %831 = vmatprep.subr.bf16.mxu0 0
    %832 = vmatpush1.bf16.msra.mxu0 0
    %833 = vmatprep.subr.bf16.mxu0 0
    %834 = vmatpush1.bf16.msra.mxu0 0
    %835 = vmatprep.subr.bf16.mxu0 0
    %836 = vmatpush1.bf16.msra.mxu0 0
    %837 = vmatprep.subr.bf16.mxu0 0
    %838 = vmatpush1.bf16.msra.mxu0 0
    %839 = vmatprep.subr.bf16.mxu0 0
    %840 = vmatpush1.bf16.msra.mxu0 %v823
    %841 = vmatprep.subr.bf16.mxu0 0
    %842 = vmatpush2.bf16.msra.mxu0 0
    %843 = vmatprep.subr.bf16.mxu0 0
    %844 = vmatpush2.bf16.msra.mxu0 0
    %845 = vmatprep.subr.bf16.mxu0 0
    %846 = vmatpush2.bf16.msra.mxu0 0
    %847 = vmatprep.subr.bf16.mxu0 0
    %848 = vmatpush2.bf16.msra.mxu0 0
    %849 = vmatprep.subr.bf16.mxu0 0
    %850 = vmatpush2.bf16.msra.mxu0 0
    %851 = vmatprep.subr.bf16.mxu0 0
    %852 = vmatpush2.bf16.msra.mxu0 0
    %853 = vmatprep.subr.bf16.mxu0 0
    %854 = vmatpush2.bf16.msra.mxu0 0
    %855 = vmatprep.subr.bf16.mxu0 0
    %856 = vmatpush2.bf16.msra.mxu0 0
    %857 = vmatprep.mubr.bf16.mxu0 0
    %858 = vmatmul.mubr.bf16.gmra.mxu0 %v820
    %v859 = vpop.f32.mrf.mxu0
    %v860 = vadd.f32 0.0, %v859
    %v861 = vpop.f32.mrf.mxu0
    %v862 = vpop.f32.mrf.mxu0
    %v863 = vpop.f32.mrf.mxu0
    %864 = vdwg.mxu0
    %865 = vrot.lane.b32.xlu0 %v166, 104
    %v866 = vpop.permute.xlu0 %865
    %867 = vrot.lane.b32.xlu0 %v168, 72
    %v868 = vpop.permute.xlu0 %867
    %v870 = vsel %vm206, %v866, 0
    %v873 = vsel %vm206, %v868, 0
    %875 = vmatprep.subr.bf16.mxu0 0
    %876 = vmatpush1.bf16.xpose.msra.mxu0 0
    %877 = vmatprep.subr.bf16.mxu0 0
    %878 = vmatpush1.bf16.xpose.msra.mxu0 0
    %879 = vmatprep.subr.bf16.mxu0 0
    %880 = vmatpush1.bf16.xpose.msra.mxu0 0
    %881 = vmatprep.subr.bf16.mxu0 0
    %882 = vmatpush1.bf16.xpose.msra.mxu0 0
    %883 = vmatprep.subr.bf16.mxu0 0
    %884 = vmatpush1.bf16.xpose.msra.mxu0 0
    %885 = vmatprep.subr.bf16.mxu0 0
    %886 = vmatpush1.bf16.xpose.msra.mxu0 0
    %887 = vmatprep.subr.bf16.mxu0 0
    %888 = vmatpush1.bf16.xpose.msra.mxu0 0
    %889 = vmatprep.subr.bf16.mxu0 0
    %890 = vmatpush1.bf16.xpose.msra.mxu0 %v873
    %891 = vmatprep.subr.bf16.mxu0 0
    %892 = vmatpush2.bf16.xpose.msra.mxu0 0
    %893 = vmatprep.subr.bf16.mxu0 0
    %894 = vmatpush2.bf16.xpose.msra.mxu0 0
    %895 = vmatprep.subr.bf16.mxu0 0
    %896 = vmatpush2.bf16.xpose.msra.mxu0 0
    %897 = vmatprep.subr.bf16.mxu0 0
    %898 = vmatpush2.bf16.xpose.msra.mxu0 0
    %899 = vmatprep.subr.bf16.mxu0 0
    %900 = vmatpush2.bf16.xpose.msra.mxu0 0
    %901 = vmatprep.subr.bf16.mxu0 0
    %902 = vmatpush2.bf16.xpose.msra.mxu0 0
    %903 = vmatprep.subr.bf16.mxu0 0
    %904 = vmatpush2.bf16.xpose.msra.mxu0 0
    %905 = vmatprep.subr.bf16.mxu0 0
    %906 = vmatpush2.bf16.xpose.msra.mxu0 0
    %907 = vmatprep.mubr.bf16.mxu0 0
    %908 = vmatmul.mubr.bf16.gmra.mxu0 %v870
    %v909 = vpop.f32.mrf.mxu0
    %v910 = vadd.f32 %v196, %v909
    %v911 = vpop.f32.mrf.mxu0
    %v912 = vpop.f32.mrf.mxu0
    %v913 = vpop.f32.mrf.mxu0
    %914 = vdwg.mxu0
    %915 = vrot.lane.b32.xlu0 %v167, 104
    %v916 = vpop.permute.xlu0 %915
    %917 = vrot.lane.b32.xlu0 %v169, 72
    %v918 = vpop.permute.xlu0 %917
    %v920 = vsel %vm206, %v916, 0
    %v923 = vsel %vm206, %v918, 0
    %925 = vmatprep.subr.bf16.mxu0 0
    %926 = vmatpush1.bf16.xpose.msra.mxu0 0
    %927 = vmatprep.subr.bf16.mxu0 0
    %928 = vmatpush1.bf16.xpose.msra.mxu0 0
    %929 = vmatprep.subr.bf16.mxu0 0
    %930 = vmatpush1.bf16.xpose.msra.mxu0 0
    %931 = vmatprep.subr.bf16.mxu0 0
    %932 = vmatpush1.bf16.xpose.msra.mxu0 0
    %933 = vmatprep.subr.bf16.mxu0 0
    %934 = vmatpush1.bf16.xpose.msra.mxu0 0
    %935 = vmatprep.subr.bf16.mxu0 0
    %936 = vmatpush1.bf16.xpose.msra.mxu0 0
    %937 = vmatprep.subr.bf16.mxu0 0
    %938 = vmatpush1.bf16.xpose.msra.mxu0 0
    %939 = vmatprep.subr.bf16.mxu0 0
    %940 = vmatpush1.bf16.xpose.msra.mxu0 %v923
    %941 = vmatprep.subr.bf16.mxu0 0
    %942 = vmatpush2.bf16.xpose.msra.mxu0 0
    %943 = vmatprep.subr.bf16.mxu0 0
    %944 = vmatpush2.bf16.xpose.msra.mxu0 0
    %945 = vmatprep.subr.bf16.mxu0 0
    %946 = vmatpush2.bf16.xpose.msra.mxu0 0
    %947 = vmatprep.subr.bf16.mxu0 0
    %948 = vmatpush2.bf16.xpose.msra.mxu0 0
    %949 = vmatprep.subr.bf16.mxu0 0
    %950 = vmatpush2.bf16.xpose.msra.mxu0 0
    %951 = vmatprep.subr.bf16.mxu0 0
    %952 = vmatpush2.bf16.xpose.msra.mxu0 0
    %953 = vmatprep.subr.bf16.mxu0 0
    %954 = vmatpush2.bf16.xpose.msra.mxu0 0
    %955 = vmatprep.subr.bf16.mxu0 0
    %956 = vmatpush2.bf16.xpose.msra.mxu0 0
    %957 = vmatprep.mubr.bf16.mxu0 0
    %958 = vmatmul.mubr.bf16.gmra.mxu0 %v920
    %v959 = vpop.f32.mrf.mxu0
    %v960 = vadd.f32 %v200, %v959
    %v961 = vpop.f32.mrf.mxu0
    %v962 = vpop.f32.mrf.mxu0
    %v963 = vpop.f32.mrf.mxu0
    %964 = vdwg.mxu0
    %v965 = vsel %vm206, %v910, -inf
    %966 = vmax.xlane.f32.xlu0 %v965
    %v967 = vpop.xlane.xlu0 %966
    %v968 = vsel %vm206, %v960, -inf
    %969 = vmax.xlane.f32.xlu0 %v968
    %v970 = vpop.xlane.xlu0 %969
    %v971 = vsub.f32 %v910, %v967
    %v972 = vsub.f32 %v960, %v970
    %v973 = vmul.f32 %v971, 1.442695
    %v974 = vpow.pop %v973
    %v975 = vmul.f32 %v972, 1.442695
    %v976 = vpow.pop %v975
    %v977 = vsel %vm206, %v974, 0.0
    %978 = vadd.xlane.f32.xlu0 %v977
    %v979 = vpop.xlane.xlu0 %978
    %v980 = vsel %vm206, %v976, 0.0
    %981 = vadd.xlane.f32.xlu0 %v980
    %v982 = vpop.xlane.xlu0 %981
    %v983 = vrcp.pop %v979
    %v984 = vrcp.pop %v982
    %v985 = vmul.f32 %v974, %v983
    %v986 = vmul.f32 %v976, %v984
    %v987 = vpack.c.bf16 %v985, %v985
    %v988 = vpack.c.bf16 %v986, %v986
    %989 = vrot.lane.b32.xlu0 %v168, 40
    %v990 = vpop.permute.xlu0 %989
    %v992 = vsel %vm206, %v987, 0
    %v995 = vsel %vm331, %v990, 0
    %997 = vmatprep.subr.bf16.mxu0 0
    %998 = vmatpush1.bf16.msra.mxu0 0
    %999 = vmatprep.subr.bf16.mxu0 0
    %1000 = vmatpush1.bf16.msra.mxu0 0
    %1001 = vmatprep.subr.bf16.mxu0 0
    %1002 = vmatpush1.bf16.msra.mxu0 0
    %1003 = vmatprep.subr.bf16.mxu0 0
    %1004 = vmatpush1.bf16.msra.mxu0 0
    %1005 = vmatprep.subr.bf16.mxu0 0
    %1006 = vmatpush1.bf16.msra.mxu0 0
    %1007 = vmatprep.subr.bf16.mxu0 0
    %1008 = vmatpush1.bf16.msra.mxu0 0
    %1009 = vmatprep.subr.bf16.mxu0 0
    %1010 = vmatpush1.bf16.msra.mxu0 0
    %1011 = vmatprep.subr.bf16.mxu0 0
    %1012 = vmatpush1.bf16.msra.mxu0 %v995
    %1013 = vmatprep.subr.bf16.mxu0 0
    %1014 = vmatpush2.bf16.msra.mxu0 0
    %1015 = vmatprep.subr.bf16.mxu0 0
    %1016 = vmatpush2.bf16.msra.mxu0 0
    %1017 = vmatprep.subr.bf16.mxu0 0
    %1018 = vmatpush2.bf16.msra.mxu0 0
    %1019 = vmatprep.subr.bf16.mxu0 0
    %1020 = vmatpush2.bf16.msra.mxu0 0
    %1021 = vmatprep.subr.bf16.mxu0 0
    %1022 = vmatpush2.bf16.msra.mxu0 0
    %1023 = vmatprep.subr.bf16.mxu0 0
    %1024 = vmatpush2.bf16.msra.mxu0 0
    %1025 = vmatprep.subr.bf16.mxu0 0
    %1026 = vmatpush2.bf16.msra.mxu0 0
    %1027 = vmatprep.subr.bf16.mxu0 0
    %1028 = vmatpush2.bf16.msra.mxu0 0
    %1029 = vmatprep.mubr.bf16.mxu0 0
    %1030 = vmatmul.mubr.bf16.gmra.mxu0 %v992
    %v1031 = vpop.f32.mrf.mxu0
    %v1032 = vadd.f32 0.0, %v1031
    %v1033 = vpop.f32.mrf.mxu0
    %v1034 = vpop.f32.mrf.mxu0
    %v1035 = vpop.f32.mrf.mxu0
    %1036 = vdwg.mxu0
    %1037 = vrot.lane.b32.xlu0 %v169, 40
    %v1038 = vpop.permute.xlu0 %1037
    %v1040 = vsel %vm206, %v988, 0
    %v1043 = vsel %vm331, %v1038, 0
    %1045 = vmatprep.subr.bf16.mxu0 0
    %1046 = vmatpush1.bf16.msra.mxu0 0
    %1047 = vmatprep.subr.bf16.mxu0 0
    %1048 = vmatpush1.bf16.msra.mxu0 0
    %1049 = vmatprep.subr.bf16.mxu0 0
    %1050 = vmatpush1.bf16.msra.mxu0 0
    %1051 = vmatprep.subr.bf16.mxu0 0
    %1052 = vmatpush1.bf16.msra.mxu0 0
    %1053 = vmatprep.subr.bf16.mxu0 0
    %1054 = vmatpush1.bf16.msra.mxu0 0
    %1055 = vmatprep.subr.bf16.mxu0 0
    %1056 = vmatpush1.bf16.msra.mxu0 0
    %1057 = vmatprep.subr.bf16.mxu0 0
    %1058 = vmatpush1.bf16.msra.mxu0 0
    %1059 = vmatprep.subr.bf16.mxu0 0
    %1060 = vmatpush1.bf16.msra.mxu0 %v1043
    %1061 = vmatprep.subr.bf16.mxu0 0
    %1062 = vmatpush2.bf16.msra.mxu0 0
    %1063 = vmatprep.subr.bf16.mxu0 0
    %1064 = vmatpush2.bf16.msra.mxu0 0
    %1065 = vmatprep.subr.bf16.mxu0 0
    %1066 = vmatpush2.bf16.msra.mxu0 0
    %1067 = vmatprep.subr.bf16.mxu0 0
    %1068 = vmatpush2.bf16.msra.mxu0 0
    %1069 = vmatprep.subr.bf16.mxu0 0
    %1070 = vmatpush2.bf16.msra.mxu0 0
    %1071 = vmatprep.subr.bf16.mxu0 0
    %1072 = vmatpush2.bf16.msra.mxu0 0
    %1073 = vmatprep.subr.bf16.mxu0 0
    %1074 = vmatpush2.bf16.msra.mxu0 0
    %1075 = vmatprep.subr.bf16.mxu0 0
    %1076 = vmatpush2.bf16.msra.mxu0 0
    %1077 = vmatprep.mubr.bf16.mxu0 0
    %1078 = vmatmul.mubr.bf16.gmra.mxu0 %v1040
    %v1079 = vpop.f32.mrf.mxu0
    %v1080 = vadd.f32 0.0, %v1079
    %v1081 = vpop.f32.mrf.mxu0
    %v1082 = vpop.f32.mrf.mxu0
    %v1083 = vpop.f32.mrf.mxu0
    %1084 = vdwg.mxu0
    %1087 = vrot.lane.b32.xlu0 %v592, 8
    %v1088 = vpop.permute.xlu0 %1087
    %1089 = vrot.lane.b32.xlu0 %v640, 8
    %v1090 = vpop.permute.xlu0 %1089
    %1095 = vrot.lane.b32.xlu0 %v812, 16
    %v1096 = vpop.permute.xlu0 %1095
    %1097 = vrot.lane.b32.xlu0 %v860, 16
    %v1098 = vpop.permute.xlu0 %1097
    %1103 = vrot.lane.b32.xlu0 %v1032, 24
    %v1104 = vpop.permute.xlu0 %1103
    %1105 = vrot.lane.b32.xlu0 %v1080, 24
    %v1106 = vpop.permute.xlu0 %1105
    %v1109 = vsel %vm206, %v370, %v1088
    %v1110 = vsel %vm206, %v418, %v1090
    %vm1111 = vcmask 130048
    %v1112 = vsel %vm1111, %v1109, %v1096
    %v1113 = vsel %vm1111, %v1110, %v1098
    %vm1114 = vcmask 195584
    %v1115 = vsel %vm1114, %v1112, %v1104
    %v1116 = vsel %vm1114, %v1113, %v1106
    %v1117 = vld [vmem:[%s6] sm:$0xff]
    %v1118 = vld [vmem:[%s6 + $0x8] sm:$0xff]
    %v1119 = vld [vmem:[%s6 + $0x10] sm:$0xff]
    %v1120 = vld [vmem:[%s6 + $0x18] sm:$0xff]
    %v1121 = vpack.c.bf16 %v1116, %v1115
    %v1122 = vpack.c.bf16 %v1118, %v1117
    %v1123 = vpack.c.bf16 %v1120, %v1119
    %v1124 = vld [vmem:[%s7] sm:$0x1]
    %v1126 = vlaneseq
    %v1127 = vshrl.u32 %v1126, 7
    %v1128 = vsub.s32 0, %v1127
    %v1129 = vrot.slane %v1124, %v1128
    %v1132 = vsel %vm59, %v1121, 0
    %1134 = vmatprep.subr.bf16.mxu0 0
    %1135 = vmatpush1.bf16.msra.mxu0 0
    %1136 = vmatprep.subr.bf16.mxu0 0
    %1137 = vmatpush1.bf16.msra.mxu0 0
    %1138 = vmatprep.subr.bf16.mxu0 0
    %1139 = vmatpush1.bf16.msra.mxu0 0
    %1140 = vmatprep.subr.bf16.mxu0 0
    %1141 = vmatpush1.bf16.msra.mxu0 0
    %1142 = vmatprep.subr.bf16.mxu0 0
    %1143 = vmatpush1.bf16.msra.mxu0 0
    %1144 = vmatprep.subr.bf16.mxu0 0
    %1145 = vmatpush1.bf16.msra.mxu0 0
    %1146 = vmatprep.subr.bf16.mxu0 0
    %1147 = vmatpush1.bf16.msra.mxu0 %v1123
    %1148 = vmatprep.subr.bf16.mxu0 0
    %1149 = vmatpush1.bf16.msra.mxu0 %v1122
    %1150 = vmatprep.subr.bf16.mxu0 0
    %1151 = vmatpush2.bf16.msra.mxu0 0
    %1152 = vmatprep.subr.bf16.mxu0 0
    %1153 = vmatpush2.bf16.msra.mxu0 0
    %1154 = vmatprep.subr.bf16.mxu0 0
    %1155 = vmatpush2.bf16.msra.mxu0 0
    %1156 = vmatprep.subr.bf16.mxu0 0
    %1157 = vmatpush2.bf16.msra.mxu0 0
    %1158 = vmatprep.subr.bf16.mxu0 0
    %1159 = vmatpush2.bf16.msra.mxu0 0
    %1160 = vmatprep.subr.bf16.mxu0 0
    %1161 = vmatpush2.bf16.msra.mxu0 0
    %1162 = vmatprep.subr.bf16.mxu0 0
    %1163 = vmatpush2.bf16.msra.mxu0 0
    %1164 = vmatprep.subr.bf16.mxu0 0
    %1165 = vmatpush2.bf16.msra.mxu0 0
    %1166 = vmatprep.mubr.bf16.mxu0 0
    %1167 = vmatmul.mubr.bf16.gmra.mxu0 %v1132
    %v1168 = vpop.f32.mrf.mxu0
    %v1169 = vadd.f32 %v1129, %v1168
    %v1170 = vpop.f32.mrf.mxu0
    %v1171 = vpop.f32.mrf.mxu0
    %v1172 = vadd.f32 %v1129, %v1171
    %v1173 = vpop.f32.mrf.mxu0
    %1174 = vdwg.mxu0
    %v1175 = vadd.f32 %v1169, %v101
    %v1176 = vadd.f32 %v1172, %v102
    %v1177 = vld [vmem:[%s8] sm:$0x1]
    %v1178 = vld [vmem:[%s9] sm:$0x1]
    %v1179 = vsel %vm59, %v1175, 0.0
    %1180 = vadd.xlane.f32.xlu0 %v1179
    %v1181 = vpop.xlane.xlu0 %1180
    %v1182 = vsel %vm59, %v1176, 0.0
    %1183 = vadd.xlane.f32.xlu0 %v1182
    %v1184 = vpop.xlane.xlu0 %1183
    %v1185 = vmul.f32 %v1181, %v66
    %v1186 = vmul.f32 %v1184, %v66
    %v1187 = vsub.f32 %v1175, %v1185
    %v1188 = vsub.f32 %v1176, %v1186
    %v1189 = vmul.f32 %v1187, %v1187
    %v1190 = vmul.f32 %v1188, %v1188
    %v1191 = vsel %vm59, %v1189, 0.0
    %1192 = vadd.xlane.f32.xlu0 %v1191
    %v1193 = vpop.xlane.xlu0 %1192
    %v1194 = vsel %vm59, %v1190, 0.0
    %1195 = vadd.xlane.f32.xlu0 %v1194
    %v1196 = vpop.xlane.xlu0 %1195
    %v1197 = vmul.f32 %v1193, %v66
    %v1198 = vmul.f32 %v1196, %v66
    %v1199 = vadd.f32 %v1197, 1e-12
    %v1200 = vadd.f32 %v1198, 1e-12
    %v1201 = vrsqrt.pop %v1199
    %v1202 = vrsqrt.pop %v1200
    %v1203 = vmul.f32 %v1187, %v1201
    %v1204 = vmul.f32 %v1188, %v1202
    %v1206 = vlaneseq
    %v1207 = vshrl.u32 %v1206, 7
    %v1208 = vsub.s32 0, %v1207
    %v1209 = vrot.slane %v1177, %v1208
    %v1211 = vmul.f32 %v1203, %v1209
    %v1212 = vmul.f32 %v1204, %v1209
    %v1214 = vlaneseq
    %v1215 = vshrl.u32 %v1214, 7
    %v1216 = vsub.s32 0, %v1215
    %v1217 = vrot.slane %v1178, %v1216
    %v1219 = vadd.f32 %v1211, %v1217
    %v1220 = vadd.f32 %v1212, %v1217
    %v1221 = vld [vmem:[%s10] sm:$0xff]
    %v1222 = vld [vmem:[%s10 + $0x8] sm:$0xff]
    %v1223 = vld [vmem:[%s10 + $0x10] sm:$0xff]
    %v1224 = vld [vmem:[%s10 + $0x18] sm:$0xff]
    %v1225 = vpack.c.bf16 %v1220, %v1219
    %v1226 = vpack.c.bf16 %v1222, %v1221
    %v1227 = vpack.c.bf16 %v1224, %v1223
    %v1228 = vld [vmem:[%s11] sm:$0x1]
    %v1230 = vlaneseq
    %v1231 = vshrl.u32 %v1230, 7
    %v1232 = vsub.s32 0, %v1231
    %v1233 = vrot.slane %v1228, %v1232
    %v1236 = vsel %vm59, %v1225, 0
    %1238 = vmatprep.subr.bf16.mxu0 0
    %1239 = vmatpush1.bf16.msra.mxu0 0
    %1240 = vmatprep.subr.bf16.mxu0 0
    %1241 = vmatpush1.bf16.msra.mxu0 0
    %1242 = vmatprep.subr.bf16.mxu0 0
    %1243 = vmatpush1.bf16.msra.mxu0 0
    %1244 = vmatprep.subr.bf16.mxu0 0
    %1245 = vmatpush1.bf16.msra.mxu0 0
    %1246 = vmatprep.subr.bf16.mxu0 0
    %1247 = vmatpush1.bf16.msra.mxu0 0
    %1248 = vmatprep.subr.bf16.mxu0 0
    %1249 = vmatpush1.bf16.msra.mxu0 0
    %1250 = vmatprep.subr.bf16.mxu0 0
    %1251 = vmatpush1.bf16.msra.mxu0 %v1227
    %1252 = vmatprep.subr.bf16.mxu0 0
    %1253 = vmatpush1.bf16.msra.mxu0 %v1226
    %1254 = vmatprep.subr.bf16.mxu0 0
    %1255 = vmatpush2.bf16.msra.mxu0 0
    %1256 = vmatprep.subr.bf16.mxu0 0
    %1257 = vmatpush2.bf16.msra.mxu0 0
    %1258 = vmatprep.subr.bf16.mxu0 0
    %1259 = vmatpush2.bf16.msra.mxu0 0
    %1260 = vmatprep.subr.bf16.mxu0 0
    %1261 = vmatpush2.bf16.msra.mxu0 0
    %1262 = vmatprep.subr.bf16.mxu0 0
    %1263 = vmatpush2.bf16.msra.mxu0 0
    %1264 = vmatprep.subr.bf16.mxu0 0
    %1265 = vmatpush2.bf16.msra.mxu0 0
    %1266 = vmatprep.subr.bf16.mxu0 0
    %1267 = vmatpush2.bf16.msra.mxu0 0
    %1268 = vmatprep.subr.bf16.mxu0 0
    %1269 = vmatpush2.bf16.msra.mxu0 0
    %1270 = vmatprep.mubr.bf16.mxu0 0
    %1271 = vmatmul.mubr.bf16.gmra.mxu0 %v1236
    %v1272 = vpop.f32.mrf.mxu0
    %v1273 = vadd.f32 %v1233, %v1272
    %v1274 = vpop.f32.mrf.mxu0
    %v1275 = vpop.f32.mrf.mxu0
    %v1276 = vadd.f32 %v1233, %v1275
    %v1277 = vpop.f32.mrf.mxu0
    %1278 = vdwg.mxu0
    %v1279 = vmul.f32 %v1273, %v1273
    %v1280 = vmul.f32 %v1276, %v1276
    %v1281 = vmul.f32 %v1273, %v1279
    %v1282 = vmul.f32 %v1276, %v1280
    %v1283 = vmul.f32 %v1281, 0.044715
    %v1284 = vmul.f32 %v1282, 0.044715
    %v1285 = vadd.f32 %v1273, %v1283
    %v1286 = vadd.f32 %v1276, %v1284
    %v1287 = vmul.f32 %v1285, 0.7978846
    %v1288 = vmul.f32 %v1286, 0.7978846
    %v1289 = vtanh.pop %v1287
    %v1290 = vtanh.pop %v1288
    %v1291 = vadd.f32 %v1289, 1.0
    %v1292 = vadd.f32 %v1290, 1.0
    %v1293 = vmul.f32 %v1291, 0.5
    %v1294 = vmul.f32 %v1292, 0.5
    %v1295 = vmul.f32 %v1273, %v1293
    %v1296 = vmul.f32 %v1276, %v1294
    %v1297 = vld [vmem:[%s12] sm:$0xff]
    %v1298 = vld [vmem:[%s12 + $0x8] sm:$0xff]
    %v1299 = vld [vmem:[%s12 + $0x10] sm:$0xff]
    %v1300 = vld [vmem:[%s12 + $0x18] sm:$0xff]
    %v1301 = vld [vmem:[%s12 + $0x20] sm:$0xff]
    %v1302 = vld [vmem:[%s12 + $0x28] sm:$0xff]
    %v1303 = vld [vmem:[%s12 + $0x30] sm:$0xff]
    %v1304 = vld [vmem:[%s12 + $0x38] sm:$0xff]
    %v1305 = vpack.c.bf16 %v1296, %v1295
    %v1306 = vpack.c.bf16 %v1298, %v1297
    %v1307 = vpack.c.bf16 %v1300, %v1299
    %v1308 = vpack.c.bf16 %v1302, %v1301
    %v1309 = vpack.c.bf16 %v1304, %v1303
    %v1310 = vld [vmem:[%s13] sm:$0x1]
    %v1312 = vlaneseq
    %v1313 = vshrl.u32 %v1312, 7
    %v1314 = vsub.s32 0, %v1313
    %v1315 = vrot.slane %v1310, %v1314
    %vm1317 = vcmask 523264
    %v1319 = vsel %vm1317, %v1305, 0
    %1321 = vmatprep.subr.bf16.mxu0 0
    %1322 = vmatpush1.bf16.msra.mxu0 0
    %1323 = vmatprep.subr.bf16.mxu0 0
    %1324 = vmatpush1.bf16.msra.mxu0 0
    %1325 = vmatprep.subr.bf16.mxu0 0
    %1326 = vmatpush1.bf16.msra.mxu0 0
    %1327 = vmatprep.subr.bf16.mxu0 0
    %1328 = vmatpush1.bf16.msra.mxu0 0
    %1329 = vmatprep.subr.bf16.mxu0 0
    %1330 = vmatpush1.bf16.msra.mxu0 %v1309
    %1331 = vmatprep.subr.bf16.mxu0 0
    %1332 = vmatpush1.bf16.msra.mxu0 %v1308
    %1333 = vmatprep.subr.bf16.mxu0 0
    %1334 = vmatpush1.bf16.msra.mxu0 %v1307
    %1335 = vmatprep.subr.bf16.mxu0 0
    %1336 = vmatpush1.bf16.msra.mxu0 %v1306
    %1337 = vmatprep.subr.bf16.mxu0 0
    %1338 = vmatpush2.bf16.msra.mxu0 0
    %1339 = vmatprep.subr.bf16.mxu0 0
    %1340 = vmatpush2.bf16.msra.mxu0 0
    %1341 = vmatprep.subr.bf16.mxu0 0
    %1342 = vmatpush2.bf16.msra.mxu0 0
    %1343 = vmatprep.subr.bf16.mxu0 0
    %1344 = vmatpush2.bf16.msra.mxu0 0
    %1345 = vmatprep.subr.bf16.mxu0 0
    %1346 = vmatpush2.bf16.msra.mxu0 0
    %1347 = vmatprep.subr.bf16.mxu0 0
    %1348 = vmatpush2.bf16.msra.mxu0 0
    %1349 = vmatprep.subr.bf16.mxu0 0
    %1350 = vmatpush2.bf16.msra.mxu0 0
    %1351 = vmatprep.subr.bf16.mxu0 0
    %1352 = vmatpush2.bf16.msra.mxu0 0
    %1353 = vmatprep.mubr.bf16.mxu0 0
    %1354 = vmatmul.mubr.bf16.gmra.mxu0 %v1319
    %v1355 = vpop.f32.mrf.mxu0
    %v1356 = vadd.f32 %v1315, %v1355
    %v1357 = vpop.f32.mrf.mxu0
    %v1358 = vpop.f32.mrf.mxu0
    %v1359 = vadd.f32 %v1315, %v1358
    %v1360 = vpop.f32.mrf.mxu0
    %1361 = vdwg.mxu0
    %v1362 = vadd.f32 %v1356, %v1219
    %v1363 = vadd.f32 %v1359, %v1220
    %v1364 = vld [vmem:[%s14] sm:$0x1]
    %v1365 = vld [vmem:[%s15] sm:$0x1]
    %v1366 = vsel %vm59, %v1362, 0.0
    %1367 = vadd.xlane.f32.xlu0 %v1366
    %v1368 = vpop.xlane.xlu0 %1367
    %v1369 = vsel %vm59, %v1363, 0.0
    %1370 = vadd.xlane.f32.xlu0 %v1369
    %v1371 = vpop.xlane.xlu0 %1370
    %v1372 = vmul.f32 %v1368, %v66
    %v1373 = vmul.f32 %v1371, %v66
    %v1374 = vsub.f32 %v1362, %v1372
    %v1375 = vsub.f32 %v1363, %v1373
    %v1376 = vmul.f32 %v1374, %v1374
    %v1377 = vmul.f32 %v1375, %v1375
    %v1378 = vsel %vm59, %v1376, 0.0
    %1379 = vadd.xlane.f32.xlu0 %v1378
    %v1380 = vpop.xlane.xlu0 %1379
    %v1381 = vsel %vm59, %v1377, 0.0
    %1382 = vadd.xlane.f32.xlu0 %v1381
    %v1383 = vpop.xlane.xlu0 %1382
    %v1384 = vmul.f32 %v1380, %v66
    %v1385 = vmul.f32 %v1383, %v66
    %v1386 = vadd.f32 %v1384, 1e-12
    %v1387 = vadd.f32 %v1385, 1e-12
    %v1388 = vrsqrt.pop %v1386
    %v1389 = vrsqrt.pop %v1387
    %v1390 = vmul.f32 %v1374, %v1388
    %v1391 = vmul.f32 %v1375, %v1389
    %v1393 = vlaneseq
    %v1394 = vshrl.u32 %v1393, 7
    %v1395 = vsub.s32 0, %v1394
    %v1396 = vrot.slane %v1364, %v1395
    %v1398 = vmul.f32 %v1390, %v1396
    %v1399 = vmul.f32 %v1391, %v1396
    %v1401 = vlaneseq
    %v1402 = vshrl.u32 %v1401, 7
    %v1403 = vsub.s32 0, %v1402
    %v1404 = vrot.slane %v1365, %v1403
    %v1406 = vadd.f32 %v1398, %v1404
    %v1407 = vadd.f32 %v1399, %v1404
    %s1408 = scalar_lea.vmem %s4, 32
    %v1409 = vld [vmem:[%s1408] sm:$0xff]
    %v1410 = vld [vmem:[%s1408 + $0x8] sm:$0xff]
    %v1411 = vld [vmem:[%s1408 + $0x10] sm:$0xff]
    %v1412 = vld [vmem:[%s1408 + $0x18] sm:$0xff]
    %v1413 = vpack.c.bf16 %v1407, %v1406
    %v1414 = vpack.c.bf16 %v1410, %v1409
    %v1415 = vpack.c.bf16 %v1412, %v1411
    %s1416 = scalar_lea.vmem %s5, 1
    %v1417 = vld [vmem:[%s1416] sm:$0x1]
    %v1419 = vlaneseq
    %v1420 = vshrl.u32 %v1419, 7
    %v1421 = vsub.s32 0, %v1420
    %v1422 = vrot.slane %v1417, %v1421
    %v1425 = vsel %vm59, %v1413, 0
    %1427 = vmatprep.subr.bf16.mxu0 0
    %1428 = vmatpush1.bf16.msra.mxu0 0
    %1429 = vmatprep.subr.bf16.mxu0 0
    %1430 = vmatpush1.bf16.msra.mxu0 0
    %1431 = vmatprep.subr.bf16.mxu0 0
    %1432 = vmatpush1.bf16.msra.mxu0 0
    %1433 = vmatprep.subr.bf16.mxu0 0
    %1434 = vmatpush1.bf16.msra.mxu0 0
    %1435 = vmatprep.subr.bf16.mxu0 0
    %1436 = vmatpush1.bf16.msra.mxu0 0
    %1437 = vmatprep.subr.bf16.mxu0 0
    %1438 = vmatpush1.bf16.msra.mxu0 0
    %1439 = vmatprep.subr.bf16.mxu0 0
    %1440 = vmatpush1.bf16.msra.mxu0 %v1415
    %1441 = vmatprep.subr.bf16.mxu0 0
    %1442 = vmatpush1.bf16.msra.mxu0 %v1414
    %1443 = vmatprep.subr.bf16.mxu0 0
    %1444 = vmatpush2.bf16.msra.mxu0 0
    %1445 = vmatprep.subr.bf16.mxu0 0
    %1446 = vmatpush2.bf16.msra.mxu0 0
    %1447 = vmatprep.subr.bf16.mxu0 0
    %1448 = vmatpush2.bf16.msra.mxu0 0
    %1449 = vmatprep.subr.bf16.mxu0 0
    %1450 = vmatpush2.bf16.msra.mxu0 0
    %1451 = vmatprep.subr.bf16.mxu0 0
    %1452 = vmatpush2.bf16.msra.mxu0 0
    %1453 = vmatprep.subr.bf16.mxu0 0
    %1454 = vmatpush2.bf16.msra.mxu0 0
    %1455 = vmatprep.subr.bf16.mxu0 0
    %1456 = vmatpush2.bf16.msra.mxu0 0
    %1457 = vmatprep.subr.bf16.mxu0 0
    %1458 = vmatpush2.bf16.msra.mxu0 0
    %1459 = vmatprep.mubr.bf16.mxu0 0
    %1460 = vmatmul.mubr.bf16.gmra.mxu0 %v1425
    %v1461 = vpop.f32.mrf.mxu0
    %v1462 = vadd.f32 %v1422, %v1461
    %v1463 = vpop.f32.mrf.mxu0
    %v1464 = vpop.f32.mrf.mxu0
    %v1465 = vadd.f32 %v1422, %v1464
    %v1466 = vpop.f32.mrf.mxu0
    %1467 = vdwg.mxu0
    %v1468 = vmul.f32 %v1462, 0.35355338
    %v1469 = vmul.f32 %v1465, 0.35355338
    %v1470 = vpack.c.bf16 %v1468, %v1468
    %v1471 = vpack.c.bf16 %v1469, %v1469
    %v1472 = vpack.c.bf16 %v1462, %v1462
    %v1473 = vpack.c.bf16 %v1465, %v1465
    %1475 = vrot.lane.b32.xlu0 %v1472, 96
    %v1476 = vpop.permute.xlu0 %1475
    %v1478 = vsel %vm206, %v1470, 0
    %v1481 = vsel %vm206, %v1476, 0
    %1483 = vmatprep.subr.bf16.mxu0 0
    %1484 = vmatpush1.bf16.xpose.msra.mxu0 0
    %1485 = vmatprep.subr.bf16.mxu0 0
    %1486 = vmatpush1.bf16.xpose.msra.mxu0 0
    %1487 = vmatprep.subr.bf16.mxu0 0
    %1488 = vmatpush1.bf16.xpose.msra.mxu0 0
    %1489 = vmatprep.subr.bf16.mxu0 0
    %1490 = vmatpush1.bf16.xpose.msra.mxu0 0
    %1491 = vmatprep.subr.bf16.mxu0 0
    %1492 = vmatpush1.bf16.xpose.msra.mxu0 0
    %1493 = vmatprep.subr.bf16.mxu0 0
    %1494 = vmatpush1.bf16.xpose.msra.mxu0 0
    %1495 = vmatprep.subr.bf16.mxu0 0
    %1496 = vmatpush1.bf16.xpose.msra.mxu0 0
    %1497 = vmatprep.subr.bf16.mxu0 0
    %1498 = vmatpush1.bf16.xpose.msra.mxu0 %v1481
    %1499 = vmatprep.subr.bf16.mxu0 0
    %1500 = vmatpush2.bf16.xpose.msra.mxu0 0
    %1501 = vmatprep.subr.bf16.mxu0 0
    %1502 = vmatpush2.bf16.xpose.msra.mxu0 0
    %1503 = vmatprep.subr.bf16.mxu0 0
    %1504 = vmatpush2.bf16.xpose.msra.mxu0 0
    %1505 = vmatprep.subr.bf16.mxu0 0
    %1506 = vmatpush2.bf16.xpose.msra.mxu0 0
    %1507 = vmatprep.subr.bf16.mxu0 0
    %1508 = vmatpush2.bf16.xpose.msra.mxu0 0
    %1509 = vmatprep.subr.bf16.mxu0 0
    %1510 = vmatpush2.bf16.xpose.msra.mxu0 0
    %1511 = vmatprep.subr.bf16.mxu0 0
    %1512 = vmatpush2.bf16.xpose.msra.mxu0 0
    %1513 = vmatprep.subr.bf16.mxu0 0
    %1514 = vmatpush2.bf16.xpose.msra.mxu0 0
    %1515 = vmatprep.mubr.bf16.mxu0 0
    %1516 = vmatmul.mubr.bf16.gmra.mxu0 %v1478
    %v1517 = vpop.f32.mrf.mxu0
    %v1518 = vadd.f32 %v196, %v1517
    %v1519 = vpop.f32.mrf.mxu0
    %v1520 = vpop.f32.mrf.mxu0
    %v1521 = vpop.f32.mrf.mxu0
    %1522 = vdwg.mxu0
    %1524 = vrot.lane.b32.xlu0 %v1473, 96
    %v1525 = vpop.permute.xlu0 %1524
    %v1527 = vsel %vm206, %v1471, 0
    %v1530 = vsel %vm206, %v1525, 0
    %1532 = vmatprep.subr.bf16.mxu0 0
    %1533 = vmatpush1.bf16.xpose.msra.mxu0 0
    %1534 = vmatprep.subr.bf16.mxu0 0
    %1535 = vmatpush1.bf16.xpose.msra.mxu0 0
    %1536 = vmatprep.subr.bf16.mxu0 0
    %1537 = vmatpush1.bf16.xpose.msra.mxu0 0
    %1538 = vmatprep.subr.bf16.mxu0 0
    %1539 = vmatpush1.bf16.xpose.msra.mxu0 0
    %1540 = vmatprep.subr.bf16.mxu0 0
    %1541 = vmatpush1.bf16.xpose.msra.mxu0 0
    %1542 = vmatprep.subr.bf16.mxu0 0
    %1543 = vmatpush1.bf16.xpose.msra.mxu0 0
    %1544 = vmatprep.subr.bf16.mxu0 0
    %1545 = vmatpush1.bf16.xpose.msra.mxu0 0
    %1546 = vmatprep.subr.bf16.mxu0 0
    %1547 = vmatpush1.bf16.xpose.msra.mxu0 %v1530
    %1548 = vmatprep.subr.bf16.mxu0 0
    %1549 = vmatpush2.bf16.xpose.msra.mxu0 0
    %1550 = vmatprep.subr.bf16.mxu0 0
    %1551 = vmatpush2.bf16.xpose.msra.mxu0 0
    %1552 = vmatprep.subr.bf16.mxu0 0
    %1553 = vmatpush2.bf16.xpose.msra.mxu0 0
    %1554 = vmatprep.subr.bf16.mxu0 0
    %1555 = vmatpush2.bf16.xpose.msra.mxu0 0
    %1556 = vmatprep.subr.bf16.mxu0 0
    %1557 = vmatpush2.bf16.xpose.msra.mxu0 0
    %1558 = vmatprep.subr.bf16.mxu0 0
    %1559 = vmatpush2.bf16.xpose.msra.mxu0 0
    %1560 = vmatprep.subr.bf16.mxu0 0
    %1561 = vmatpush2.bf16.xpose.msra.mxu0 0
    %1562 = vmatprep.subr.bf16.mxu0 0
    %1563 = vmatpush2.bf16.xpose.msra.mxu0 0
    %1564 = vmatprep.mubr.bf16.mxu0 0
    %1565 = vmatmul.mubr.bf16.gmra.mxu0 %v1527
    %v1566 = vpop.f32.mrf.mxu0
    %v1567 = vadd.f32 %v200, %v1566
    %v1568 = vpop.f32.mrf.mxu0
    %v1569 = vpop.f32.mrf.mxu0
    %v1570 = vpop.f32.mrf.mxu0
    %1571 = vdwg.mxu0
    %v1572 = vsel %vm206, %v1518, -inf
    %1573 = vmax.xlane.f32.xlu0 %v1572
    %v1574 = vpop.xlane.xlu0 %1573
    %v1575 = vsel %vm206, %v1567, -inf
    %1576 = vmax.xlane.f32.xlu0 %v1575
    %v1577 = vpop.xlane.xlu0 %1576
    %v1578 = vsub.f32 %v1518, %v1574
    %v1579 = vsub.f32 %v1567, %v1577
    %v1580 = vmul.f32 %v1578, 1.442695
    %v1581 = vpow.pop %v1580
    %v1582 = vmul.f32 %v1579, 1.442695
    %v1583 = vpow.pop %v1582
    %v1584 = vsel %vm206, %v1581, 0.0
    %1585 = vadd.xlane.f32.xlu0 %v1584
    %v1586 = vpop.xlane.xlu0 %1585
    %v1587 = vsel %vm206, %v1583, 0.0
    %1588 = vadd.xlane.f32.xlu0 %v1587
    %v1589 = vpop.xlane.xlu0 %1588
    %v1590 = vrcp.pop %v1586
    %v1591 = vrcp.pop %v1589
    %v1592 = vmul.f32 %v1581, %v1590
    %v1593 = vmul.f32 %v1583, %v1591
    %v1594 = vpack.c.bf16 %v1592, %v1592
    %v1595 = vpack.c.bf16 %v1593, %v1593
    %1596 = vrot.lane.b32.xlu0 %v1472, 64
    %v1597 = vpop.permute.xlu0 %1596
    %v1599 = vsel %vm206, %v1594, 0
    %v1602 = vsel %vm331, %v1597, 0
    %1604 = vmatprep.subr.bf16.mxu0 0
    %1605 = vmatpush1.bf16.msra.mxu0 0
    %1606 = vmatprep.subr.bf16.mxu0 0
    %1607 = vmatpush1.bf16.msra.mxu0 0
    %1608 = vmatprep.subr.bf16.mxu0 0
    %1609 = vmatpush1.bf16.msra.mxu0 0
    %1610 = vmatprep.subr.bf16.mxu0 0
    %1611 = vmatpush1.bf16.msra.mxu0 0
    %1612 = vmatprep.subr.bf16.mxu0 0
    %1613 = vmatpush1.bf16.msra.mxu0 0
    %1614 = vmatprep.subr.bf16.mxu0 0
    %1615 = vmatpush1.bf16.msra.mxu0 0
    %1616 = vmatprep.subr.bf16.mxu0 0
    %1617 = vmatpush1.bf16.msra.mxu0 0
    %1618 = vmatprep.subr.bf16.mxu0 0
    %1619 = vmatpush1.bf16.msra.mxu0 %v1602
    %1620 = vmatprep.subr.bf16.mxu0 0
    %1621 = vmatpush2.bf16.msra.mxu0 0
    %1622 = vmatprep.subr.bf16.mxu0 0
    %1623 = vmatpush2.bf16.msra.mxu0 0
    %1624 = vmatprep.subr.bf16.mxu0 0
    %1625 = vmatpush2.bf16.msra.mxu0 0
    %1626 = vmatprep.subr.bf16.mxu0 0
    %1627 = vmatpush2.bf16.msra.mxu0 0
    %1628 = vmatprep.subr.bf16.mxu0 0
    %1629 = vmatpush2.bf16.msra.mxu0 0
    %1630 = vmatprep.subr.bf16.mxu0 0
    %1631 = vmatpush2.bf16.msra.mxu0 0
    %1632 = vmatprep.subr.bf16.mxu0 0
    %1633 = vmatpush2.bf16.msra.mxu0 0
    %1634 = vmatprep.subr.bf16.mxu0 0
    %1635 = vmatpush2.bf16.msra.mxu0 0
    %1636 = vmatprep.mubr.bf16.mxu0 0
    %1637 = vmatmul.mubr.bf16.gmra.mxu0 %v1599
    %v1638 = vpop.f32.mrf.mxu0
    %v1639 = vadd.f32 0.0, %v1638
    %v1640 = vpop.f32.mrf.mxu0
    %v1641 = vpop.f32.mrf.mxu0
    %v1642 = vpop.f32.mrf.mxu0
    %1643 = vdwg.mxu0
    %1644 = vrot.lane.b32.xlu0 %v1473, 64
    %v1645 = vpop.permute.xlu0 %1644
    %v1647 = vsel %vm206, %v1595, 0
    %v1650 = vsel %vm331, %v1645, 0
    %1652 = vmatprep.subr.bf16.mxu0 0
    %1653 = vmatpush1.bf16.msra.mxu0 0
    %1654 = vmatprep.subr.bf16.mxu0 0
    %1655 = vmatpush1.bf16.msra.mxu0 0
    %1656 = vmatprep.subr.bf16.mxu0 0
    %1657 = vmatpush1.bf16.msra.mxu0 0
    %1658 = vmatprep.subr.bf16.mxu0 0
    %1659 = vmatpush1.bf16.msra.mxu0 0
    %1660 = vmatprep.subr.bf16.mxu0 0
    %1661 = vmatpush1.bf16.msra.mxu0 0
    %1662 = vmatprep.subr.bf16.mxu0 0
    %1663 = vmatpush1.bf16.msra.mxu0 0
    %1664 = vmatprep.subr.bf16.mxu0 0
    %1665 = vmatpush1.bf16.msra.mxu0 0
    %1666 = vmatprep.subr.bf16.mxu0 0
    %1667 = vmatpush1.bf16.msra.mxu0 %v1650
    %1668 = vmatprep.subr.bf16.mxu0 0
    %1669 = vmatpush2.bf16.msra.mxu0 0
    %1670 = vmatprep.subr.bf16.mxu0 0
    %1671 = vmatpush2.bf16.msra.mxu0 0
    %1672 = vmatprep.subr.bf16.mxu0 0
    %1673 = vmatpush2.bf16.msra.mxu0 0
    %1674 = vmatprep.subr.bf16.mxu0 0
    %1675 = vmatpush2.bf16.msra.mxu0 0
    %1676 = vmatprep.subr.bf16.mxu0 0
    %1677 = vmatpush2.bf16.msra.mxu0 0
    %1678 = vmatprep.subr.bf16.mxu0 0
    %1679 = vmatpush2.bf16.msra.mxu0 0
    %1680 = vmatprep.subr.bf16.mxu0 0
    %1681 = vmatpush2.bf16.msra.mxu0 0
    %1682 = vmatprep.subr.bf16.mxu0 0
    %1683 = vmatpush2.bf16.msra.mxu0 0
    %1684 = vmatprep.mubr.bf16.mxu0 0
    %1685 = vmatmul.mubr.bf16.gmra.mxu0 %v1647
    %v1686 = vpop.f32.mrf.mxu0
    %v1687 = vadd.f32 0.0, %v1686
    %v1688 = vpop.f32.mrf.mxu0
    %v1689 = vpop.f32.mrf.mxu0
    %v1690 = vpop.f32.mrf.mxu0
    %1691 = vdwg.mxu0
    %1693 = vrot.lane.b32.xlu0 %v1470, 120
    %v1694 = vpop.permute.xlu0 %1693
    %1695 = vrot.lane.b32.xlu0 %v1472, 88
    %v1696 = vpop.permute.xlu0 %1695
    %v1698 = vsel %vm206, %v1694, 0
    %v1701 = vsel %vm206, %v1696, 0
    %1703 = vmatprep.subr.bf16.mxu0 0
    %1704 = vmatpush1.bf16.xpose.msra.mxu0 0
    %1705 = vmatprep.subr.bf16.mxu0 0
    %1706 = vmatpush1.bf16.xpose.msra.mxu0 0
    %1707 = vmatprep.subr.bf16.mxu0 0
    %1708 = vmatpush1.bf16.xpose.msra.mxu0 0
    %1709 = vmatprep.subr.bf16.mxu0 0
    %1710 = vmatpush1.bf16.xpose.msra.mxu0 0
    %1711 = vmatprep.subr.bf16.mxu0 0
    %1712 = vmatpush1.bf16.xpose.msra.mxu0 0
    %1713 = vmatprep.subr.bf16.mxu0 0
    %1714 = vmatpush1.bf16.xpose.msra.mxu0 0
    %1715 = vmatprep.subr.bf16.mxu0 0
    %1716 = vmatpush1.bf16.xpose.msra.mxu0 0
    %1717 = vmatprep.subr.bf16.mxu0 0
    %1718 = vmatpush1.bf16.xpose.msra.mxu0 %v1701
    %1719 = vmatprep.subr.bf16.mxu0 0
    %1720 = vmatpush2.bf16.xpose.msra.mxu0 0
    %1721 = vmatprep.subr.bf16.mxu0 0
    %1722 = vmatpush2.bf16.xpose.msra.mxu0 0
    %1723 = vmatprep.subr.bf16.mxu0 0
    %1724 = vmatpush2.bf16.xpose.msra.mxu0 0
    %1725 = vmatprep.subr.bf16.mxu0 0
    %1726 = vmatpush2.bf16.xpose.msra.mxu0 0
    %1727 = vmatprep.subr.bf16.mxu0 0
    %1728 = vmatpush2.bf16.xpose.msra.mxu0 0
    %1729 = vmatprep.subr.bf16.mxu0 0
    %1730 = vmatpush2.bf16.xpose.msra.mxu0 0
    %1731 = vmatprep.subr.bf16.mxu0 0
    %1732 = vmatpush2.bf16.xpose.msra.mxu0 0
    %1733 = vmatprep.subr.bf16.mxu0 0
    %1734 = vmatpush2.bf16.xpose.msra.mxu0 0
    %1735 = vmatprep.mubr.bf16.mxu0 0
    %1736 = vmatmul.mubr.bf16.gmra.mxu0 %v1698
    %v1737 = vpop.f32.mrf.mxu0
    %v1738 = vadd.f32 %v196, %v1737
    %v1739 = vpop.f32.mrf.mxu0
    %v1740 = vpop.f32.mrf.mxu0
    %v1741 = vpop.f32.mrf.mxu0
    %1742 = vdwg.mxu0
    %1744 = vrot.lane.b32.xlu0 %v1471, 120
    %v1745 = vpop.permute.xlu0 %1744
    %1746 = vrot.lane.b32.xlu0 %v1473, 88
    %v1747 = vpop.permute.xlu0 %1746
    %v1749 = vsel %vm206, %v1745, 0
    %v1752 = vsel %vm206, %v1747, 0
    %1754 = vmatprep.subr.bf16.mxu0 0
    %1755 = vmatpush1.bf16.xpose.msra.mxu0 0
    %1756 = vmatprep.subr.bf16.mxu0 0
    %1757 = vmatpush1.bf16.xpose.msra.mxu0 0
    %1758 = vmatprep.subr.bf16.mxu0 0
    %1759 = vmatpush1.bf16.xpose.msra.mxu0 0
    %1760 = vmatprep.subr.bf16.mxu0 0
    %1761 = vmatpush1.bf16.xpose.msra.mxu0 0
    %1762 = vmatprep.subr.bf16.mxu0 0
    %1763 = vmatpush1.bf16.xpose.msra.mxu0 0
    %1764 = vmatprep.subr.bf16.mxu0 0
    %1765 = vmatpush1.bf16.xpose.msra.mxu0 0
    %1766 = vmatprep.subr.bf16.mxu0 0
    %1767 = vmatpush1.bf16.xpose.msra.mxu0 0
    %1768 = vmatprep.subr.bf16.mxu0 0
    %1769 = vmatpush1.bf16.xpose.msra.mxu0 %v1752
    %1770 = vmatprep.subr.bf16.mxu0 0
    %1771 = vmatpush2.bf16.xpose.msra.mxu0 0
    %1772 = vmatprep.subr.bf16.mxu0 0
    %1773 = vmatpush2.bf16.xpose.msra.mxu0 0
    %1774 = vmatprep.subr.bf16.mxu0 0
    %1775 = vmatpush2.bf16.xpose.msra.mxu0 0
    %1776 = vmatprep.subr.bf16.mxu0 0
    %1777 = vmatpush2.bf16.xpose.msra.mxu0 0
    %1778 = vmatprep.subr.bf16.mxu0 0
    %1779 = vmatpush2.bf16.xpose.msra.mxu0 0
    %1780 = vmatprep.subr.bf16.mxu0 0
    %1781 = vmatpush2.bf16.xpose.msra.mxu0 0
    %1782 = vmatprep.subr.bf16.mxu0 0
    %1783 = vmatpush2.bf16.xpose.msra.mxu0 0
    %1784 = vmatprep.subr.bf16.mxu0 0
    %1785 = vmatpush2.bf16.xpose.msra.mxu0 0
    %1786 = vmatprep.mubr.bf16.mxu0 0
    %1787 = vmatmul.mubr.bf16.gmra.mxu0 %v1749
    %v1788 = vpop.f32.mrf.mxu0
    %v1789 = vadd.f32 %v200, %v1788
    %v1790 = vpop.f32.mrf.mxu0
    %v1791 = vpop.f32.mrf.mxu0
    %v1792 = vpop.f32.mrf.mxu0
    %1793 = vdwg.mxu0
    %v1794 = vsel %vm206, %v1738, -inf
    %1795 = vmax.xlane.f32.xlu0 %v1794
    %v1796 = vpop.xlane.xlu0 %1795
    %v1797 = vsel %vm206, %v1789, -inf
    %1798 = vmax.xlane.f32.xlu0 %v1797
    %v1799 = vpop.xlane.xlu0 %1798
    %v1800 = vsub.f32 %v1738, %v1796
    %v1801 = vsub.f32 %v1789, %v1799
    %v1802 = vmul.f32 %v1800, 1.442695
    %v1803 = vpow.pop %v1802
    %v1804 = vmul.f32 %v1801, 1.442695
    %v1805 = vpow.pop %v1804
    %v1806 = vsel %vm206, %v1803, 0.0
    %1807 = vadd.xlane.f32.xlu0 %v1806
    %v1808 = vpop.xlane.xlu0 %1807
    %v1809 = vsel %vm206, %v1805, 0.0
    %1810 = vadd.xlane.f32.xlu0 %v1809
    %v1811 = vpop.xlane.xlu0 %1810
    %v1812 = vrcp.pop %v1808
    %v1813 = vrcp.pop %v1811
    %v1814 = vmul.f32 %v1803, %v1812
    %v1815 = vmul.f32 %v1805, %v1813
    %v1816 = vpack.c.bf16 %v1814, %v1814
    %v1817 = vpack.c.bf16 %v1815, %v1815
    %1818 = vrot.lane.b32.xlu0 %v1472, 56
    %v1819 = vpop.permute.xlu0 %1818
    %v1821 = vsel %vm206, %v1816, 0
    %v1824 = vsel %vm331, %v1819, 0
    %1826 = vmatprep.subr.bf16.mxu0 0
    %1827 = vmatpush1.bf16.msra.mxu0 0
    %1828 = vmatprep.subr.bf16.mxu0 0
    %1829 = vmatpush1.bf16.msra.mxu0 0
    %1830 = vmatprep.subr.bf16.mxu0 0
    %1831 = vmatpush1.bf16.msra.mxu0 0
    %1832 = vmatprep.subr.bf16.mxu0 0
    %1833 = vmatpush1.bf16.msra.mxu0 0
    %1834 = vmatprep.subr.bf16.mxu0 0
    %1835 = vmatpush1.bf16.msra.mxu0 0
    %1836 = vmatprep.subr.bf16.mxu0 0
    %1837 = vmatpush1.bf16.msra.mxu0 0
    %1838 = vmatprep.subr.bf16.mxu0 0
    %1839 = vmatpush1.bf16.msra.mxu0 0
    %1840 = vmatprep.subr.bf16.mxu0 0
    %1841 = vmatpush1.bf16.msra.mxu0 %v1824
    %1842 = vmatprep.subr.bf16.mxu0 0
    %1843 = vmatpush2.bf16.msra.mxu0 0
    %1844 = vmatprep.subr.bf16.mxu0 0
    %1845 = vmatpush2.bf16.msra.mxu0 0
    %1846 = vmatprep.subr.bf16.mxu0 0
    %1847 = vmatpush2.bf16.msra.mxu0 0
    %1848 = vmatprep.subr.bf16.mxu0 0
    %1849 = vmatpush2.bf16.msra.mxu0 0
    %1850 = vmatprep.subr.bf16.mxu0 0
    %1851 = vmatpush2.bf16.msra.mxu0 0
    %1852 = vmatprep.subr.bf16.mxu0 0
    %1853 = vmatpush2.bf16.msra.mxu0 0
    %1854 = vmatprep.subr.bf16.mxu0 0
    %1855 = vmatpush2.bf16.msra.mxu0 0
    %1856 = vmatprep.subr.bf16.mxu0 0
    %1857 = vmatpush2.bf16.msra.mxu0 0
    %1858 = vmatprep.mubr.bf16.mxu0 0
    %1859 = vmatmul.mubr.bf16.gmra.mxu0 %v1821
    %v1860 = vpop.f32.mrf.mxu0
    %v1861 = vadd.f32 0.0, %v1860
    %v1862 = vpop.f32.mrf.mxu0
    %v1863 = vpop.f32.mrf.mxu0
    %v1864 = vpop.f32.mrf.mxu0
    %1865 = vdwg.mxu0
    %1866 = vrot.lane.b32.xlu0 %v1473, 56
    %v1867 = vpop.permute.xlu0 %1866
    %v1869 = vsel %vm206, %v1817, 0
    %v1872 = vsel %vm331, %v1867, 0
    %1874 = vmatprep.subr.bf16.mxu0 0
    %1875 = vmatpush1.bf16.msra.mxu0 0
    %1876 = vmatprep.subr.bf16.mxu0 0
    %1877 = vmatpush1.bf16.msra.mxu0 0
    %1878 = vmatprep.subr.bf16.mxu0 0
    %1879 = vmatpush1.bf16.msra.mxu0 0
    %1880 = vmatprep.subr.bf16.mxu0 0
    %1881 = vmatpush1.bf16.msra.mxu0 0
    %1882 = vmatprep.subr.bf16.mxu0 0
    %1883 = vmatpush1.bf16.msra.mxu0 0
    %1884 = vmatprep.subr.bf16.mxu0 0
    %1885 = vmatpush1.bf16.msra.mxu0 0
    %1886 = vmatprep.subr.bf16.mxu0 0
    %1887 = vmatpush1.bf16.msra.mxu0 0
    %1888 = vmatprep.subr.bf16.mxu0 0
    %1889 = vmatpush1.bf16.msra.mxu0 %v1872
    %1890 = vmatprep.subr.bf16.mxu0 0
    %1891 = vmatpush2.bf16.msra.mxu0 0
    %1892 = vmatprep.subr.bf16.mxu0 0
    %1893 = vmatpush2.bf16.msra.mxu0 0
    %1894 = vmatprep.subr.bf16.mxu0 0
    %1895 = vmatpush2.bf16.msra.mxu0 0
    %1896 = vmatprep.subr.bf16.mxu0 0
    %1897 = vmatpush2.bf16.msra.mxu0 0
    %1898 = vmatprep.subr.bf16.mxu0 0
    %1899 = vmatpush2.bf16.msra.mxu0 0
    %1900 = vmatprep.subr.bf16.mxu0 0
    %1901 = vmatpush2.bf16.msra.mxu0 0
    %1902 = vmatprep.subr.bf16.mxu0 0
    %1903 = vmatpush2.bf16.msra.mxu0 0
    %1904 = vmatprep.subr.bf16.mxu0 0
    %1905 = vmatpush2.bf16.msra.mxu0 0
    %1906 = vmatprep.mubr.bf16.mxu0 0
    %1907 = vmatmul.mubr.bf16.gmra.mxu0 %v1869
    %v1908 = vpop.f32.mrf.mxu0
    %v1909 = vadd.f32 0.0, %v1908
    %v1910 = vpop.f32.mrf.mxu0
    %v1911 = vpop.f32.mrf.mxu0
    %v1912 = vpop.f32.mrf.mxu0
    %1913 = vdwg.mxu0
    %1914 = vrot.lane.b32.xlu0 %v1470, 112
    %v1915 = vpop.permute.xlu0 %1914
    %1916 = vrot.lane.b32.xlu0 %v1472, 80
    %v1917 = vpop.permute.xlu0 %1916
    %v1919 = vsel %vm206, %v1915, 0
    %v1922 = vsel %vm206, %v1917, 0
    %1924 = vmatprep.subr.bf16.mxu0 0
    %1925 = vmatpush1.bf16.xpose.msra.mxu0 0
    %1926 = vmatprep.subr.bf16.mxu0 0
    %1927 = vmatpush1.bf16.xpose.msra.mxu0 0
    %1928 = vmatprep.subr.bf16.mxu0 0
    %1929 = vmatpush1.bf16.xpose.msra.mxu0 0
    %1930 = vmatprep.subr.bf16.mxu0 0
    %1931 = vmatpush1.bf16.xpose.msra.mxu0 0
    %1932 = vmatprep.subr.bf16.mxu0 0
    %1933 = vmatpush1.bf16.xpose.msra.mxu0 0
    %1934 = vmatprep.subr.bf16.mxu0 0
    %1935 = vmatpush1.bf16.xpose.msra.mxu0 0
    %1936 = vmatprep.subr.bf16.mxu0 0
    %1937 = vmatpush1.bf16.xpose.msra.mxu0 0
    %1938 = vmatprep.subr.bf16.mxu0 0
    %1939 = vmatpush1.bf16.xpose.msra.mxu0 %v1922
    %1940 = vmatprep.subr.bf16.mxu0 0
    %1941 = vmatpush2.bf16.xpose.msra.mxu0 0
    %1942 = vmatprep.subr.bf16.mxu0 0
    %1943 = vmatpush2.bf16.xpose.msra.mxu0 0
    %1944 = vmatprep.subr.bf16.mxu0 0
    %1945 = vmatpush2.bf16.xpose.msra.mxu0 0
    %1946 = vmatprep.subr.bf16.mxu0 0
    %1947 = vmatpush2.bf16.xpose.msra.mxu0 0
    %1948 = vmatprep.subr.bf16.mxu0 0
    %1949 = vmatpush2.bf16.xpose.msra.mxu0 0
    %1950 = vmatprep.subr.bf16.mxu0 0
    %1951 = vmatpush2.bf16.xpose.msra.mxu0 0
    %1952 = vmatprep.subr.bf16.mxu0 0
    %1953 = vmatpush2.bf16.xpose.msra.mxu0 0
    %1954 = vmatprep.subr.bf16.mxu0 0
    %1955 = vmatpush2.bf16.xpose.msra.mxu0 0
    %1956 = vmatprep.mubr.bf16.mxu0 0
    %1957 = vmatmul.mubr.bf16.gmra.mxu0 %v1919
    %v1958 = vpop.f32.mrf.mxu0
    %v1959 = vadd.f32 %v196, %v1958
    %v1960 = vpop.f32.mrf.mxu0
    %v1961 = vpop.f32.mrf.mxu0
    %v1962 = vpop.f32.mrf.mxu0
    %1963 = vdwg.mxu0
    %1964 = vrot.lane.b32.xlu0 %v1471, 112
    %v1965 = vpop.permute.xlu0 %1964
    %1966 = vrot.lane.b32.xlu0 %v1473, 80
    %v1967 = vpop.permute.xlu0 %1966
    %v1969 = vsel %vm206, %v1965, 0
    %v1972 = vsel %vm206, %v1967, 0
    %1974 = vmatprep.subr.bf16.mxu0 0
    %1975 = vmatpush1.bf16.xpose.msra.mxu0 0
    %1976 = vmatprep.subr.bf16.mxu0 0
    %1977 = vmatpush1.bf16.xpose.msra.mxu0 0
    %1978 = vmatprep.subr.bf16.mxu0 0
    %1979 = vmatpush1.bf16.xpose.msra.mxu0 0
    %1980 = vmatprep.subr.bf16.mxu0 0
    %1981 = vmatpush1.bf16.xpose.msra.mxu0 0
    %1982 = vmatprep.subr.bf16.mxu0 0
    %1983 = vmatpush1.bf16.xpose.msra.mxu0 0
    %1984 = vmatprep.subr.bf16.mxu0 0
    %1985 = vmatpush1.bf16.xpose.msra.mxu0 0
    %1986 = vmatprep.subr.bf16.mxu0 0
    %1987 = vmatpush1.bf16.xpose.msra.mxu0 0
    %1988 = vmatprep.subr.bf16.mxu0 0
    %1989 = vmatpush1.bf16.xpose.msra.mxu0 %v1972
    %1990 = vmatprep.subr.bf16.mxu0 0
    %1991 = vmatpush2.bf16.xpose.msra.mxu0 0
    %1992 = vmatprep.subr.bf16.mxu0 0
    %1993 = vmatpush2.bf16.xpose.msra.mxu0 0
    %1994 = vmatprep.subr.bf16.mxu0 0
    %1995 = vmatpush2.bf16.xpose.msra.mxu0 0
    %1996 = vmatprep.subr.bf16.mxu0 0
    %1997 = vmatpush2.bf16.xpose.msra.mxu0 0
    %1998 = vmatprep.subr.bf16.mxu0 0
    %1999 = vmatpush2.bf16.xpose.msra.mxu0 0
    %2000 = vmatprep.subr.bf16.mxu0 0
    %2001 = vmatpush2.bf16.xpose.msra.mxu0 0
    %2002 = vmatprep.subr.bf16.mxu0 0
    %2003 = vmatpush2.bf16.xpose.msra.mxu0 0
    %2004 = vmatprep.subr.bf16.mxu0 0
    %2005 = vmatpush2.bf16.xpose.msra.mxu0 0
    %2006 = vmatprep.mubr.bf16.mxu0 0
    %2007 = vmatmul.mubr.bf16.gmra.mxu0 %v1969
    %v2008 = vpop.f32.mrf.mxu0
    %v2009 = vadd.f32 %v200, %v2008
    %v2010 = vpop.f32.mrf.mxu0
    %v2011 = vpop.f32.mrf.mxu0
    %v2012 = vpop.f32.mrf.mxu0
    %2013 = vdwg.mxu0
    %v2014 = vsel %vm206, %v1959, -inf
    %2015 = vmax.xlane.f32.xlu0 %v2014
    %v2016 = vpop.xlane.xlu0 %2015
    %v2017 = vsel %vm206, %v2009, -inf
    %2018 = vmax.xlane.f32.xlu0 %v2017
    %v2019 = vpop.xlane.xlu0 %2018
    %v2020 = vsub.f32 %v1959, %v2016
    %v2021 = vsub.f32 %v2009, %v2019
    %v2022 = vmul.f32 %v2020, 1.442695
    %v2023 = vpow.pop %v2022
    %v2024 = vmul.f32 %v2021, 1.442695
    %v2025 = vpow.pop %v2024
    %v2026 = vsel %vm206, %v2023, 0.0
    %2027 = vadd.xlane.f32.xlu0 %v2026
    %v2028 = vpop.xlane.xlu0 %2027
    %v2029 = vsel %vm206, %v2025, 0.0
    %2030 = vadd.xlane.f32.xlu0 %v2029
    %v2031 = vpop.xlane.xlu0 %2030
    %v2032 = vrcp.pop %v2028
    %v2033 = vrcp.pop %v2031
    %v2034 = vmul.f32 %v2023, %v2032
    %v2035 = vmul.f32 %v2025, %v2033
    %v2036 = vpack.c.bf16 %v2034, %v2034
    %v2037 = vpack.c.bf16 %v2035, %v2035
    %2038 = vrot.lane.b32.xlu0 %v1472, 48
    %v2039 = vpop.permute.xlu0 %2038
    %v2041 = vsel %vm206, %v2036, 0
    %v2044 = vsel %vm331, %v2039, 0
    %2046 = vmatprep.subr.bf16.mxu0 0
    %2047 = vmatpush1.bf16.msra.mxu0 0
    %2048 = vmatprep.subr.bf16.mxu0 0
    %2049 = vmatpush1.bf16.msra.mxu0 0
    %2050 = vmatprep.subr.bf16.mxu0 0
    %2051 = vmatpush1.bf16.msra.mxu0 0
    %2052 = vmatprep.subr.bf16.mxu0 0
    %2053 = vmatpush1.bf16.msra.mxu0 0
    %2054 = vmatprep.subr.bf16.mxu0 0
    %2055 = vmatpush1.bf16.msra.mxu0 0
    %2056 = vmatprep.subr.bf16.mxu0 0
    %2057 = vmatpush1.bf16.msra.mxu0 0
    %2058 = vmatprep.subr.bf16.mxu0 0
    %2059 = vmatpush1.bf16.msra.mxu0 0
    %2060 = vmatprep.subr.bf16.mxu0 0
    %2061 = vmatpush1.bf16.msra.mxu0 %v2044
    %2062 = vmatprep.subr.bf16.mxu0 0
    %2063 = vmatpush2.bf16.msra.mxu0 0
    %2064 = vmatprep.subr.bf16.mxu0 0
    %2065 = vmatpush2.bf16.msra.mxu0 0
    %2066 = vmatprep.subr.bf16.mxu0 0
    %2067 = vmatpush2.bf16.msra.mxu0 0
    %2068 = vmatprep.subr.bf16.mxu0 0
    %2069 = vmatpush2.bf16.msra.mxu0 0
    %2070 = vmatprep.subr.bf16.mxu0 0
    %2071 = vmatpush2.bf16.msra.mxu0 0
    %2072 = vmatprep.subr.bf16.mxu0 0
    %2073 = vmatpush2.bf16.msra.mxu0 0
    %2074 = vmatprep.subr.bf16.mxu0 0
    %2075 = vmatpush2.bf16.msra.mxu0 0
    %2076 = vmatprep.subr.bf16.mxu0 0
    %2077 = vmatpush2.bf16.msra.mxu0 0
    %2078 = vmatprep.mubr.bf16.mxu0 0
    %2079 = vmatmul.mubr.bf16.gmra.mxu0 %v2041
    %v2080 = vpop.f32.mrf.mxu0
    %v2081 = vadd.f32 0.0, %v2080
    %v2082 = vpop.f32.mrf.mxu0
    %v2083 = vpop.f32.mrf.mxu0
    %v2084 = vpop.f32.mrf.mxu0
    %2085 = vdwg.mxu0
    %2086 = vrot.lane.b32.xlu0 %v1473, 48
    %v2087 = vpop.permute.xlu0 %2086
    %v2089 = vsel %vm206, %v2037, 0
    %v2092 = vsel %vm331, %v2087, 0
    %2094 = vmatprep.subr.bf16.mxu0 0
    %2095 = vmatpush1.bf16.msra.mxu0 0
    %2096 = vmatprep.subr.bf16.mxu0 0
    %2097 = vmatpush1.bf16.msra.mxu0 0
    %2098 = vmatprep.subr.bf16.mxu0 0
    %2099 = vmatpush1.bf16.msra.mxu0 0
    %2100 = vmatprep.subr.bf16.mxu0 0
    %2101 = vmatpush1.bf16.msra.mxu0 0
    %2102 = vmatprep.subr.bf16.mxu0 0
    %2103 = vmatpush1.bf16.msra.mxu0 0
    %2104 = vmatprep.subr.bf16.mxu0 0
    %2105 = vmatpush1.bf16.msra.mxu0 0
    %2106 = vmatprep.subr.bf16.mxu0 0
    %2107 = vmatpush1.bf16.msra.mxu0 0
    %2108 = vmatprep.subr.bf16.mxu0 0
    %2109 = vmatpush1.bf16.msra.mxu0 %v2092
    %2110 = vmatprep.subr.bf16.mxu0 0
    %2111 = vmatpush2.bf16.msra.mxu0 0
    %2112 = vmatprep.subr.bf16.mxu0 0
    %2113 = vmatpush2.bf16.msra.mxu0 0
    %2114 = vmatprep.subr.bf16.mxu0 0
    %2115 = vmatpush2.bf16.msra.mxu0 0
    %2116 = vmatprep.subr.bf16.mxu0 0
    %2117 = vmatpush2.bf16.msra.mxu0 0
    %2118 = vmatprep.subr.bf16.mxu0 0
    %2119 = vmatpush2.bf16.msra.mxu0 0
    %2120 = vmatprep.subr.bf16.mxu0 0
    %2121 = vmatpush2.bf16.msra.mxu0 0
    %2122 = vmatprep.subr.bf16.mxu0 0
    %2123 = vmatpush2.bf16.msra.mxu0 0
    %2124 = vmatprep.subr.bf16.mxu0 0
    %2125 = vmatpush2.bf16.msra.mxu0 0
    %2126 = vmatprep.mubr.bf16.mxu0 0
    %2127 = vmatmul.mubr.bf16.gmra.mxu0 %v2089
    %v2128 = vpop.f32.mrf.mxu0
    %v2129 = vadd.f32 0.0, %v2128
    %v2130 = vpop.f32.mrf.mxu0
    %v2131 = vpop.f32.mrf.mxu0
    %v2132 = vpop.f32.mrf.mxu0
    %2133 = vdwg.mxu0
    %2134 = vrot.lane.b32.xlu0 %v1470, 104
    %v2135 = vpop.permute.xlu0 %2134
    %2136 = vrot.lane.b32.xlu0 %v1472, 72
    %v2137 = vpop.permute.xlu0 %2136
    %v2139 = vsel %vm206, %v2135, 0
    %v2142 = vsel %vm206, %v2137, 0
    %2144 = vmatprep.subr.bf16.mxu0 0
    %2145 = vmatpush1.bf16.xpose.msra.mxu0 0
    %2146 = vmatprep.subr.bf16.mxu0 0
    %2147 = vmatpush1.bf16.xpose.msra.mxu0 0
    %2148 = vmatprep.subr.bf16.mxu0 0
    %2149 = vmatpush1.bf16.xpose.msra.mxu0 0
    %2150 = vmatprep.subr.bf16.mxu0 0
    %2151 = vmatpush1.bf16.xpose.msra.mxu0 0
    %2152 = vmatprep.subr.bf16.mxu0 0
    %2153 = vmatpush1.bf16.xpose.msra.mxu0 0
    %2154 = vmatprep.subr.bf16.mxu0 0
    %2155 = vmatpush1.bf16.xpose.msra.mxu0 0
    %2156 = vmatprep.subr.bf16.mxu0 0
    %2157 = vmatpush1.bf16.xpose.msra.mxu0 0
    %2158 = vmatprep.subr.bf16.mxu0 0
    %2159 = vmatpush1.bf16.xpose.msra.mxu0 %v2142
    %2160 = vmatprep.subr.bf16.mxu0 0
    %2161 = vmatpush2.bf16.xpose.msra.mxu0 0
    %2162 = vmatprep.subr.bf16.mxu0 0
    %2163 = vmatpush2.bf16.xpose.msra.mxu0 0
    %2164 = vmatprep.subr.bf16.mxu0 0
    %2165 = vmatpush2.bf16.xpose.msra.mxu0 0
    %2166 = vmatprep.subr.bf16.mxu0 0
    %2167 = vmatpush2.bf16.xpose.msra.mxu0 0
    %2168 = vmatprep.subr.bf16.mxu0 0
    %2169 = vmatpush2.bf16.xpose.msra.mxu0 0
    %2170 = vmatprep.subr.bf16.mxu0 0
    %2171 = vmatpush2.bf16.xpose.msra.mxu0 0
    %2172 = vmatprep.subr.bf16.mxu0 0
    %2173 = vmatpush2.bf16.xpose.msra.mxu0 0
    %2174 = vmatprep.subr.bf16.mxu0 0
    %2175 = vmatpush2.bf16.xpose.msra.mxu0 0
    %2176 = vmatprep.mubr.bf16.mxu0 0
    %2177 = vmatmul.mubr.bf16.gmra.mxu0 %v2139
    %v2178 = vpop.f32.mrf.mxu0
    %v2179 = vadd.f32 %v196, %v2178
    %v2180 = vpop.f32.mrf.mxu0
    %v2181 = vpop.f32.mrf.mxu0
    %v2182 = vpop.f32.mrf.mxu0
    %2183 = vdwg.mxu0
    %2184 = vrot.lane.b32.xlu0 %v1471, 104
    %v2185 = vpop.permute.xlu0 %2184
    %2186 = vrot.lane.b32.xlu0 %v1473, 72
    %v2187 = vpop.permute.xlu0 %2186
    %v2189 = vsel %vm206, %v2185, 0
    %v2192 = vsel %vm206, %v2187, 0
    %2194 = vmatprep.subr.bf16.mxu0 0
    %2195 = vmatpush1.bf16.xpose.msra.mxu0 0
    %2196 = vmatprep.subr.bf16.mxu0 0
    %2197 = vmatpush1.bf16.xpose.msra.mxu0 0
    %2198 = vmatprep.subr.bf16.mxu0 0
    %2199 = vmatpush1.bf16.xpose.msra.mxu0 0
    %2200 = vmatprep.subr.bf16.mxu0 0
    %2201 = vmatpush1.bf16.xpose.msra.mxu0 0
    %2202 = vmatprep.subr.bf16.mxu0 0
    %2203 = vmatpush1.bf16.xpose.msra.mxu0 0
    %2204 = vmatprep.subr.bf16.mxu0 0
    %2205 = vmatpush1.bf16.xpose.msra.mxu0 0
    %2206 = vmatprep.subr.bf16.mxu0 0
    %2207 = vmatpush1.bf16.xpose.msra.mxu0 0
    %2208 = vmatprep.subr.bf16.mxu0 0
    %2209 = vmatpush1.bf16.xpose.msra.mxu0 %v2192
    %2210 = vmatprep.subr.bf16.mxu0 0
    %2211 = vmatpush2.bf16.xpose.msra.mxu0 0
    %2212 = vmatprep.subr.bf16.mxu0 0
    %2213 = vmatpush2.bf16.xpose.msra.mxu0 0
    %2214 = vmatprep.subr.bf16.mxu0 0
    %2215 = vmatpush2.bf16.xpose.msra.mxu0 0
    %2216 = vmatprep.subr.bf16.mxu0 0
    %2217 = vmatpush2.bf16.xpose.msra.mxu0 0
    %2218 = vmatprep.subr.bf16.mxu0 0
    %2219 = vmatpush2.bf16.xpose.msra.mxu0 0
    %2220 = vmatprep.subr.bf16.mxu0 0
    %2221 = vmatpush2.bf16.xpose.msra.mxu0 0
    %2222 = vmatprep.subr.bf16.mxu0 0
    %2223 = vmatpush2.bf16.xpose.msra.mxu0 0
    %2224 = vmatprep.subr.bf16.mxu0 0
    %2225 = vmatpush2.bf16.xpose.msra.mxu0 0
    %2226 = vmatprep.mubr.bf16.mxu0 0
    %2227 = vmatmul.mubr.bf16.gmra.mxu0 %v2189
    %v2228 = vpop.f32.mrf.mxu0
    %v2229 = vadd.f32 %v200, %v2228
    %v2230 = vpop.f32.mrf.mxu0
    %v2231 = vpop.f32.mrf.mxu0
    %v2232 = vpop.f32.mrf.mxu0
    %2233 = vdwg.mxu0
    %v2234 = vsel %vm206, %v2179, -inf
    %2235 = vmax.xlane.f32.xlu0 %v2234
    %v2236 = vpop.xlane.xlu0 %2235
    %v2237 = vsel %vm206, %v2229, -inf
    %2238 = vmax.xlane.f32.xlu0 %v2237
    %v2239 = vpop.xlane.xlu0 %2238
    %v2240 = vsub.f32 %v2179, %v2236
    %v2241 = vsub.f32 %v2229, %v2239
    %v2242 = vmul.f32 %v2240, 1.442695
    %v2243 = vpow.pop %v2242
    %v2244 = vmul.f32 %v2241, 1.442695
    %v2245 = vpow.pop %v2244
    %v2246 = vsel %vm206, %v2243, 0.0
    %2247 = vadd.xlane.f32.xlu0 %v2246
    %v2248 = vpop.xlane.xlu0 %2247
    %v2249 = vsel %vm206, %v2245, 0.0
    %2250 = vadd.xlane.f32.xlu0 %v2249
    %v2251 = vpop.xlane.xlu0 %2250
    %v2252 = vrcp.pop %v2248
    %v2253 = vrcp.pop %v2251
    %v2254 = vmul.f32 %v2243, %v2252
    %v2255 = vmul.f32 %v2245, %v2253
    %v2256 = vpack.c.bf16 %v2254, %v2254
    %v2257 = vpack.c.bf16 %v2255, %v2255
    %2258 = vrot.lane.b32.xlu0 %v1472, 40
    %v2259 = vpop.permute.xlu0 %2258
    %v2261 = vsel %vm206, %v2256, 0
    %v2264 = vsel %vm331, %v2259, 0
    %2266 = vmatprep.subr.bf16.mxu0 0
    %2267 = vmatpush1.bf16.msra.mxu0 0
    %2268 = vmatprep.subr.bf16.mxu0 0
    %2269 = vmatpush1.bf16.msra.mxu0 0
    %2270 = vmatprep.subr.bf16.mxu0 0
    %2271 = vmatpush1.bf16.msra.mxu0 0
    %2272 = vmatprep.subr.bf16.mxu0 0
    %2273 = vmatpush1.bf16.msra.mxu0 0
    %2274 = vmatprep.subr.bf16.mxu0 0
    %2275 = vmatpush1.bf16.msra.mxu0 0
    %2276 = vmatprep.subr.bf16.mxu0 0
    %2277 = vmatpush1.bf16.msra.mxu0 0
    %2278 = vmatprep.subr.bf16.mxu0 0
    %2279 = vmatpush1.bf16.msra.mxu0 0
    %2280 = vmatprep.subr.bf16.mxu0 0
    %2281 = vmatpush1.bf16.msra.mxu0 %v2264
    %2282 = vmatprep.subr.bf16.mxu0 0
    %2283 = vmatpush2.bf16.msra.mxu0 0
    %2284 = vmatprep.subr.bf16.mxu0 0
    %2285 = vmatpush2.bf16.msra.mxu0 0
    %2286 = vmatprep.subr.bf16.mxu0 0
    %2287 = vmatpush2.bf16.msra.mxu0 0
    %2288 = vmatprep.subr.bf16.mxu0 0
    %2289 = vmatpush2.bf16.msra.mxu0 0
    %2290 = vmatprep.subr.bf16.mxu0 0
    %2291 = vmatpush2.bf16.msra.mxu0 0
    %2292 = vmatprep.subr.bf16.mxu0 0
    %2293 = vmatpush2.bf16.msra.mxu0 0
    %2294 = vmatprep.subr.bf16.mxu0 0
    %2295 = vmatpush2.bf16.msra.mxu0 0
    %2296 = vmatprep.subr.bf16.mxu0 0
    %2297 = vmatpush2.bf16.msra.mxu0 0
    %2298 = vmatprep.mubr.bf16.mxu0 0
    %2299 = vmatmul.mubr.bf16.gmra.mxu0 %v2261
    %v2300 = vpop.f32.mrf.mxu0
    %v2301 = vadd.f32 0.0, %v2300
    %v2302 = vpop.f32.mrf.mxu0
    %v2303 = vpop.f32.mrf.mxu0
    %v2304 = vpop.f32.mrf.mxu0
    %2305 = vdwg.mxu0
    %2306 = vrot.lane.b32.xlu0 %v1473, 40
    %v2307 = vpop.permute.xlu0 %2306
    %v2309 = vsel %vm206, %v2257, 0
    %v2312 = vsel %vm331, %v2307, 0
    %2314 = vmatprep.subr.bf16.mxu0 0
    %2315 = vmatpush1.bf16.msra.mxu0 0
    %2316 = vmatprep.subr.bf16.mxu0 0
    %2317 = vmatpush1.bf16.msra.mxu0 0
    %2318 = vmatprep.subr.bf16.mxu0 0
    %2319 = vmatpush1.bf16.msra.mxu0 0
    %2320 = vmatprep.subr.bf16.mxu0 0
    %2321 = vmatpush1.bf16.msra.mxu0 0
    %2322 = vmatprep.subr.bf16.mxu0 0
    %2323 = vmatpush1.bf16.msra.mxu0 0
    %2324 = vmatprep.subr.bf16.mxu0 0
    %2325 = vmatpush1.bf16.msra.mxu0 0
    %2326 = vmatprep.subr.bf16.mxu0 0
    %2327 = vmatpush1.bf16.msra.mxu0 0
    %2328 = vmatprep.subr.bf16.mxu0 0
    %2329 = vmatpush1.bf16.msra.mxu0 %v2312
    %2330 = vmatprep.subr.bf16.mxu0 0
    %2331 = vmatpush2.bf16.msra.mxu0 0
    %2332 = vmatprep.subr.bf16.mxu0 0
    %2333 = vmatpush2.bf16.msra.mxu0 0
    %2334 = vmatprep.subr.bf16.mxu0 0
    %2335 = vmatpush2.bf16.msra.mxu0 0
    %2336 = vmatprep.subr.bf16.mxu0 0
    %2337 = vmatpush2.bf16.msra.mxu0 0
    %2338 = vmatprep.subr.bf16.mxu0 0
    %2339 = vmatpush2.bf16.msra.mxu0 0
    %2340 = vmatprep.subr.bf16.mxu0 0
    %2341 = vmatpush2.bf16.msra.mxu0 0
    %2342 = vmatprep.subr.bf16.mxu0 0
    %2343 = vmatpush2.bf16.msra.mxu0 0
    %2344 = vmatprep.subr.bf16.mxu0 0
    %2345 = vmatpush2.bf16.msra.mxu0 0
    %2346 = vmatprep.mubr.bf16.mxu0 0
    %2347 = vmatmul.mubr.bf16.gmra.mxu0 %v2309
    %v2348 = vpop.f32.mrf.mxu0
    %v2349 = vadd.f32 0.0, %v2348
    %v2350 = vpop.f32.mrf.mxu0
    %v2351 = vpop.f32.mrf.mxu0
    %v2352 = vpop.f32.mrf.mxu0
    %2353 = vdwg.mxu0
    %2356 = vrot.lane.b32.xlu0 %v1861, 8
    %v2357 = vpop.permute.xlu0 %2356
    %2358 = vrot.lane.b32.xlu0 %v1909, 8
    %v2359 = vpop.permute.xlu0 %2358
    %2364 = vrot.lane.b32.xlu0 %v2081, 16
    %v2365 = vpop.permute.xlu0 %2364
    %2366 = vrot.lane.b32.xlu0 %v2129, 16
    %v2367 = vpop.permute.xlu0 %2366
    %2372 = vrot.lane.b32.xlu0 %v2301, 24
    %v2373 = vpop.permute.xlu0 %2372
    %2374 = vrot.lane.b32.xlu0 %v2349, 24
    %v2375 = vpop.permute.xlu0 %2374
    %v2378 = vsel %vm206, %v1639, %v2357
    %v2379 = vsel %vm206, %v1687, %v2359
    %v2380 = vsel %vm1111, %v2378, %v2365
    %v2381 = vsel %vm1111, %v2379, %v2367
    %v2382 = vsel %vm1114, %v2380, %v2373
    %v2383 = vsel %vm1114, %v2381, %v2375
    %s2384 = scalar_lea.vmem %s6, 32
    %v2385 = vld [vmem:[%s2384] sm:$0xff]
    %v2386 = vld [vmem:[%s2384 + $0x8] sm:$0xff]
    %v2387 = vld [vmem:[%s2384 + $0x10] sm:$0xff]
    %v2388 = vld [vmem:[%s2384 + $0x18] sm:$0xff]
    %v2389 = vpack.c.bf16 %v2383, %v2382
    %v2390 = vpack.c.bf16 %v2386, %v2385
    %v2391 = vpack.c.bf16 %v2388, %v2387
    %s2392 = scalar_lea.vmem %s7, 1
    %v2393 = vld [vmem:[%s2392] sm:$0x1]
    %v2395 = vlaneseq
    %v2396 = vshrl.u32 %v2395, 7
    %v2397 = vsub.s32 0, %v2396
    %v2398 = vrot.slane %v2393, %v2397
    %v2401 = vsel %vm59, %v2389, 0
    %2403 = vmatprep.subr.bf16.mxu0 0
    %2404 = vmatpush1.bf16.msra.mxu0 0
    %2405 = vmatprep.subr.bf16.mxu0 0
    %2406 = vmatpush1.bf16.msra.mxu0 0
    %2407 = vmatprep.subr.bf16.mxu0 0
    %2408 = vmatpush1.bf16.msra.mxu0 0
    %2409 = vmatprep.subr.bf16.mxu0 0
    %2410 = vmatpush1.bf16.msra.mxu0 0
    %2411 = vmatprep.subr.bf16.mxu0 0
    %2412 = vmatpush1.bf16.msra.mxu0 0
    %2413 = vmatprep.subr.bf16.mxu0 0
    %2414 = vmatpush1.bf16.msra.mxu0 0
    %2415 = vmatprep.subr.bf16.mxu0 0
    %2416 = vmatpush1.bf16.msra.mxu0 %v2391
    %2417 = vmatprep.subr.bf16.mxu0 0
    %2418 = vmatpush1.bf16.msra.mxu0 %v2390
    %2419 = vmatprep.subr.bf16.mxu0 0
    %2420 = vmatpush2.bf16.msra.mxu0 0
    %2421 = vmatprep.subr.bf16.mxu0 0
    %2422 = vmatpush2.bf16.msra.mxu0 0
    %2423 = vmatprep.subr.bf16.mxu0 0
    %2424 = vmatpush2.bf16.msra.mxu0 0
    %2425 = vmatprep.subr.bf16.mxu0 0
    %2426 = vmatpush2.bf16.msra.mxu0 0
    %2427 = vmatprep.subr.bf16.mxu0 0
    %2428 = vmatpush2.bf16.msra.mxu0 0
    %2429 = vmatprep.subr.bf16.mxu0 0
    %2430 = vmatpush2.bf16.msra.mxu0 0
    %2431 = vmatprep.subr.bf16.mxu0 0
    %2432 = vmatpush2.bf16.msra.mxu0 0
    %2433 = vmatprep.subr.bf16.mxu0 0
    %2434 = vmatpush2.bf16.msra.mxu0 0
    %2435 = vmatprep.mubr.bf16.mxu0 0
    %2436 = vmatmul.mubr.bf16.gmra.mxu0 %v2401
    %v2437 = vpop.f32.mrf.mxu0
    %v2438 = vadd.f32 %v2398, %v2437
    %v2439 = vpop.f32.mrf.mxu0
    %v2440 = vpop.f32.mrf.mxu0
    %v2441 = vadd.f32 %v2398, %v2440
    %v2442 = vpop.f32.mrf.mxu0
    %2443 = vdwg.mxu0
    %v2444 = vadd.f32 %v2438, %v1406
    %v2445 = vadd.f32 %v2441, %v1407
    %s2446 = scalar_lea.vmem %s8, 1
    %v2447 = vld [vmem:[%s2446] sm:$0x1]
    %s2448 = scalar_lea.vmem %s9, 1
    %v2449 = vld [vmem:[%s2448] sm:$0x1]
    %v2450 = vsel %vm59, %v2444, 0.0
    %2451 = vadd.xlane.f32.xlu0 %v2450
    %v2452 = vpop.xlane.xlu0 %2451
    %v2453 = vsel %vm59, %v2445, 0.0
    %2454 = vadd.xlane.f32.xlu0 %v2453
    %v2455 = vpop.xlane.xlu0 %2454
    %v2456 = vmul.f32 %v2452, %v66
    %v2457 = vmul.f32 %v2455, %v66
    %v2458 = vsub.f32 %v2444, %v2456
    %v2459 = vsub.f32 %v2445, %v2457
    %v2460 = vmul.f32 %v2458, %v2458
    %v2461 = vmul.f32 %v2459, %v2459
    %v2462 = vsel %vm59, %v2460, 0.0
    %2463 = vadd.xlane.f32.xlu0 %v2462
    %v2464 = vpop.xlane.xlu0 %2463
    %v2465 = vsel %vm59, %v2461, 0.0
    %2466 = vadd.xlane.f32.xlu0 %v2465
    %v2467 = vpop.xlane.xlu0 %2466
    %v2468 = vmul.f32 %v2464, %v66
    %v2469 = vmul.f32 %v2467, %v66
    %v2470 = vadd.f32 %v2468, 1e-12
    %v2471 = vadd.f32 %v2469, 1e-12
    %v2472 = vrsqrt.pop %v2470
    %v2473 = vrsqrt.pop %v2471
    %v2474 = vmul.f32 %v2458, %v2472
    %v2475 = vmul.f32 %v2459, %v2473
    %v2477 = vlaneseq
    %v2478 = vshrl.u32 %v2477, 7
    %v2479 = vsub.s32 0, %v2478
    %v2480 = vrot.slane %v2447, %v2479
    %v2482 = vmul.f32 %v2474, %v2480
    %v2483 = vmul.f32 %v2475, %v2480
    %v2485 = vlaneseq
    %v2486 = vshrl.u32 %v2485, 7
    %v2487 = vsub.s32 0, %v2486
    %v2488 = vrot.slane %v2449, %v2487
    %v2490 = vadd.f32 %v2482, %v2488
    %v2491 = vadd.f32 %v2483, %v2488
    %s2492 = scalar_lea.vmem %s10, 32
    %v2493 = vld [vmem:[%s2492] sm:$0xff]
    %v2494 = vld [vmem:[%s2492 + $0x8] sm:$0xff]
    %v2495 = vld [vmem:[%s2492 + $0x10] sm:$0xff]
    %v2496 = vld [vmem:[%s2492 + $0x18] sm:$0xff]
    %v2497 = vpack.c.bf16 %v2491, %v2490
    %v2498 = vpack.c.bf16 %v2494, %v2493
    %v2499 = vpack.c.bf16 %v2496, %v2495
    %s2500 = scalar_lea.vmem %s11, 1
    %v2501 = vld [vmem:[%s2500] sm:$0x1]
    %v2503 = vlaneseq
    %v2504 = vshrl.u32 %v2503, 7
    %v2505 = vsub.s32 0, %v2504
    %v2506 = vrot.slane %v2501, %v2505
    %v2509 = vsel %vm59, %v2497, 0
    %2511 = vmatprep.subr.bf16.mxu0 0
    %2512 = vmatpush1.bf16.msra.mxu0 0
    %2513 = vmatprep.subr.bf16.mxu0 0
    %2514 = vmatpush1.bf16.msra.mxu0 0
    %2515 = vmatprep.subr.bf16.mxu0 0
    %2516 = vmatpush1.bf16.msra.mxu0 0
    %2517 = vmatprep.subr.bf16.mxu0 0
    %2518 = vmatpush1.bf16.msra.mxu0 0
    %2519 = vmatprep.subr.bf16.mxu0 0
    %2520 = vmatpush1.bf16.msra.mxu0 0
    %2521 = vmatprep.subr.bf16.mxu0 0
    %2522 = vmatpush1.bf16.msra.mxu0 0
    %2523 = vmatprep.subr.bf16.mxu0 0
    %2524 = vmatpush1.bf16.msra.mxu0 %v2499
    %2525 = vmatprep.subr.bf16.mxu0 0
    %2526 = vmatpush1.bf16.msra.mxu0 %v2498
    %2527 = vmatprep.subr.bf16.mxu0 0
    %2528 = vmatpush2.bf16.msra.mxu0 0
    %2529 = vmatprep.subr.bf16.mxu0 0
    %2530 = vmatpush2.bf16.msra.mxu0 0
    %2531 = vmatprep.subr.bf16.mxu0 0
    %2532 = vmatpush2.bf16.msra.mxu0 0
    %2533 = vmatprep.subr.bf16.mxu0 0
    %2534 = vmatpush2.bf16.msra.mxu0 0
    %2535 = vmatprep.subr.bf16.mxu0 0
    %2536 = vmatpush2.bf16.msra.mxu0 0
    %2537 = vmatprep.subr.bf16.mxu0 0
    %2538 = vmatpush2.bf16.msra.mxu0 0
    %2539 = vmatprep.subr.bf16.mxu0 0
    %2540 = vmatpush2.bf16.msra.mxu0 0
    %2541 = vmatprep.subr.bf16.mxu0 0
    %2542 = vmatpush2.bf16.msra.mxu0 0
    %2543 = vmatprep.mubr.bf16.mxu0 0
    %2544 = vmatmul.mubr.bf16.gmra.mxu0 %v2509
    %v2545 = vpop.f32.mrf.mxu0
    %v2546 = vadd.f32 %v2506, %v2545
    %v2547 = vpop.f32.mrf.mxu0
    %v2548 = vpop.f32.mrf.mxu0
    %v2549 = vadd.f32 %v2506, %v2548
    %v2550 = vpop.f32.mrf.mxu0
    %2551 = vdwg.mxu0
    %v2552 = vmul.f32 %v2546, %v2546
    %v2553 = vmul.f32 %v2549, %v2549
    %v2554 = vmul.f32 %v2546, %v2552
    %v2555 = vmul.f32 %v2549, %v2553
    %v2556 = vmul.f32 %v2554, 0.044715
    %v2557 = vmul.f32 %v2555, 0.044715
    %v2558 = vadd.f32 %v2546, %v2556
    %v2559 = vadd.f32 %v2549, %v2557
    %v2560 = vmul.f32 %v2558, 0.7978846
    %v2561 = vmul.f32 %v2559, 0.7978846
    %v2562 = vtanh.pop %v2560
    %v2563 = vtanh.pop %v2561
    %v2564 = vadd.f32 %v2562, 1.0
    %v2565 = vadd.f32 %v2563, 1.0
    %v2566 = vmul.f32 %v2564, 0.5
    %v2567 = vmul.f32 %v2565, 0.5
    %v2568 = vmul.f32 %v2546, %v2566
    %v2569 = vmul.f32 %v2549, %v2567
    %s2570 = scalar_lea.vmem %s12, 64
    %v2571 = vld [vmem:[%s2570] sm:$0xff]
    %v2572 = vld [vmem:[%s2570 + $0x8] sm:$0xff]
    %v2573 = vld [vmem:[%s2570 + $0x10] sm:$0xff]
    %v2574 = vld [vmem:[%s2570 + $0x18] sm:$0xff]
    %v2575 = vld [vmem:[%s2570 + $0x20] sm:$0xff]
    %v2576 = vld [vmem:[%s2570 + $0x28] sm:$0xff]
    %v2577 = vld [vmem:[%s2570 + $0x30] sm:$0xff]
    %v2578 = vld [vmem:[%s2570 + $0x38] sm:$0xff]
    %v2579 = vpack.c.bf16 %v2569, %v2568
    %v2580 = vpack.c.bf16 %v2572, %v2571
    %v2581 = vpack.c.bf16 %v2574, %v2573
    %v2582 = vpack.c.bf16 %v2576, %v2575
    %v2583 = vpack.c.bf16 %v2578, %v2577
    %s2584 = scalar_lea.vmem %s13, 1
    %v2585 = vld [vmem:[%s2584] sm:$0x1]
    %v2587 = vlaneseq
    %v2588 = vshrl.u32 %v2587, 7
    %v2589 = vsub.s32 0, %v2588
    %v2590 = vrot.slane %v2585, %v2589
    %v2593 = vsel %vm1317, %v2579, 0
    %2595 = vmatprep.subr.bf16.mxu0 0
    %2596 = vmatpush1.bf16.msra.mxu0 0
    %2597 = vmatprep.subr.bf16.mxu0 0
    %2598 = vmatpush1.bf16.msra.mxu0 0
    %2599 = vmatprep.subr.bf16.mxu0 0
    %2600 = vmatpush1.bf16.msra.mxu0 0
    %2601 = vmatprep.subr.bf16.mxu0 0
    %2602 = vmatpush1.bf16.msra.mxu0 0
    %2603 = vmatprep.subr.bf16.mxu0 0
    %2604 = vmatpush1.bf16.msra.mxu0 %v2583
    %2605 = vmatprep.subr.bf16.mxu0 0
    %2606 = vmatpush1.bf16.msra.mxu0 %v2582
    %2607 = vmatprep.subr.bf16.mxu0 0
    %2608 = vmatpush1.bf16.msra.mxu0 %v2581
    %2609 = vmatprep.subr.bf16.mxu0 0
    %2610 = vmatpush1.bf16.msra.mxu0 %v2580
    %2611 = vmatprep.subr.bf16.mxu0 0
    %2612 = vmatpush2.bf16.msra.mxu0 0
    %2613 = vmatprep.subr.bf16.mxu0 0
    %2614 = vmatpush2.bf16.msra.mxu0 0
    %2615 = vmatprep.subr.bf16.mxu0 0
    %2616 = vmatpush2.bf16.msra.mxu0 0
    %2617 = vmatprep.subr.bf16.mxu0 0
    %2618 = vmatpush2.bf16.msra.mxu0 0
    %2619 = vmatprep.subr.bf16.mxu0 0
    %2620 = vmatpush2.bf16.msra.mxu0 0
    %2621 = vmatprep.subr.bf16.mxu0 0
    %2622 = vmatpush2.bf16.msra.mxu0 0
    %2623 = vmatprep.subr.bf16.mxu0 0
    %2624 = vmatpush2.bf16.msra.mxu0 0
    %2625 = vmatprep.subr.bf16.mxu0 0
    %2626 = vmatpush2.bf16.msra.mxu0 0
    %2627 = vmatprep.mubr.bf16.mxu0 0
    %2628 = vmatmul.mubr.bf16.gmra.mxu0 %v2593
    %v2629 = vpop.f32.mrf.mxu0
    %v2630 = vadd.f32 %v2590, %v2629
    %v2631 = vpop.f32.mrf.mxu0
    %v2632 = vpop.f32.mrf.mxu0
    %v2633 = vadd.f32 %v2590, %v2632
    %v2634 = vpop.f32.mrf.mxu0
    %2635 = vdwg.mxu0
    %v2636 = vadd.f32 %v2630, %v2490
    %v2637 = vadd.f32 %v2633, %v2491
    %s2638 = scalar_lea.vmem %s14, 1
    %v2639 = vld [vmem:[%s2638] sm:$0x1]
    %s2640 = scalar_lea.vmem %s15, 1
    %v2641 = vld [vmem:[%s2640] sm:$0x1]
    %v2642 = vsel %vm59, %v2636, 0.0
    %2643 = vadd.xlane.f32.xlu0 %v2642
    %v2644 = vpop.xlane.xlu0 %2643
    %v2645 = vsel %vm59, %v2637, 0.0
    %2646 = vadd.xlane.f32.xlu0 %v2645
    %v2647 = vpop.xlane.xlu0 %2646
    %v2648 = vmul.f32 %v2644, %v66
    %v2649 = vmul.f32 %v2647, %v66
    %v2650 = vsub.f32 %v2636, %v2648
    %v2651 = vsub.f32 %v2637, %v2649
    %v2652 = vmul.f32 %v2650, %v2650
    %v2653 = vmul.f32 %v2651, %v2651
    %v2654 = vsel %vm59, %v2652, 0.0
    %2655 = vadd.xlane.f32.xlu0 %v2654
    %v2656 = vpop.xlane.xlu0 %2655
    %v2657 = vsel %vm59, %v2653, 0.0
    %2658 = vadd.xlane.f32.xlu0 %v2657
    %v2659 = vpop.xlane.xlu0 %2658
    %v2660 = vmul.f32 %v2656, %v66
    %v2661 = vmul.f32 %v2659, %v66
    %v2662 = vadd.f32 %v2660, 1e-12
    %v2663 = vadd.f32 %v2661, 1e-12
    %v2664 = vrsqrt.pop %v2662
    %v2665 = vrsqrt.pop %v2663
    %v2666 = vmul.f32 %v2650, %v2664
    %v2667 = vmul.f32 %v2651, %v2665
    %v2669 = vlaneseq
    %v2670 = vshrl.u32 %v2669, 7
    %v2671 = vsub.s32 0, %v2670
    %v2672 = vrot.slane %v2639, %v2671
    %v2674 = vmul.f32 %v2666, %v2672
    %v2675 = vmul.f32 %v2667, %v2672
    %v2677 = vlaneseq
    %v2678 = vshrl.u32 %v2677, 7
    %v2679 = vsub.s32 0, %v2678
    %v2680 = vrot.slane %v2641, %v2679
    %v2682 = vadd.f32 %v2674, %v2680
    %v2683 = vadd.f32 %v2675, %v2680
    %v2684 = vlaneseq
    %v2685 = vshrl.u32 %v2684, 7
    %v2686 = vsub.s32 0, %v2685
    %v2687 = vrot.slane %v103, %v2686
    %2689 = vbcast.lane.b32.xlu0 %v2687, 256
    %v2690 = vpop.permute.xlu0 %2689
    %v2691 = vlaneseq
    %v2692 = vshrl.u32 %v2691, 7
    %v2693 = vsub.s32 1, %v2692
    %v2694 = vrot.slane %v103, %v2693
    %2696 = vbcast.lane.b32.xlu0 %v2694, 256
    %v2697 = vpop.permute.xlu0 %2696
    %v2698 = vmul.f32 %v2682, %v2690
    %v2699 = vmul.f32 %v2683, %v2697
    %v2700 = vsel %vm59, %v2698, 0.0
    %v2701 = vrot.slane %v2700, 4
    %v2702 = vadd.f32 %v2700, %v2701
    %v2703 = vrot.slane %v2702, 2
    %v2704 = vadd.f32 %v2702, %v2703
    %v2705 = vrot.slane %v2704, 1
    %v2706 = vadd.f32 %v2704, %v2705
    %v2707 = vsel %vm59, %v2699, 0.0
    %v2708 = vrot.slane %v2707, 4
    %v2709 = vadd.f32 %v2707, %v2708
    %v2710 = vrot.slane %v2709, 2
    %v2711 = vadd.f32 %v2709, %v2710
    %v2712 = vrot.slane %v2711, 1
    %v2713 = vadd.f32 %v2711, %v2712
    %vm2714 = vcmask 58368
    %v2715 = vsel %vm2714, %v103, 0.0
    %2716 = vadd.xlane.f32.xlu0 %v2715
    %v2717 = vpop.xlane.xlu0 %2716
    %v2719 = vrot.slane %v2717, 1
    %v2722 = vrcp.pop %v2717
    %v2723 = vmul.f32 %v2706, %v2722
    %v2724 = vrcp.pop %v2719
    %v2725 = vmul.f32 %v2713, %v2724
    %v2728 = vrot.slane %v2725, 7
    %vm2729 = vcmask 1041409
    %v2730 = vsel %vm2729, %v2728, %v2723
    %vm2732 = vcmask 254976
    %2733 = vst.msk [vmem:[#allocation2] sm:$0x3] %vm2732, %v2730
    // Predicated region
    $region66: #{gte_encode.1} parent=1 // pred_check
      _
    $region67: #{gte_encode.1} parent=1 // pred_check_branch
      %2735 = sbr.rel (0) target = $region69
    $region68: #{gte_encode.1} parent=1 // pred_region
      %s2737 = ssub.s32 32, 32
      %2738 = vsyncadd [#allocation3], %s2737
      %s2740 = sshll.u32 [#allocation2], 4
      %s2741 = int_to_ptr.vmem [resolvable:$true] %s2740
      %2743 = dma.vmem_to_hbm [thread:$0]  %s2741, 32, %s16, [#allocation3]
    $region69: #{gte_encode.1} parent=1 // pred_fallthru
      _
    // Predicated region
    $region70: #{gte_encode.1} parent=1 // pred_check
      _
    $region71: #{gte_encode.1} parent=1 // pred_check_branch
      %2745 = sbr.rel (0) target = $region73
    $region72: #{gte_encode.1} parent=1 // pred_region
      %2746 = dma.done [#allocation3], 32
    $region73: #{gte_encode.1} parent=1 // pred_fallthru
      _
    %2747 = vsyncpa [#allocation3], 1

</llo_original>
